<compile_context>
chip_gen: v7x
topology: tpu7x:2x2x1
jax: 0.10.0
libtpu: 0.0.40
codegen_flags: <defaults>
</compile_context>

<pallas_src>
import functools

import jax
import jax.numpy as jnp
from jax import lax
from jax.experimental import pallas as pl
from jax.experimental.pallas import tpu as pltpu


def _round_up(x, m):
    return ((x + m - 1) // m) * m


# ---------------------------------------------------------------------------
# Fused kernel: batched input projection + T-step LSTM + batched vocab head
# + softmax over the time axis.  Single invocation, no grid (small operands).
# ---------------------------------------------------------------------------
def _decoder_kernel(x_ref, wih_ref, whh_ref, b_ref, wout_ref, bout_ref,
                    out_ref, h_sc, c_sc, hseq_sc, gx_sc):
    T, Bp, Vp = out_ref.shape
    Hp = h_sc.shape[1]

    # ---- Phase 1: input projection, ONE (T*Bp, E) MXU call, bias folded in.
    # Removes the x@W_ih matmul (and the lane-sparse E-dim loads) from the
    # serial recurrence below.
    gx = (jnp.dot(x_ref[...], wih_ref[...], preferred_element_type=jnp.float32)
          + b_ref[...])                                      # (T*Bp, 4Hp) f32
    gx_sc[...] = gx.reshape(T, Bp, 4 * Hp)

    # nn.LSTM called without hx => zero initial (h0, c0); self.hidden unused.
    h_sc[...] = jnp.zeros_like(h_sc)
    c_sc[...] = jnp.zeros_like(c_sc)

    # ---- Phase 2: serial T-step recurrence.  Per step: one (Bp,Hp)x(Hp,4Hp)
    # bf16 matmul + f32 gate nonlinearities.  Gate blocks are 128-lane aligned
    # at offsets k*Hp (PyTorch order [i, f, g, o]).
    def step(t, carry):
        gates = gx_sc[t] + jnp.dot(h_sc[...].astype(jnp.bfloat16),
                                   whh_ref[...],
                                   preferred_element_type=jnp.float32)
        i_g = jax.nn.sigmoid(gates[:, 0 * Hp:1 * Hp])
        f_g = jax.nn.sigmoid(gates[:, 1 * Hp:2 * Hp])
        g_g = jnp.tanh(gates[:, 2 * Hp:3 * Hp])
        o_g = jax.nn.sigmoid(gates[:, 3 * Hp:4 * Hp])
        c_new = f_g * c_sc[...] + i_g * g_g
        h_new = o_g * jnp.tanh(c_new)
        c_sc[...] = c_new
        h_sc[...] = h_new
        hseq_sc[t] = h_new
        return carry

    # Full unroll is right at T ~ 9; use unroll=2..4 at realistic caption len.
    lax.fori_loop(0, T, step, 0, unroll=True)

    # ---- Phase 3 (epilogue): ONE batched vocab-head matmul over all T*Bp rows
    # (amortizes W_out weight pushes T times, lane-dense store), then softmax
    # over the TIME axis (axis 0 in this time-major layout) == nn.Softmax(dim=1)
    # applied to a batch-first (B, T, V) tensor.
    h_all = hseq_sc[...].reshape(T * Bp, Hp).astype(jnp.bfloat16)
    logits = (jnp.dot(h_all, wout_ref[...],
                      preferred_element_type=jnp.float32)
              + bout_ref[...]).reshape(T, Bp, Vp)
    m = jnp.max(logits, axis=0, keepdims=True)
    e = jnp.exp(logits - m)
    denom = jnp.sum(e, axis=0, keepdims=True)
    inv = 1.0 / denom            # EXACT divide on one (1,Bp,Vp) slab -> sums to 1
    out_ref[...] = e * inv


def _decoder_pallas(x2d, w_ih, w_hh, b, w_out, b_out, *, T, Bp):
    Hp = w_hh.shape[0]
    Vp = w_out.shape[1]
    # Rough VMEM budget (inputs + output + scratch) with generous headroom.
    est = (x2d.size * 2 + w_ih.size * 2 + w_hh.size * 2 + b.size * 4
           + w_out.size * 2 + b_out.size * 4
           + T * Bp * Vp * 4                       # output
           + 2 * Bp * Hp * 4                       # h, c
           + T * Bp * Hp * 4                       # h_seq
           + T * Bp * 4 * Hp * 4)                  # gates_x
    vmem_limit = int(min(max(4 * est, 8 << 20), 64 << 20))
    return pl.pallas_call(
        _decoder_kernel,
        out_shape=jax.ShapeDtypeStruct((T, Bp, Vp), jnp.float32),
        scratch_shapes=[
            pltpu.VMEM((Bp, Hp), jnp.float32),          # h state
            pltpu.VMEM((Bp, Hp), jnp.float32),          # c state
            pltpu.VMEM((T, Bp, Hp), jnp.float32),       # h sequence
            pltpu.VMEM((T, Bp, 4 * Hp), jnp.float32),   # gates_x = x@W_ih + b
        ],
        compiler_params=pltpu.CompilerParams(vmem_limit_bytes=vmem_limit),
    )(x2d, w_ih, w_hh, b, w_out, b_out)


# ---------------------------------------------------------------------------
# Full DecoderRNN.forward
# ---------------------------------------------------------------------------
@functools.partial(jax.jit, static_argnames=("vocab_size",))
def decoder_rnn_forward(params, features, captions, *, vocab_size):
    # captions = captions[:, :-1]; embedding gather + concat are XLA glue.
    captions = captions[:, :-1]
    embed = jnp.take(params["embed"], captions, axis=0)               # (B,Tc-1,E)
    inputs = jnp.concatenate([features[:, None, :], embed], axis=1)   # (B,T,E)
    B, T, E = inputs.shape
    Bp = _round_up(B, 8)                     # fill vreg sublanes / MXU rows
    x_tbe = jnp.transpose(inputs, (1, 0, 2))                          # (T,B,E)
    if Bp != B:
        x_tbe = jnp.pad(x_tbe, ((0, 0), (0, Bp - B), (0, 0)))
    x2d = x_tbe.reshape(T * Bp, E).astype(jnp.bfloat16)

    probs_tbv = _decoder_pallas(x2d, params["w_ih_t"], params["w_hh_t"],
                                params["b_lstm"], params["w_out_t"],
                                params["b_out"], T=T, Bp=Bp)          # (T,Bp,Vp)
    # Back to batch-first + drop batch/vocab padding (one fused XLA copy).
    return jnp.transpose(probs_tbv, (1, 0, 2))[:B, :, :vocab_size]


# ---------------------------------------------------------------------------
# Parameter init (PyTorch layout, unpadded) and lane-aligned padding.
# ---------------------------------------------------------------------------
def init_params(key, embed_size, hidden_size, vocab_size):
    ks = jax.random.split(key, 6)
    s = 0.1
    embed = s * jax.random.normal(ks[0], (vocab_size, embed_size), jnp.float32)
    # PyTorch LSTM weights: W_ih (4H, E), W_hh (4H, H); stored transposed.
    w_ih_t = s * jax.random.normal(ks[1], (embed_size, 4 * hidden_size), jnp.float32)
    w_hh_t = s * jax.random.normal(ks[2], (hidden_size, 4 * hidden_size), jnp.float32)
    # b_ih + b_hh fused into one (1, 4H) bias.
    b_lstm = s * jax.random.normal(ks[3], (1, 4 * hidden_size), jnp.float32)
    # Linear: weight (V, H) in PyTorch; stored transposed (H, V).
    w_out_t = s * jax.random.normal(ks[4], (hidden_size, vocab_size), jnp.float32)
    b_out = s * jax.random.normal(ks[5], (1, vocab_size), jnp.float32)
    return dict(embed=embed, w_ih_t=w_ih_t, w_hh_t=w_hh_t, b_lstm=b_lstm,
                w_out_t=w_out_t, b_out=b_out)


def pad_params(params, hidden_size, vocab_size):
    """Zero-pad hidden/vocab dims to 128-lane multiples; gate blocks at k*Hp.

    Matmul weights are stored bf16 (f32 accumulation in-kernel); biases f32.
    """
    H, V = hidden_size, vocab_size
    Hp = _round_up(H, 128)
    Vp = _round_up(V, 128)

    def pad_gate_cols(w, rows_out, dtype):
        rows_in = w.shape[0]
        out = jnp.zeros((rows_out, 4 * Hp), jnp.float32)
        for k in range(4):                                   # [i, f, g, o]
            out = out.at[:rows_in, k * Hp:k * Hp + H].set(w[:, k * H:(k + 1) * H])
        return out.astype(dtype)

    E = params["w_ih_t"].shape[0]
    w_ih_p = pad_gate_cols(params["w_ih_t"], E, jnp.bfloat16)        # (E, 4Hp)
    w_hh_p = pad_gate_cols(params["w_hh_t"], Hp, jnp.bfloat16)       # (Hp, 4Hp)
    b_p = pad_gate_cols(params["b_lstm"], 1, jnp.float32)            # (1, 4Hp)
    w_out_p = (jnp.zeros((Hp, Vp), jnp.float32)
               .at[:H, :V].set(params["w_out_t"]).astype(jnp.bfloat16))
    b_out_p = jnp.zeros((1, Vp), jnp.float32).at[:, :V].set(params["b_out"])
    return dict(embed=params["embed"], w_ih_t=w_ih_p, w_hh_t=w_hh_p,
                b_lstm=b_p, w_out_t=w_out_p, b_out=b_out_p)


# ---------------------------------------------------------------------------
# Pure-JAX f32 reference (unpadded) for correctness checking.
# ---------------------------------------------------------------------------
def decoder_rnn_reference(params, features, captions, hidden_size):
    captions = captions[:, :-1]
    embed = jnp.take(params["embed"], captions, axis=0)
    inputs = jnp.concatenate([features[:, None, :], embed], axis=1)   # (B,T,E)
    B = inputs.shape[0]
    H = hidden_size
    w_ih, w_hh, b = params["w_ih_t"], params["w_hh_t"], params["b_lstm"][0]

    def step(carry, x_t):
        h, c = carry
        gates = x_t @ w_ih + h @ w_hh + b
        i = jax.nn.sigmoid(gates[:, 0 * H:1 * H])
        f = jax.nn.sigmoid(gates[:, 1 * H:2 * H])
        g = jnp.tanh(gates[:, 2 * H:3 * H])
        o = jax.nn.sigmoid(gates[:, 3 * H:4 * H])
        c = f * c + i * g
        h = o * jnp.tanh(c)
        return (h, c), h

    h0 = jnp.zeros((B, H), jnp.float32)
    _, hs = lax.scan(step, (h0, h0), jnp.transpose(inputs, (1, 0, 2)))
    hs = jnp.transpose(hs, (1, 0, 2))                        # (B, T, H)
    logits = hs @ params["w_out_t"] + params["b_out"][0]     # (B, T, V)
    return jax.nn.softmax(logits, axis=1)                    # softmax over time


if __name__ == "__main__":
    B = 2
    Tc = 9            # raw caption length; effective seq T = 1 + (Tc - 1) = 9
    embed_size = 16
    hidden_size = 32
    vocab_size = 40

    key = jax.random.PRNGKey(0)
    kp, kf, kc = jax.random.split(key, 3)

    raw_params = init_params(kp, embed_size, hidden_size, vocab_size)
    padded_params = pad_params(raw_params, hidden_size, vocab_size)

    features = jax.random.normal(kf, (B, embed_size), jnp.float32)
    captions = jax.random.randint(kc, (B, Tc), 0, vocab_size, jnp.int32)

    out = decoder_rnn_forward(padded_params, features, captions,
                              vocab_size=vocab_size)
    out = jax.block_until_ready(out)

    # sanity: shape (B, T, V), finite, softmax over dim=1 sums to 1
    assert out.shape == (B, Tc, vocab_size)
    assert bool(jnp.all(jnp.isfinite(out)))
    assert bool(jnp.allclose(jnp.sum(out, axis=1), 1.0, atol=1e-3))

    # correctness vs. pure-f32 JAX reference (kernel matmuls are bf16/f32-acc)
    ref = decoder_rnn_reference(raw_params, features, captions, hidden_size)
    err = float(jnp.max(jnp.abs(out - ref)))
    assert err < 5e-3, f"max abs err {err}"

    print("KERNEL_OK")
</pallas_src>

<mosaic_0001>
module attributes {stable_mosaic.version = 11 : i64} {
  func.func @_decoder_kernel(%arg0: memref<72x16xbf16, #tpu.memory_space<vmem>>, %arg1: memref<16x512xbf16, #tpu.memory_space<vmem>>, %arg2: memref<128x512xbf16, #tpu.memory_space<vmem>>, %arg3: memref<1x512xf32, #tpu.memory_space<vmem>>, %arg4: memref<128x128xbf16, #tpu.memory_space<vmem>>, %arg5: memref<1x128xf32, #tpu.memory_space<vmem>>, %arg6: memref<9x8x128xf32, #tpu.memory_space<vmem>>, %arg7: memref<8x128xf32, #tpu.memory_space<vmem>>, %arg8: memref<8x128xf32, #tpu.memory_space<vmem>>, %arg9: memref<9x8x128xf32, #tpu.memory_space<vmem>>, %arg10: memref<9x8x512xf32, #tpu.memory_space<vmem>>) attributes {dimension_semantics = [], scalar_prefetch = 0 : i64, scratch_operands = 4 : i64, tpu.core_type = #tpu.core_type<tc>} {
    %c0 = arith.constant 0 : index
    %c0_0 = arith.constant 0 : index
    %0 = vector.load %arg0[%c0, %c0_0] : memref<72x16xbf16, #tpu.memory_space<vmem>>, vector<72x16xbf16>
    %c0_1 = arith.constant 0 : index
    %c0_2 = arith.constant 0 : index
    %1 = vector.load %arg1[%c0_1, %c0_2] : memref<16x512xbf16, #tpu.memory_space<vmem>>, vector<16x512xbf16>
    %cst = arith.constant dense<0.000000e+00> : vector<72x512xf32>
    %2 = tpu.matmul %0, %1, %cst {dimension_numbers = #tpu.dot_dimension_numbers<[1], [0], [0], [1], [0, 0, 1, 1], [], []>} : vector<72x16xbf16>, vector<16x512xbf16>, vector<72x512xf32> -> vector<72x512xf32>
    %c0_3 = arith.constant 0 : index
    %c0_4 = arith.constant 0 : index
    %3 = vector.load %arg3[%c0_3, %c0_4] : memref<1x512xf32, #tpu.memory_space<vmem>>, vector<1x512xf32>
    %4 = vector.broadcast %3 : vector<1x512xf32> to vector<72x512xf32>
    %5 = arith.addf %2, %4 : vector<72x512xf32>
    %6 = vector.shape_cast %5 : vector<72x512xf32> to vector<9x8x512xf32>
    %c0_5 = arith.constant 0 : index
    %c0_6 = arith.constant 0 : index
    %c0_7 = arith.constant 0 : index
    %7 = vector.load %arg10[%c0_5, %c0_6, %c0_7] : memref<9x8x512xf32, #tpu.memory_space<vmem>>, vector<9x8x512xf32>
    tpu.vector_store %arg10[%c0_5, %c0_6, %c0_7], %6 {strides = array<i32>} : memref<9x8x512xf32, #tpu.memory_space<vmem>>, vector<9x8x512xf32>,
    %cst_8 = arith.constant 0.000000e+00 : f32
    %8 = vector.broadcast %cst_8 : f32 to vector<8x128xf32>
    %c0_9 = arith.constant 0 : index
    %c0_10 = arith.constant 0 : index
    %9 = vector.load %arg7[%c0_9, %c0_10] : memref<8x128xf32, #tpu.memory_space<vmem>>, vector<8x128xf32>
    tpu.vector_store %arg7[%c0_9, %c0_10], %8 {strides = array<i32>} : memref<8x128xf32, #tpu.memory_space<vmem>>, vector<8x128xf32>,
    %cst_11 = arith.constant 0.000000e+00 : f32
    %10 = vector.broadcast %cst_11 : f32 to vector<8x128xf32>
    %c0_12 = arith.constant 0 : index
    %c0_13 = arith.constant 0 : index
    %11 = vector.load %arg8[%c0_12, %c0_13] : memref<8x128xf32, #tpu.memory_space<vmem>>, vector<8x128xf32>
    tpu.vector_store %arg8[%c0_12, %c0_13], %10 {strides = array<i32>} : memref<8x128xf32, #tpu.memory_space<vmem>>, vector<8x128xf32>,
    %c0_i32 = arith.constant 0 : i32
    %12 = arith.index_cast %c0_i32 : i32 to index
    %c0_14 = arith.constant 0 : index
    %c0_15 = arith.constant 0 : index
    %13 = vector.load %arg10[%12, %c0_14, %c0_15] : memref<9x8x512xf32, #tpu.memory_space<vmem>>, vector<1x8x512xf32>
    %14 = vector.shape_cast %13 : vector<1x8x512xf32> to vector<8x512xf32>
    %c0_16 = arith.constant 0 : index
    %c0_17 = arith.constant 0 : index
    %15 = vector.load %arg7[%c0_16, %c0_17] : memref<8x128xf32, #tpu.memory_space<vmem>>, vector<8x128xf32>
    %16 = arith.truncf %15 : vector<8x128xf32> to vector<8x128xbf16>
    %c0_18 = arith.constant 0 : index
    %c0_19 = arith.constant 0 : index
    %17 = vector.load %arg2[%c0_18, %c0_19] : memref<128x512xbf16, #tpu.memory_space<vmem>>, vector<128x512xbf16>
    %cst_20 = arith.constant dense<0.000000e+00> : vector<8x512xf32>
    %18 = tpu.matmul %16, %17, %cst_20 {dimension_numbers = #tpu.dot_dimension_numbers<[1], [0], [0], [1], [0, 0, 1, 1], [], []>} : vector<8x128xbf16>, vector<128x512xbf16>, vector<8x512xf32> -> vector<8x512xf32>
    %19 = arith.addf %14, %18 : vector<8x512xf32>
    %20 = vector.extract_strided_slice %19 {offsets = [0, 0], sizes = [8, 128], strides = [1, 1]} : vector<8x512xf32> to vector<8x128xf32>
    %21 = arith.negf %20 : vector<8x128xf32>
    %22 = math.exp %21 : vector<8x128xf32>
    %cst_21 = arith.constant 1.000000e+00 : f32
    %23 = vector.broadcast %cst_21 : f32 to vector<8x128xf32>
    %24 = arith.addf %23, %22 : vector<8x128xf32>
    %25 = arith.divf %23, %24 : vector<8x128xf32>
    %26 = vector.extract_strided_slice %19 {offsets = [0, 128], sizes = [8, 128], strides = [1, 1]} : vector<8x512xf32> to vector<8x128xf32>
    %27 = arith.negf %26 : vector<8x128xf32>
    %28 = math.exp %27 : vector<8x128xf32>
    %cst_22 = arith.constant 1.000000e+00 : f32
    %29 = vector.broadcast %cst_22 : f32 to vector<8x128xf32>
    %30 = arith.addf %29, %28 : vector<8x128xf32>
    %31 = arith.divf %29, %30 : vector<8x128xf32>
    %32 = vector.extract_strided_slice %19 {offsets = [0, 256], sizes = [8, 128], strides = [1, 1]} : vector<8x512xf32> to vector<8x128xf32>
    %33 = math.tanh %32 : vector<8x128xf32>
    %34 = vector.extract_strided_slice %19 {offsets = [0, 384], sizes = [8, 128], strides = [1, 1]} : vector<8x512xf32> to vector<8x128xf32>
    %35 = arith.negf %34 : vector<8x128xf32>
    %36 = math.exp %35 : vector<8x128xf32>
    %cst_23 = arith.constant 1.000000e+00 : f32
    %37 = vector.broadcast %cst_23 : f32 to vector<8x128xf32>
    %38 = arith.addf %37, %36 : vector<8x128xf32>
    %39 = arith.divf %37, %38 : vector<8x128xf32>
    %c0_24 = arith.constant 0 : index
    %c0_25 = arith.constant 0 : index
    %40 = vector.load %arg8[%c0_24, %c0_25] : memref<8x128xf32, #tpu.memory_space<vmem>>, vector<8x128xf32>
    %41 = arith.mulf %31, %40 : vector<8x128xf32>
    %42 = arith.mulf %25, %33 : vector<8x128xf32>
    %43 = arith.addf %41, %42 : vector<8x128xf32>
    %44 = math.tanh %43 : vector<8x128xf32>
    %45 = arith.mulf %39, %44 : vector<8x128xf32>
    %c0_26 = arith.constant 0 : index
    %c0_27 = arith.constant 0 : index
    %46 = vector.load %arg8[%c0_26, %c0_27] : memref<8x128xf32, #tpu.memory_space<vmem>>, vector<8x128xf32>
    tpu.vector_store %arg8[%c0_26, %c0_27], %43 {strides = array<i32>} : memref<8x128xf32, #tpu.memory_space<vmem>>, vector<8x128xf32>,
    %c0_28 = arith.constant 0 : index
    %c0_29 = arith.constant 0 : index
    %47 = vector.load %arg7[%c0_28, %c0_29] : memref<8x128xf32, #tpu.memory_space<vmem>>, vector<8x128xf32>
    tpu.vector_store %arg7[%c0_28, %c0_29], %45 {strides = array<i32>} : memref<8x128xf32, #tpu.memory_space<vmem>>, vector<8x128xf32>,
    %48 = arith.index_cast %c0_i32 : i32 to index
    %c0_30 = arith.constant 0 : index
    %c0_31 = arith.constant 0 : index
    %49 = vector.load %arg9[%48, %c0_30, %c0_31] : memref<9x8x128xf32, #tpu.memory_space<vmem>>, vector<1x8x128xf32>
    %50 = vector.shape_cast %49 : vector<1x8x128xf32> to vector<8x128xf32>
    %51 = vector.shape_cast %45 : vector<8x128xf32> to vector<1x8x128xf32>
    tpu.vector_store %arg9[%48, %c0_30, %c0_31], %51 {strides = array<i32>} : memref<9x8x128xf32, #tpu.memory_space<vmem>>, vector<1x8x128xf32>,
    %c1_i32 = arith.constant 1 : i32
    %52 = arith.index_cast %c1_i32 : i32 to index
    %c0_32 = arith.constant 0 : index
    %c0_33 = arith.constant 0 : index
    %53 = vector.load %arg10[%52, %c0_32, %c0_33] : memref<9x8x512xf32, #tpu.memory_space<vmem>>, vector<1x8x512xf32>
    %54 = vector.shape_cast %53 : vector<1x8x512xf32> to vector<8x512xf32>
    %c0_34 = arith.constant 0 : index
    %c0_35 = arith.constant 0 : index
    %55 = vector.load %arg7[%c0_34, %c0_35] : memref<8x128xf32, #tpu.memory_space<vmem>>, vector<8x128xf32>
    %56 = arith.truncf %55 : vector<8x128xf32> to vector<8x128xbf16>
    %c0_36 = arith.constant 0 : index
    %c0_37 = arith.constant 0 : index
    %57 = vector.load %arg2[%c0_36, %c0_37] : memref<128x512xbf16, #tpu.memory_space<vmem>>, vector<128x512xbf16>
    %cst_38 = arith.constant dense<0.000000e+00> : vector<8x512xf32>
    %58 = tpu.matmul %56, %57, %cst_38 {dimension_numbers = #tpu.dot_dimension_numbers<[1], [0], [0], [1], [0, 0, 1, 1], [], []>} : vector<8x128xbf16>, vector<128x512xbf16>, vector<8x512xf32> -> vector<8x512xf32>
    %59 = arith.addf %54, %58 : vector<8x512xf32>
    %60 = vector.extract_strided_slice %59 {offsets = [0, 0], sizes = [8, 128], strides = [1, 1]} : vector<8x512xf32> to vector<8x128xf32>
    %61 = arith.negf %60 : vector<8x128xf32>
    %62 = math.exp %61 : vector<8x128xf32>
    %cst_39 = arith.constant 1.000000e+00 : f32
    %63 = vector.broadcast %cst_39 : f32 to vector<8x128xf32>
    %64 = arith.addf %63, %62 : vector<8x128xf32>
    %65 = arith.divf %63, %64 : vector<8x128xf32>
    %66 = vector.extract_strided_slice %59 {offsets = [0, 128], sizes = [8, 128], strides = [1, 1]} : vector<8x512xf32> to vector<8x128xf32>
    %67 = arith.negf %66 : vector<8x128xf32>
    %68 = math.exp %67 : vector<8x128xf32>
    %cst_40 = arith.constant 1.000000e+00 : f32
    %69 = vector.broadcast %cst_40 : f32 to vector<8x128xf32>
    %70 = arith.addf %69, %68 : vector<8x128xf32>
    %71 = arith.divf %69, %70 : vector<8x128xf32>
    %72 = vector.extract_strided_slice %59 {offsets = [0, 256], sizes = [8, 128], strides = [1, 1]} : vector<8x512xf32> to vector<8x128xf32>
    %73 = math.tanh %72 : vector<8x128xf32>
    %74 = vector.extract_strided_slice %59 {offsets = [0, 384], sizes = [8, 128], strides = [1, 1]} : vector<8x512xf32> to vector<8x128xf32>
    %75 = arith.negf %74 : vector<8x128xf32>
    %76 = math.exp %75 : vector<8x128xf32>
    %cst_41 = arith.constant 1.000000e+00 : f32
    %77 = vector.broadcast %cst_41 : f32 to vector<8x128xf32>
    %78 = arith.addf %77, %76 : vector<8x128xf32>
    %79 = arith.divf %77, %78 : vector<8x128xf32>
    %c0_42 = arith.constant 0 : index
    %c0_43 = arith.constant 0 : index
    %80 = vector.load %arg8[%c0_42, %c0_43] : memref<8x128xf32, #tpu.memory_space<vmem>>, vector<8x128xf32>
    %81 = arith.mulf %71, %80 : vector<8x128xf32>
    %82 = arith.mulf %65, %73 : vector<8x128xf32>
    %83 = arith.addf %81, %82 : vector<8x128xf32>
    %84 = math.tanh %83 : vector<8x128xf32>
    %85 = arith.mulf %79, %84 : vector<8x128xf32>
    %c0_44 = arith.constant 0 : index
    %c0_45 = arith.constant 0 : index
    %86 = vector.load %arg8[%c0_44, %c0_45] : memref<8x128xf32, #tpu.memory_space<vmem>>, vector<8x128xf32>
    tpu.vector_store %arg8[%c0_44, %c0_45], %83 {strides = array<i32>} : memref<8x128xf32, #tpu.memory_space<vmem>>, vector<8x128xf32>,
    %c0_46 = arith.constant 0 : index
    %c0_47 = arith.constant 0 : index
    %87 = vector.load %arg7[%c0_46, %c0_47] : memref<8x128xf32, #tpu.memory_space<vmem>>, vector<8x128xf32>
    tpu.vector_store %arg7[%c0_46, %c0_47], %85 {strides = array<i32>} : memref<8x128xf32, #tpu.memory_space<vmem>>, vector<8x128xf32>,
    %88 = arith.index_cast %c1_i32 : i32 to index
    %c0_48 = arith.constant 0 : index
    %c0_49 = arith.constant 0 : index
    %89 = vector.load %arg9[%88, %c0_48, %c0_49] : memref<9x8x128xf32, #tpu.memory_space<vmem>>, vector<1x8x128xf32>
    %90 = vector.shape_cast %89 : vector<1x8x128xf32> to vector<8x128xf32>
    %91 = vector.shape_cast %85 : vector<8x128xf32> to vector<1x8x128xf32>
    tpu.vector_store %arg9[%88, %c0_48, %c0_49], %91 {strides = array<i32>} : memref<9x8x128xf32, #tpu.memory_space<vmem>>, vector<1x8x128xf32>,
    %c2_i32 = arith.constant 2 : i32
    %92 = arith.index_cast %c2_i32 : i32 to index
    %c0_50 = arith.constant 0 : index
    %c0_51 = arith.constant 0 : index
    %93 = vector.load %arg10[%92, %c0_50, %c0_51] : memref<9x8x512xf32, #tpu.memory_space<vmem>>, vector<1x8x512xf32>
    %94 = vector.shape_cast %93 : vector<1x8x512xf32> to vector<8x512xf32>
    %c0_52 = arith.constant 0 : index
    %c0_53 = arith.constant 0 : index
    %95 = vector.load %arg7[%c0_52, %c0_53] : memref<8x128xf32, #tpu.memory_space<vmem>>, vector<8x128xf32>
    %96 = arith.truncf %95 : vector<8x128xf32> to vector<8x128xbf16>
    %c0_54 = arith.constant 0 : index
    %c0_55 = arith.constant 0 : index
    %97 = vector.load %arg2[%c0_54, %c0_55] : memref<128x512xbf16, #tpu.memory_space<vmem>>, vector<128x512xbf16>
    %cst_56 = arith.constant dense<0.000000e+00> : vector<8x512xf32>
    %98 = tpu.matmul %96, %97, %cst_56 {dimension_numbers = #tpu.dot_dimension_numbers<[1], [0], [0], [1], [0, 0, 1, 1], [], []>} : vector<8x128xbf16>, vector<128x512xbf16>, vector<8x512xf32> -> vector<8x512xf32>
    %99 = arith.addf %94, %98 : vector<8x512xf32>
    %100 = vector.extract_strided_slice %99 {offsets = [0, 0], sizes = [8, 128], strides = [1, 1]} : vector<8x512xf32> to vector<8x128xf32>
    %101 = arith.negf %100 : vector<8x128xf32>
    %102 = math.exp %101 : vector<8x128xf32>
    %cst_57 = arith.constant 1.000000e+00 : f32
    %103 = vector.broadcast %cst_57 : f32 to vector<8x128xf32>
    %104 = arith.addf %103, %102 : vector<8x128xf32>
    %105 = arith.divf %103, %104 : vector<8x128xf32>
    %106 = vector.extract_strided_slice %99 {offsets = [0, 128], sizes = [8, 128], strides = [1, 1]} : vector<8x512xf32> to vector<8x128xf32>
    %107 = arith.negf %106 : vector<8x128xf32>
    %108 = math.exp %107 : vector<8x128xf32>
    %cst_58 = arith.constant 1.000000e+00 : f32
    %109 = vector.broadcast %cst_58 : f32 to vector<8x128xf32>
    %110 = arith.addf %109, %108 : vector<8x128xf32>
    %111 = arith.divf %109, %110 : vector<8x128xf32>
    %112 = vector.extract_strided_slice %99 {offsets = [0, 256], sizes = [8, 128], strides = [1, 1]} : vector<8x512xf32> to vector<8x128xf32>
    %113 = math.tanh %112 : vector<8x128xf32>
    %114 = vector.extract_strided_slice %99 {offsets = [0, 384], sizes = [8, 128], strides = [1, 1]} : vector<8x512xf32> to vector<8x128xf32>
    %115 = arith.negf %114 : vector<8x128xf32>
    %116 = math.exp %115 : vector<8x128xf32>
    %cst_59 = arith.constant 1.000000e+00 : f32
    %117 = vector.broadcast %cst_59 : f32 to vector<8x128xf32>
    %118 = arith.addf %117, %116 : vector<8x128xf32>
    %119 = arith.divf %117, %118 : vector<8x128xf32>
    %c0_60 = arith.constant 0 : index
    %c0_61 = arith.constant 0 : index
    %120 = vector.load %arg8[%c0_60, %c0_61] : memref<8x128xf32, #tpu.memory_space<vmem>>, vector<8x128xf32>
    %121 = arith.mulf %111, %120 : vector<8x128xf32>
    %122 = arith.mulf %105, %113 : vector<8x128xf32>
    %123 = arith.addf %121, %122 : vector<8x128xf32>
    %124 = math.tanh %123 : vector<8x128xf32>
    %125 = arith.mulf %119, %124 : vector<8x128xf32>
    %c0_62 = arith.constant 0 : index
    %c0_63 = arith.constant 0 : index
    %126 = vector.load %arg8[%c0_62, %c0_63] : memref<8x128xf32, #tpu.memory_space<vmem>>, vector<8x128xf32>
    tpu.vector_store %arg8[%c0_62, %c0_63], %123 {strides = array<i32>} : memref<8x128xf32, #tpu.memory_space<vmem>>, vector<8x128xf32>,
    %c0_64 = arith.constant 0 : index
    %c0_65 = arith.constant 0 : index
    %127 = vector.load %arg7[%c0_64, %c0_65] : memref<8x128xf32, #tpu.memory_space<vmem>>, vector<8x128xf32>
    tpu.vector_store %arg7[%c0_64, %c0_65], %125 {strides = array<i32>} : memref<8x128xf32, #tpu.memory_space<vmem>>, vector<8x128xf32>,
    %128 = arith.index_cast %c2_i32 : i32 to index
    %c0_66 = arith.constant 0 : index
    %c0_67 = arith.constant 0 : index
    %129 = vector.load %arg9[%128, %c0_66, %c0_67] : memref<9x8x128xf32, #tpu.memory_space<vmem>>, vector<1x8x128xf32>
    %130 = vector.shape_cast %129 : vector<1x8x128xf32> to vector<8x128xf32>
    %131 = vector.shape_cast %125 : vector<8x128xf32> to vector<1x8x128xf32>
    tpu.vector_store %arg9[%128, %c0_66, %c0_67], %131 {strides = array<i32>} : memref<9x8x128xf32, #tpu.memory_space<vmem>>, vector<1x8x128xf32>,
    %c3_i32 = arith.constant 3 : i32
    %132 = arith.index_cast %c3_i32 : i32 to index
    %c0_68 = arith.constant 0 : index
    %c0_69 = arith.constant 0 : index
    %133 = vector.load %arg10[%132, %c0_68, %c0_69] : memref<9x8x512xf32, #tpu.memory_space<vmem>>, vector<1x8x512xf32>
    %134 = vector.shape_cast %133 : vector<1x8x512xf32> to vector<8x512xf32>
    %c0_70 = arith.constant 0 : index
    %c0_71 = arith.constant 0 : index
    %135 = vector.load %arg7[%c0_70, %c0_71] : memref<8x128xf32, #tpu.memory_space<vmem>>, vector<8x128xf32>
    %136 = arith.truncf %135 : vector<8x128xf32> to vector<8x128xbf16>
    %c0_72 = arith.constant 0 : index
    %c0_73 = arith.constant 0 : index
    %137 = vector.load %arg2[%c0_72, %c0_73] : memref<128x512xbf16, #tpu.memory_space<vmem>>, vector<128x512xbf16>
    %cst_74 = arith.constant dense<0.000000e+00> : vector<8x512xf32>
    %138 = tpu.matmul %136, %137, %cst_74 {dimension_numbers = #tpu.dot_dimension_numbers<[1], [0], [0], [1], [0, 0, 1, 1], [], []>} : vector<8x128xbf16>, vector<128x512xbf16>, vector<8x512xf32> -> vector<8x512xf32>
    %139 = arith.addf %134, %138 : vector<8x512xf32>
    %140 = vector.extract_strided_slice %139 {offsets = [0, 0], sizes = [8, 128], strides = [1, 1]} : vector<8x512xf32> to vector<8x128xf32>
    %141 = arith.negf %140 : vector<8x128xf32>
    %142 = math.exp %141 : vector<8x128xf32>
    %cst_75 = arith.constant 1.000000e+00 : f32
    %143 = vector.broadcast %cst_75 : f32 to vector<8x128xf32>
    %144 = arith.addf %143, %142 : vector<8x128xf32>
    %145 = arith.divf %143, %144 : vector<8x128xf32>
    %146 = vector.extract_strided_slice %139 {offsets = [0, 128], sizes = [8, 128], strides = [1, 1]} : vector<8x512xf32> to vector<8x128xf32>
    %147 = arith.negf %146 : vector<8x128xf32>
    %148 = math.exp %147 : vector<8x128xf32>
    %cst_76 = arith.constant 1.000000e+00 : f32
    %149 = vector.broadcast %cst_76 : f32 to vector<8x128xf32>
    %150 = arith.addf %149, %148 : vector<8x128xf32>
    %151 = arith.divf %149, %150 : vector<8x128xf32>
    %152 = vector.extract_strided_slice %139 {offsets = [0, 256], sizes = [8, 128], strides = [1, 1]} : vector<8x512xf32> to vector<8x128xf32>
    %153 = math.tanh %152 : vector<8x128xf32>
    %154 = vector.extract_strided_slice %139 {offsets = [0, 384], sizes = [8, 128], strides = [1, 1]} : vector<8x512xf32> to vector<8x128xf32>
    %155 = arith.negf %154 : vector<8x128xf32>
    %156 = math.exp %155 : vector<8x128xf32>
    %cst_77 = arith.constant 1.000000e+00 : f32
    %157 = vector.broadcast %cst_77 : f32 to vector<8x128xf32>
    %158 = arith.addf %157, %156 : vector<8x128xf32>
    %159 = arith.divf %157, %158 : vector<8x128xf32>
    %c0_78 = arith.constant 0 : index
    %c0_79 = arith.constant 0 : index
    %160 = vector.load %arg8[%c0_78, %c0_79] : memref<8x128xf32, #tpu.memory_space<vmem>>, vector<8x128xf32>
    %161 = arith.mulf %151, %160 : vector<8x128xf32>
    %162 = arith.mulf %145, %153 : vector<8x128xf32>
    %163 = arith.addf %161, %162 : vector<8x128xf32>
    %164 = math.tanh %163 : vector<8x128xf32>
    %165 = arith.mulf %159, %164 : vector<8x128xf32>
    %c0_80 = arith.constant 0 : index
    %c0_81 = arith.constant 0 : index
    %166 = vector.load %arg8[%c0_80, %c0_81] : memref<8x128xf32, #tpu.memory_space<vmem>>, vector<8x128xf32>
    tpu.vector_store %arg8[%c0_80, %c0_81], %163 {strides = array<i32>} : memref<8x128xf32, #tpu.memory_space<vmem>>, vector<8x128xf32>,
    %c0_82 = arith.constant 0 : index
    %c0_83 = arith.constant 0 : index
    %167 = vector.load %arg7[%c0_82, %c0_83] : memref<8x128xf32, #tpu.memory_space<vmem>>, vector<8x128xf32>
    tpu.vector_store %arg7[%c0_82, %c0_83], %165 {strides = array<i32>} : memref<8x128xf32, #tpu.memory_space<vmem>>, vector<8x128xf32>,
    %168 = arith.index_cast %c3_i32 : i32 to index
    %c0_84 = arith.constant 0 : index
    %c0_85 = arith.constant 0 : index
    %169 = vector.load %arg9[%168, %c0_84, %c0_85] : memref<9x8x128xf32, #tpu.memory_space<vmem>>, vector<1x8x128xf32>
    %170 = vector.shape_cast %169 : vector<1x8x128xf32> to vector<8x128xf32>
    %171 = vector.shape_cast %165 : vector<8x128xf32> to vector<1x8x128xf32>
    tpu.vector_store %arg9[%168, %c0_84, %c0_85], %171 {strides = array<i32>} : memref<9x8x128xf32, #tpu.memory_space<vmem>>, vector<1x8x128xf32>,
    %c4_i32 = arith.constant 4 : i32
    %172 = arith.index_cast %c4_i32 : i32 to index
    %c0_86 = arith.constant 0 : index
    %c0_87 = arith.constant 0 : index
    %173 = vector.load %arg10[%172, %c0_86, %c0_87] : memref<9x8x512xf32, #tpu.memory_space<vmem>>, vector<1x8x512xf32>
    %174 = vector.shape_cast %173 : vector<1x8x512xf32> to vector<8x512xf32>
    %c0_88 = arith.constant 0 : index
    %c0_89 = arith.constant 0 : index
    %175 = vector.load %arg7[%c0_88, %c0_89] : memref<8x128xf32, #tpu.memory_space<vmem>>, vector<8x128xf32>
    %176 = arith.truncf %175 : vector<8x128xf32> to vector<8x128xbf16>
    %c0_90 = arith.constant 0 : index
    %c0_91 = arith.constant 0 : index
    %177 = vector.load %arg2[%c0_90, %c0_91] : memref<128x512xbf16, #tpu.memory_space<vmem>>, vector<128x512xbf16>
    %cst_92 = arith.constant dense<0.000000e+00> : vector<8x512xf32>
    %178 = tpu.matmul %176, %177, %cst_92 {dimension_numbers = #tpu.dot_dimension_numbers<[1], [0], [0], [1], [0, 0, 1, 1], [], []>} : vector<8x128xbf16>, vector<128x512xbf16>, vector<8x512xf32> -> vector<8x512xf32>
    %179 = arith.addf %174, %178 : vector<8x512xf32>
    %180 = vector.extract_strided_slice %179 {offsets = [0, 0], sizes = [8, 128], strides = [1, 1]} : vector<8x512xf32> to vector<8x128xf32>
    %181 = arith.negf %180 : vector<8x128xf32>
    %182 = math.exp %181 : vector<8x128xf32>
    %cst_93 = arith.constant 1.000000e+00 : f32
    %183 = vector.broadcast %cst_93 : f32 to vector<8x128xf32>
    %184 = arith.addf %183, %182 : vector<8x128xf32>
    %185 = arith.divf %183, %184 : vector<8x128xf32>
    %186 = vector.extract_strided_slice %179 {offsets = [0, 128], sizes = [8, 128], strides = [1, 1]} : vector<8x512xf32> to vector<8x128xf32>
    %187 = arith.negf %186 : vector<8x128xf32>
    %188 = math.exp %187 : vector<8x128xf32>
    %cst_94 = arith.constant 1.000000e+00 : f32
    %189 = vector.broadcast %cst_94 : f32 to vector<8x128xf32>
    %190 = arith.addf %189, %188 : vector<8x128xf32>
    %191 = arith.divf %189, %190 : vector<8x128xf32>
    %192 = vector.extract_strided_slice %179 {offsets = [0, 256], sizes = [8, 128], strides = [1, 1]} : vector<8x512xf32> to vector<8x128xf32>
    %193 = math.tanh %192 : vector<8x128xf32>
    %194 = vector.extract_strided_slice %179 {offsets = [0, 384], sizes = [8, 128], strides = [1, 1]} : vector<8x512xf32> to vector<8x128xf32>
    %195 = arith.negf %194 : vector<8x128xf32>
    %196 = math.exp %195 : vector<8x128xf32>
    %cst_95 = arith.constant 1.000000e+00 : f32
    %197 = vector.broadcast %cst_95 : f32 to vector<8x128xf32>
    %198 = arith.addf %197, %196 : vector<8x128xf32>
    %199 = arith.divf %197, %198 : vector<8x128xf32>
    %c0_96 = arith.constant 0 : index
    %c0_97 = arith.constant 0 : index
    %200 = vector.load %arg8[%c0_96, %c0_97] : memref<8x128xf32, #tpu.memory_space<vmem>>, vector<8x128xf32>
    %201 = arith.mulf %191, %200 : vector<8x128xf32>
    %202 = arith.mulf %185, %193 : vector<8x128xf32>
    %203 = arith.addf %201, %202 : vector<8x128xf32>
    %204 = math.tanh %203 : vector<8x128xf32>
    %205 = arith.mulf %199, %204 : vector<8x128xf32>
    %c0_98 = arith.constant 0 : index
    %c0_99 = arith.constant 0 : index
    %206 = vector.load %arg8[%c0_98, %c0_99] : memref<8x128xf32, #tpu.memory_space<vmem>>, vector<8x128xf32>
    tpu.vector_store %arg8[%c0_98, %c0_99], %203 {strides = array<i32>} : memref<8x128xf32, #tpu.memory_space<vmem>>, vector<8x128xf32>,
    %c0_100 = arith.constant 0 : index
    %c0_101 = arith.constant 0 : index
    %207 = vector.load %arg7[%c0_100, %c0_101] : memref<8x128xf32, #tpu.memory_space<vmem>>, vector<8x128xf32>
    tpu.vector_store %arg7[%c0_100, %c0_101], %205 {strides = array<i32>} : memref<8x128xf32, #tpu.memory_space<vmem>>, vector<8x128xf32>,
    %208 = arith.index_cast %c4_i32 : i32 to index
    %c0_102 = arith.constant 0 : index
    %c0_103 = arith.constant 0 : index
    %209 = vector.load %arg9[%208, %c0_102, %c0_103] : memref<9x8x128xf32, #tpu.memory_space<vmem>>, vector<1x8x128xf32>
    %210 = vector.shape_cast %209 : vector<1x8x128xf32> to vector<8x128xf32>
    %211 = vector.shape_cast %205 : vector<8x128xf32> to vector<1x8x128xf32>
    tpu.vector_store %arg9[%208, %c0_102, %c0_103], %211 {strides = array<i32>} : memref<9x8x128xf32, #tpu.memory_space<vmem>>, vector<1x8x128xf32>,
    %c5_i32 = arith.constant 5 : i32
    %212 = arith.index_cast %c5_i32 : i32 to index
    %c0_104 = arith.constant 0 : index
    %c0_105 = arith.constant 0 : index
    %213 = vector.load %arg10[%212, %c0_104, %c0_105] : memref<9x8x512xf32, #tpu.memory_space<vmem>>, vector<1x8x512xf32>
    %214 = vector.shape_cast %213 : vector<1x8x512xf32> to vector<8x512xf32>
    %c0_106 = arith.constant 0 : index
    %c0_107 = arith.constant 0 : index
    %215 = vector.load %arg7[%c0_106, %c0_107] : memref<8x128xf32, #tpu.memory_space<vmem>>, vector<8x128xf32>
    %216 = arith.truncf %215 : vector<8x128xf32> to vector<8x128xbf16>
    %c0_108 = arith.constant 0 : index
    %c0_109 = arith.constant 0 : index
    %217 = vector.load %arg2[%c0_108, %c0_109] : memref<128x512xbf16, #tpu.memory_space<vmem>>, vector<128x512xbf16>
    %cst_110 = arith.constant dense<0.000000e+00> : vector<8x512xf32>
    %218 = tpu.matmul %216, %217, %cst_110 {dimension_numbers = #tpu.dot_dimension_numbers<[1], [0], [0], [1], [0, 0, 1, 1], [], []>} : vector<8x128xbf16>, vector<128x512xbf16>, vector<8x512xf32> -> vector<8x512xf32>
    %219 = arith.addf %214, %218 : vector<8x512xf32>
    %220 = vector.extract_strided_slice %219 {offsets = [0, 0], sizes = [8, 128], strides = [1, 1]} : vector<8x512xf32> to vector<8x128xf32>
    %221 = arith.negf %220 : vector<8x128xf32>
    %222 = math.exp %221 : vector<8x128xf32>
    %cst_111 = arith.constant 1.000000e+00 : f32
    %223 = vector.broadcast %cst_111 : f32 to vector<8x128xf32>
    %224 = arith.addf %223, %222 : vector<8x128xf32>
    %225 = arith.divf %223, %224 : vector<8x128xf32>
    %226 = vector.extract_strided_slice %219 {offsets = [0, 128], sizes = [8, 128], strides = [1, 1]} : vector<8x512xf32> to vector<8x128xf32>
    %227 = arith.negf %226 : vector<8x128xf32>
    %228 = math.exp %227 : vector<8x128xf32>
    %cst_112 = arith.constant 1.000000e+00 : f32
    %229 = vector.broadcast %cst_112 : f32 to vector<8x128xf32>
    %230 = arith.addf %229, %228 : vector<8x128xf32>
    %231 = arith.divf %229, %230 : vector<8x128xf32>
    %232 = vector.extract_strided_slice %219 {offsets = [0, 256], sizes = [8, 128], strides = [1, 1]} : vector<8x512xf32> to vector<8x128xf32>
    %233 = math.tanh %232 : vector<8x128xf32>
    %234 = vector.extract_strided_slice %219 {offsets = [0, 384], sizes = [8, 128], strides = [1, 1]} : vector<8x512xf32> to vector<8x128xf32>
    %235 = arith.negf %234 : vector<8x128xf32>
    %236 = math.exp %235 : vector<8x128xf32>
    %cst_113 = arith.constant 1.000000e+00 : f32
    %237 = vector.broadcast %cst_113 : f32 to vector<8x128xf32>
    %238 = arith.addf %237, %236 : vector<8x128xf32>
    %239 = arith.divf %237, %238 : vector<8x128xf32>
    %c0_114 = arith.constant 0 : index
    %c0_115 = arith.constant 0 : index
    %240 = vector.load %arg8[%c0_114, %c0_115] : memref<8x128xf32, #tpu.memory_space<vmem>>, vector<8x128xf32>
    %241 = arith.mulf %231, %240 : vector<8x128xf32>
    %242 = arith.mulf %225, %233 : vector<8x128xf32>
    %243 = arith.addf %241, %242 : vector<8x128xf32>
    %244 = math.tanh %243 : vector<8x128xf32>
    %245 = arith.mulf %239, %244 : vector<8x128xf32>
    %c0_116 = arith.constant 0 : index
    %c0_117 = arith.constant 0 : index
    %246 = vector.load %arg8[%c0_116, %c0_117] : memref<8x128xf32, #tpu.memory_space<vmem>>, vector<8x128xf32>
    tpu.vector_store %arg8[%c0_116, %c0_117], %243 {strides = array<i32>} : memref<8x128xf32, #tpu.memory_space<vmem>>, vector<8x128xf32>,
    %c0_118 = arith.constant 0 : index
    %c0_119 = arith.constant 0 : index
    %247 = vector.load %arg7[%c0_118, %c0_119] : memref<8x128xf32, #tpu.memory_space<vmem>>, vector<8x128xf32>
    tpu.vector_store %arg7[%c0_118, %c0_119], %245 {strides = array<i32>} : memref<8x128xf32, #tpu.memory_space<vmem>>, vector<8x128xf32>,
    %248 = arith.index_cast %c5_i32 : i32 to index
    %c0_120 = arith.constant 0 : index
    %c0_121 = arith.constant 0 : index
    %249 = vector.load %arg9[%248, %c0_120, %c0_121] : memref<9x8x128xf32, #tpu.memory_space<vmem>>, vector<1x8x128xf32>
    %250 = vector.shape_cast %249 : vector<1x8x128xf32> to vector<8x128xf32>
    %251 = vector.shape_cast %245 : vector<8x128xf32> to vector<1x8x128xf32>
    tpu.vector_store %arg9[%248, %c0_120, %c0_121], %251 {strides = array<i32>} : memref<9x8x128xf32, #tpu.memory_space<vmem>>, vector<1x8x128xf32>,
    %c6_i32 = arith.constant 6 : i32
    %252 = arith.index_cast %c6_i32 : i32 to index
    %c0_122 = arith.constant 0 : index
    %c0_123 = arith.constant 0 : index
    %253 = vector.load %arg10[%252, %c0_122, %c0_123] : memref<9x8x512xf32, #tpu.memory_space<vmem>>, vector<1x8x512xf32>
    %254 = vector.shape_cast %253 : vector<1x8x512xf32> to vector<8x512xf32>
    %c0_124 = arith.constant 0 : index
    %c0_125 = arith.constant 0 : index
    %255 = vector.load %arg7[%c0_124, %c0_125] : memref<8x128xf32, #tpu.memory_space<vmem>>, vector<8x128xf32>
    %256 = arith.truncf %255 : vector<8x128xf32> to vector<8x128xbf16>
    %c0_126 = arith.constant 0 : index
    %c0_127 = arith.constant 0 : index
    %257 = vector.load %arg2[%c0_126, %c0_127] : memref<128x512xbf16, #tpu.memory_space<vmem>>, vector<128x512xbf16>
    %cst_128 = arith.constant dense<0.000000e+00> : vector<8x512xf32>
    %258 = tpu.matmul %256, %257, %cst_128 {dimension_numbers = #tpu.dot_dimension_numbers<[1], [0], [0], [1], [0, 0, 1, 1], [], []>} : vector<8x128xbf16>, vector<128x512xbf16>, vector<8x512xf32> -> vector<8x512xf32>
    %259 = arith.addf %254, %258 : vector<8x512xf32>
    %260 = vector.extract_strided_slice %259 {offsets = [0, 0], sizes = [8, 128], strides = [1, 1]} : vector<8x512xf32> to vector<8x128xf32>
    %261 = arith.negf %260 : vector<8x128xf32>
    %262 = math.exp %261 : vector<8x128xf32>
    %cst_129 = arith.constant 1.000000e+00 : f32
    %263 = vector.broadcast %cst_129 : f32 to vector<8x128xf32>
    %264 = arith.addf %263, %262 : vector<8x128xf32>
    %265 = arith.divf %263, %264 : vector<8x128xf32>
    %266 = vector.extract_strided_slice %259 {offsets = [0, 128], sizes = [8, 128], strides = [1, 1]} : vector<8x512xf32> to vector<8x128xf32>
    %267 = arith.negf %266 : vector<8x128xf32>
    %268 = math.exp %267 : vector<8x128xf32>
    %cst_130 = arith.constant 1.000000e+00 : f32
    %269 = vector.broadcast %cst_130 : f32 to vector<8x128xf32>
    %270 = arith.addf %269, %268 : vector<8x128xf32>
    %271 = arith.divf %269, %270 : vector<8x128xf32>
    %272 = vector.extract_strided_slice %259 {offsets = [0, 256], sizes = [8, 128], strides = [1, 1]} : vector<8x512xf32> to vector<8x128xf32>
    %273 = math.tanh %272 : vector<8x128xf32>
    %274 = vector.extract_strided_slice %259 {offsets = [0, 384], sizes = [8, 128], strides = [1, 1]} : vector<8x512xf32> to vector<8x128xf32>
    %275 = arith.negf %274 : vector<8x128xf32>
    %276 = math.exp %275 : vector<8x128xf32>
    %cst_131 = arith.constant 1.000000e+00 : f32
    %277 = vector.broadcast %cst_131 : f32 to vector<8x128xf32>
    %278 = arith.addf %277, %276 : vector<8x128xf32>
    %279 = arith.divf %277, %278 : vector<8x128xf32>
    %c0_132 = arith.constant 0 : index
    %c0_133 = arith.constant 0 : index
    %280 = vector.load %arg8[%c0_132, %c0_133] : memref<8x128xf32, #tpu.memory_space<vmem>>, vector<8x128xf32>
    %281 = arith.mulf %271, %280 : vector<8x128xf32>
    %282 = arith.mulf %265, %273 : vector<8x128xf32>
    %283 = arith.addf %281, %282 : vector<8x128xf32>
    %284 = math.tanh %283 : vector<8x128xf32>
    %285 = arith.mulf %279, %284 : vector<8x128xf32>
    %c0_134 = arith.constant 0 : index
    %c0_135 = arith.constant 0 : index
    %286 = vector.load %arg8[%c0_134, %c0_135] : memref<8x128xf32, #tpu.memory_space<vmem>>, vector<8x128xf32>
    tpu.vector_store %arg8[%c0_134, %c0_135], %283 {strides = array<i32>} : memref<8x128xf32, #tpu.memory_space<vmem>>, vector<8x128xf32>,
    %c0_136 = arith.constant 0 : index
    %c0_137 = arith.constant 0 : index
    %287 = vector.load %arg7[%c0_136, %c0_137] : memref<8x128xf32, #tpu.memory_space<vmem>>, vector<8x128xf32>
    tpu.vector_store %arg7[%c0_136, %c0_137], %285 {strides = array<i32>} : memref<8x128xf32, #tpu.memory_space<vmem>>, vector<8x128xf32>,
    %288 = arith.index_cast %c6_i32 : i32 to index
    %c0_138 = arith.constant 0 : index
    %c0_139 = arith.constant 0 : index
    %289 = vector.load %arg9[%288, %c0_138, %c0_139] : memref<9x8x128xf32, #tpu.memory_space<vmem>>, vector<1x8x128xf32>
    %290 = vector.shape_cast %289 : vector<1x8x128xf32> to vector<8x128xf32>
    %291 = vector.shape_cast %285 : vector<8x128xf32> to vector<1x8x128xf32>
    tpu.vector_store %arg9[%288, %c0_138, %c0_139], %291 {strides = array<i32>} : memref<9x8x128xf32, #tpu.memory_space<vmem>>, vector<1x8x128xf32>,
    %c7_i32 = arith.constant 7 : i32
    %292 = arith.index_cast %c7_i32 : i32 to index
    %c0_140 = arith.constant 0 : index
    %c0_141 = arith.constant 0 : index
    %293 = vector.load %arg10[%292, %c0_140, %c0_141] : memref<9x8x512xf32, #tpu.memory_space<vmem>>, vector<1x8x512xf32>
    %294 = vector.shape_cast %293 : vector<1x8x512xf32> to vector<8x512xf32>
    %c0_142 = arith.constant 0 : index
    %c0_143 = arith.constant 0 : index
    %295 = vector.load %arg7[%c0_142, %c0_143] : memref<8x128xf32, #tpu.memory_space<vmem>>, vector<8x128xf32>
    %296 = arith.truncf %295 : vector<8x128xf32> to vector<8x128xbf16>
    %c0_144 = arith.constant 0 : index
    %c0_145 = arith.constant 0 : index
    %297 = vector.load %arg2[%c0_144, %c0_145] : memref<128x512xbf16, #tpu.memory_space<vmem>>, vector<128x512xbf16>
    %cst_146 = arith.constant dense<0.000000e+00> : vector<8x512xf32>
    %298 = tpu.matmul %296, %297, %cst_146 {dimension_numbers = #tpu.dot_dimension_numbers<[1], [0], [0], [1], [0, 0, 1, 1], [], []>} : vector<8x128xbf16>, vector<128x512xbf16>, vector<8x512xf32> -> vector<8x512xf32>
    %299 = arith.addf %294, %298 : vector<8x512xf32>
    %300 = vector.extract_strided_slice %299 {offsets = [0, 0], sizes = [8, 128], strides = [1, 1]} : vector<8x512xf32> to vector<8x128xf32>
    %301 = arith.negf %300 : vector<8x128xf32>
    %302 = math.exp %301 : vector<8x128xf32>
    %cst_147 = arith.constant 1.000000e+00 : f32
    %303 = vector.broadcast %cst_147 : f32 to vector<8x128xf32>
    %304 = arith.addf %303, %302 : vector<8x128xf32>
    %305 = arith.divf %303, %304 : vector<8x128xf32>
    %306 = vector.extract_strided_slice %299 {offsets = [0, 128], sizes = [8, 128], strides = [1, 1]} : vector<8x512xf32> to vector<8x128xf32>
    %307 = arith.negf %306 : vector<8x128xf32>
    %308 = math.exp %307 : vector<8x128xf32>
    %cst_148 = arith.constant 1.000000e+00 : f32
    %309 = vector.broadcast %cst_148 : f32 to vector<8x128xf32>
    %310 = arith.addf %309, %308 : vector<8x128xf32>
    %311 = arith.divf %309, %310 : vector<8x128xf32>
    %312 = vector.extract_strided_slice %299 {offsets = [0, 256], sizes = [8, 128], strides = [1, 1]} : vector<8x512xf32> to vector<8x128xf32>
    %313 = math.tanh %312 : vector<8x128xf32>
    %314 = vector.extract_strided_slice %299 {offsets = [0, 384], sizes = [8, 128], strides = [1, 1]} : vector<8x512xf32> to vector<8x128xf32>
    %315 = arith.negf %314 : vector<8x128xf32>
    %316 = math.exp %315 : vector<8x128xf32>
    %cst_149 = arith.constant 1.000000e+00 : f32
    %317 = vector.broadcast %cst_149 : f32 to vector<8x128xf32>
    %318 = arith.addf %317, %316 : vector<8x128xf32>
    %319 = arith.divf %317, %318 : vector<8x128xf32>
    %c0_150 = arith.constant 0 : index
    %c0_151 = arith.constant 0 : index
    %320 = vector.load %arg8[%c0_150, %c0_151] : memref<8x128xf32, #tpu.memory_space<vmem>>, vector<8x128xf32>
    %321 = arith.mulf %311, %320 : vector<8x128xf32>
    %322 = arith.mulf %305, %313 : vector<8x128xf32>
    %323 = arith.addf %321, %322 : vector<8x128xf32>
    %324 = math.tanh %323 : vector<8x128xf32>
    %325 = arith.mulf %319, %324 : vector<8x128xf32>
    %c0_152 = arith.constant 0 : index
    %c0_153 = arith.constant 0 : index
    %326 = vector.load %arg8[%c0_152, %c0_153] : memref<8x128xf32, #tpu.memory_space<vmem>>, vector<8x128xf32>
    tpu.vector_store %arg8[%c0_152, %c0_153], %323 {strides = array<i32>} : memref<8x128xf32, #tpu.memory_space<vmem>>, vector<8x128xf32>,
    %c0_154 = arith.constant 0 : index
    %c0_155 = arith.constant 0 : index
    %327 = vector.load %arg7[%c0_154, %c0_155] : memref<8x128xf32, #tpu.memory_space<vmem>>, vector<8x128xf32>
    tpu.vector_store %arg7[%c0_154, %c0_155], %325 {strides = array<i32>} : memref<8x128xf32, #tpu.memory_space<vmem>>, vector<8x128xf32>,
    %328 = arith.index_cast %c7_i32 : i32 to index
    %c0_156 = arith.constant 0 : index
    %c0_157 = arith.constant 0 : index
    %329 = vector.load %arg9[%328, %c0_156, %c0_157] : memref<9x8x128xf32, #tpu.memory_space<vmem>>, vector<1x8x128xf32>
    %330 = vector.shape_cast %329 : vector<1x8x128xf32> to vector<8x128xf32>
    %331 = vector.shape_cast %325 : vector<8x128xf32> to vector<1x8x128xf32>
    tpu.vector_store %arg9[%328, %c0_156, %c0_157], %331 {strides = array<i32>} : memref<9x8x128xf32, #tpu.memory_space<vmem>>, vector<1x8x128xf32>,
    %c8_i32 = arith.constant 8 : i32
    %332 = arith.index_cast %c8_i32 : i32 to index
    %c0_158 = arith.constant 0 : index
    %c0_159 = arith.constant 0 : index
    %333 = vector.load %arg10[%332, %c0_158, %c0_159] : memref<9x8x512xf32, #tpu.memory_space<vmem>>, vector<1x8x512xf32>
    %334 = vector.shape_cast %333 : vector<1x8x512xf32> to vector<8x512xf32>
    %c0_160 = arith.constant 0 : index
    %c0_161 = arith.constant 0 : index
    %335 = vector.load %arg7[%c0_160, %c0_161] : memref<8x128xf32, #tpu.memory_space<vmem>>, vector<8x128xf32>
    %336 = arith.truncf %335 : vector<8x128xf32> to vector<8x128xbf16>
    %c0_162 = arith.constant 0 : index
    %c0_163 = arith.constant 0 : index
    %337 = vector.load %arg2[%c0_162, %c0_163] : memref<128x512xbf16, #tpu.memory_space<vmem>>, vector<128x512xbf16>
    %cst_164 = arith.constant dense<0.000000e+00> : vector<8x512xf32>
    %338 = tpu.matmul %336, %337, %cst_164 {dimension_numbers = #tpu.dot_dimension_numbers<[1], [0], [0], [1], [0, 0, 1, 1], [], []>} : vector<8x128xbf16>, vector<128x512xbf16>, vector<8x512xf32> -> vector<8x512xf32>
    %339 = arith.addf %334, %338 : vector<8x512xf32>
    %340 = vector.extract_strided_slice %339 {offsets = [0, 0], sizes = [8, 128], strides = [1, 1]} : vector<8x512xf32> to vector<8x128xf32>
    %341 = arith.negf %340 : vector<8x128xf32>
    %342 = math.exp %341 : vector<8x128xf32>
    %cst_165 = arith.constant 1.000000e+00 : f32
    %343 = vector.broadcast %cst_165 : f32 to vector<8x128xf32>
    %344 = arith.addf %343, %342 : vector<8x128xf32>
    %345 = arith.divf %343, %344 : vector<8x128xf32>
    %346 = vector.extract_strided_slice %339 {offsets = [0, 128], sizes = [8, 128], strides = [1, 1]} : vector<8x512xf32> to vector<8x128xf32>
    %347 = arith.negf %346 : vector<8x128xf32>
    %348 = math.exp %347 : vector<8x128xf32>
    %cst_166 = arith.constant 1.000000e+00 : f32
    %349 = vector.broadcast %cst_166 : f32 to vector<8x128xf32>
    %350 = arith.addf %349, %348 : vector<8x128xf32>
    %351 = arith.divf %349, %350 : vector<8x128xf32>
    %352 = vector.extract_strided_slice %339 {offsets = [0, 256], sizes = [8, 128], strides = [1, 1]} : vector<8x512xf32> to vector<8x128xf32>
    %353 = math.tanh %352 : vector<8x128xf32>
    %354 = vector.extract_strided_slice %339 {offsets = [0, 384], sizes = [8, 128], strides = [1, 1]} : vector<8x512xf32> to vector<8x128xf32>
    %355 = arith.negf %354 : vector<8x128xf32>
    %356 = math.exp %355 : vector<8x128xf32>
    %cst_167 = arith.constant 1.000000e+00 : f32
    %357 = vector.broadcast %cst_167 : f32 to vector<8x128xf32>
    %358 = arith.addf %357, %356 : vector<8x128xf32>
    %359 = arith.divf %357, %358 : vector<8x128xf32>
    %c0_168 = arith.constant 0 : index
    %c0_169 = arith.constant 0 : index
    %360 = vector.load %arg8[%c0_168, %c0_169] : memref<8x128xf32, #tpu.memory_space<vmem>>, vector<8x128xf32>
    %361 = arith.mulf %351, %360 : vector<8x128xf32>
    %362 = arith.mulf %345, %353 : vector<8x128xf32>
    %363 = arith.addf %361, %362 : vector<8x128xf32>
    %364 = math.tanh %363 : vector<8x128xf32>
    %365 = arith.mulf %359, %364 : vector<8x128xf32>
    %c0_170 = arith.constant 0 : index
    %c0_171 = arith.constant 0 : index
    %366 = vector.load %arg8[%c0_170, %c0_171] : memref<8x128xf32, #tpu.memory_space<vmem>>, vector<8x128xf32>
    tpu.vector_store %arg8[%c0_170, %c0_171], %363 {strides = array<i32>} : memref<8x128xf32, #tpu.memory_space<vmem>>, vector<8x128xf32>,
    %c0_172 = arith.constant 0 : index
    %c0_173 = arith.constant 0 : index
    %367 = vector.load %arg7[%c0_172, %c0_173] : memref<8x128xf32, #tpu.memory_space<vmem>>, vector<8x128xf32>
    tpu.vector_store %arg7[%c0_172, %c0_173], %365 {strides = array<i32>} : memref<8x128xf32, #tpu.memory_space<vmem>>, vector<8x128xf32>,
    %368 = arith.index_cast %c8_i32 : i32 to index
    %c0_174 = arith.constant 0 : index
    %c0_175 = arith.constant 0 : index
    %369 = vector.load %arg9[%368, %c0_174, %c0_175] : memref<9x8x128xf32, #tpu.memory_space<vmem>>, vector<1x8x128xf32>
    %370 = vector.shape_cast %369 : vector<1x8x128xf32> to vector<8x128xf32>
    %371 = vector.shape_cast %365 : vector<8x128xf32> to vector<1x8x128xf32>
    tpu.vector_store %arg9[%368, %c0_174, %c0_175], %371 {strides = array<i32>} : memref<9x8x128xf32, #tpu.memory_space<vmem>>, vector<1x8x128xf32>,
    %c9_i32 = arith.constant 9 : i32
    %c0_176 = arith.constant 0 : index
    %c0_177 = arith.constant 0 : index
    %c0_178 = arith.constant 0 : index
    %372 = vector.load %arg9[%c0_176, %c0_177, %c0_178] : memref<9x8x128xf32, #tpu.memory_space<vmem>>, vector<9x8x128xf32>
    %373 = vector.shape_cast %372 : vector<9x8x128xf32> to vector<72x128xf32>
    %374 = arith.truncf %373 : vector<72x128xf32> to vector<72x128xbf16>
    %c0_179 = arith.constant 0 : index
    %c0_180 = arith.constant 0 : index
    %375 = vector.load %arg4[%c0_179, %c0_180] : memref<128x128xbf16, #tpu.memory_space<vmem>>, vector<128x128xbf16>
    %cst_181 = arith.constant dense<0.000000e+00> : vector<72x128xf32>
    %376 = tpu.matmul %374, %375, %cst_181 {dimension_numbers = #tpu.dot_dimension_numbers<[1], [0], [0], [1], [0, 0, 1, 1], [], []>} : vector<72x128xbf16>, vector<128x128xbf16>, vector<72x128xf32> -> vector<72x128xf32>
    %c0_182 = arith.constant 0 : index
    %c0_183 = arith.constant 0 : index
    %377 = vector.load %arg5[%c0_182, %c0_183] : memref<1x128xf32, #tpu.memory_space<vmem>>, vector<1x128xf32>
    %378 = vector.broadcast %377 : vector<1x128xf32> to vector<72x128xf32>
    %379 = arith.addf %376, %378 : vector<72x128xf32>
    %380 = vector.shape_cast %379 : vector<72x128xf32> to vector<9x8x128xf32>
    %cst_184 = arith.constant dense<0xFF800000> : vector<8x128xf32>
    %381 = vector.multi_reduction <maximumf>, %380, %cst_184 [0] : vector<9x8x128xf32> to vector<8x128xf32>
    %382 = vector.shape_cast %381 : vector<8x128xf32> to vector<1x8x128xf32>
    %383 = vector.broadcast %382 : vector<1x8x128xf32> to vector<9x8x128xf32>
    %384 = arith.subf %380, %383 : vector<9x8x128xf32>
    %385 = math.exp %384 : vector<9x8x128xf32>
    %cst_185 = arith.constant dense<0.000000e+00> : vector<8x128xf32>
    %386 = vector.multi_reduction <add>, %385, %cst_185 [0] : vector<9x8x128xf32> to vector<8x128xf32>
    %387 = vector.shape_cast %386 : vector<8x128xf32> to vector<1x8x128xf32>
    %cst_186 = arith.constant 1.000000e+00 : f32
    %388 = vector.broadcast %cst_186 : f32 to vector<1x8x128xf32>
    %389 = arith.divf %388, %387 : vector<1x8x128xf32>
    %390 = vector.broadcast %389 : vector<1x8x128xf32> to vector<9x8x128xf32>
    %391 = arith.mulf %385, %390 : vector<9x8x128xf32>
    %c0_187 = arith.constant 0 : index
    %c0_188 = arith.constant 0 : index
    %c0_189 = arith.constant 0 : index
    %392 = vector.load %arg6[%c0_187, %c0_188, %c0_189] : memref<9x8x128xf32, #tpu.memory_space<vmem>>, vector<9x8x128xf32>
    tpu.vector_store %arg6[%c0_187, %c0_188, %c0_189], %391 {strides = array<i32>} : memref<9x8x128xf32, #tpu.memory_space<vmem>>, vector<9x8x128xf32>,
    return
  }
}

</mosaic_0001>

<llo_original>
// kernel: decoder_rnn_forward.1
$region0: #{decoder_rnn_forward.1}
  #allocation0 [shape = 'u32[]', space=smem, size = 0x4, offset = 0x4, fixed_abs, tag = 'smem constant byte address 0x4 - core index']
  #allocation1 [shape = 'u32[144,128]{1,0:T(1,128)}', space=vmem, size = 0x12000, scoped, tag = 'internal scratch']
  #allocation2 [shape = 'f32[8,128]{1,0:T(8,128)}', space=vmem, size = 0x1000, scoped, tag = 'scratch operand']
  #allocation3 [shape = 'f32[8,128]{1,0:T(8,128)}', space=vmem, size = 0x1000, scoped, tag = 'scratch operand']
  #allocation4 [shape = 'f32[9,8,128]{2,1,0:T(8,128)}', space=vmem, size = 0x9000, scoped, tag = 'scratch operand']
  #allocation5 [shape = 'f32[9,8,512]{2,1,0:T(8,128)}', space=vmem, size = 0x24000, scoped, tag = 'scratch operand']
  %s0 = inlined_call_operand.vmem [shape: bf16[72,16], index: 0, kind: input, shape index: {}]
  %s1 = inlined_call_operand.vmem [shape: bf16[16,512], index: 1, kind: input, shape index: {}]
  %s2 = inlined_call_operand.hbm [shape: bf16[128,512], index: 2, kind: input, shape index: {}]
  %s3 = inlined_call_operand.vmem [shape: f32[1,512], index: 3, kind: input, shape index: {}]
  %s4 = inlined_call_operand.vmem [shape: bf16[128,128], index: 4, kind: input, shape index: {}]
  %s5 = inlined_call_operand.vmem [shape: f32[1,128], index: 5, kind: input, shape index: {}]
  %s6 = inlined_call_operand.vmem [shape: f32[9,8,128], index: 6, kind: output, shape index: {}]
  %s7 = sld [smem:[#allocation0]]
  $region38: #{decoder_rnn_forward.1} parent=0
    _
  %s9 = ssub.s32 1, %s7
  %s10 = scalar_select 0, %s9, %s7
  $region1: #{decoder_rnn_forward.1} parent=0
    #allocation6 [shape = 'u8[131072]{0}', space=vmem, size = 0x20000, scoped, tag = 'input window, operand 2, single buffered']
    #allocation7 [shape = 's32[1]{0}', space=sflag, size = 0x4, scoped, tag = 'scoped memory for decoder_rnn_forward.1']
    %11 = vsyncpa [#allocation7], 0
    // Predicated region
    $region2: #{decoder_rnn_forward.1} parent=1 // pred_check
      _
    $region3: #{decoder_rnn_forward.1} parent=1 // pred_check_branch
      %13 = sbr.rel (0) target = $region5
    $region4: #{decoder_rnn_forward.1} parent=1 // pred_region
      _
    $region5: #{decoder_rnn_forward.1} parent=1 // pred_fallthru
      _
    // Predicated region
    $region6: #{decoder_rnn_forward.1} parent=1 // pred_check
      _
    $region7: #{decoder_rnn_forward.1} parent=1 // pred_check_branch
      %15 = sbr.rel (0) target = $region9
    $region8: #{decoder_rnn_forward.1} parent=1 // pred_region
      _
    $region9: #{decoder_rnn_forward.1} parent=1 // pred_fallthru
      _
    // Predicated region
    $region10: #{decoder_rnn_forward.1} parent=1 // pred_check
      _
    $region11: #{decoder_rnn_forward.1} parent=1 // pred_check_branch
      %17 = sbr.rel (0) target = $region13
    $region12: #{decoder_rnn_forward.1} parent=1 // pred_region
      %s19 = ssub.s32 4096, 4096
      %20 = vsyncadd [#allocation7], %s19
      %s21 = sshll.u32 [#allocation6], 4
      %s22 = int_to_ptr.vmem [resolvable:$true] %s21
      %27 = dma.hbm_to_vmem [thread:$0]  %s2, 4096, %s22, [#allocation7], 256, 256, 16
    $region13: #{decoder_rnn_forward.1} parent=1 // pred_fallthru
      _
    // Predicated region
    $region14: #{decoder_rnn_forward.1} parent=1 // pred_check
      _
    $region15: #{decoder_rnn_forward.1} parent=1 // pred_check_branch
      %29 = sbr.rel (0) target = $region17
    $region16: #{decoder_rnn_forward.1} parent=1 // pred_region
      _
    $region17: #{decoder_rnn_forward.1} parent=1 // pred_fallthru
      _
    // Predicated region
    $region18: #{decoder_rnn_forward.1} parent=1 // pred_check
      _
    $region19: #{decoder_rnn_forward.1} parent=1 // pred_check_branch
      %31 = sbr.rel (0) target = $region21
    $region20: #{decoder_rnn_forward.1} parent=1 // pred_region
      _
    $region21: #{decoder_rnn_forward.1} parent=1 // pred_fallthru
      _
    // Predicated region
    $region22: #{decoder_rnn_forward.1} parent=1 // pred_check
      _
    $region23: #{decoder_rnn_forward.1} parent=1 // pred_check_branch
      %33 = sbr.rel (0) target = $region25
    $region24: #{decoder_rnn_forward.1} parent=1 // pred_region
      _
    $region25: #{decoder_rnn_forward.1} parent=1 // pred_fallthru
      _
    // Predicated region
    $region26: #{decoder_rnn_forward.1} parent=1 // pred_check
      _
    $region27: #{decoder_rnn_forward.1} parent=1 // pred_check_branch
      %35 = sbr.rel (0) target = $region29
    $region28: #{decoder_rnn_forward.1} parent=1 // pred_region
      %36 = dma.done [#allocation7], 4096
    $region29: #{decoder_rnn_forward.1} parent=1 // pred_fallthru
      _
    %v38 = vld [vmem:[%s0] sm:$0xf]
    %v39 = vld [vmem:[%s0 + $0x4] sm:$0xf]
    %v40 = vld [vmem:[%s0 + $0x8] sm:$0xf]
    %v41 = vld [vmem:[%s0 + $0xc] sm:$0xf]
    %v42 = vld [vmem:[%s0 + $0x10] sm:$0xf]
    %v43 = vld [vmem:[%s0 + $0x14] sm:$0xf]
    %v44 = vld [vmem:[%s0 + $0x18] sm:$0xf]
    %v45 = vld [vmem:[%s0 + $0x1c] sm:$0xf]
    %v46 = vld [vmem:[%s0 + $0x20] sm:$0xf]
    %v47 = vld [vmem:[%s1] sm:$0xff]
    %v48 = vld [vmem:[%s1 + $0x8] sm:$0xff]
    %v49 = vld [vmem:[%s1 + $0x10] sm:$0xff]
    %v50 = vld [vmem:[%s1 + $0x18] sm:$0xff]
    %v51 = vld [vmem:[%s3] sm:$0xf]
    %v53 = vlaneseq
    %v54 = vshrl.u32 %v53, 7
    %v55 = vsub.s32 0, %v54
    %v56 = vrot.slane %v51, %v55
    %v57 = vlaneseq
    %v58 = vshrl.u32 %v57, 7
    %v59 = vsub.s32 1, %v58
    %v60 = vrot.slane %v51, %v59
    %v61 = vlaneseq
    %v62 = vshrl.u32 %v61, 7
    %v63 = vsub.s32 2, %v62
    %v64 = vrot.slane %v51, %v63
    %v65 = vlaneseq
    %v66 = vshrl.u32 %v65, 7
    %v67 = vsub.s32 3, %v66
    %v68 = vrot.slane %v51, %v67
    %v82 = vunpack.c.l.b16 %v38
    %v83 = vunpack.c.l.b16 %v39
    %v84 = vunpack.c.l.b16 %v40
    %v85 = vunpack.c.l.b16 %v41
    %v86 = vunpack.c.l.b16 %v42
    %v87 = vunpack.c.l.b16 %v43
    %v88 = vunpack.c.l.b16 %v44
    %v89 = vunpack.c.l.b16 %v45
    %v90 = vunpack.c.l.b16 %v46
    %v91 = vpack.c.b16 %v83, %v82
    %v92 = vpack.c.b16 %v85, %v84
    %v93 = vpack.c.b16 %v87, %v86
    %v94 = vpack.c.b16 %v89, %v88
    %v95 = vpack.c.b16 %v90, %v90
    %v100 = vunpack.c.l.b16 %v47
    %v101 = vunpack.c.h.b16 %v47
    %v102 = vunpack.c.l.b16 %v48
    %v103 = vunpack.c.h.b16 %v48
    %v104 = vunpack.c.l.b16 %v49
    %v105 = vunpack.c.h.b16 %v49
    %v106 = vunpack.c.l.b16 %v50
    %v107 = vunpack.c.h.b16 %v50
    %v108 = vpack.c.b16 %v104, %v100
    %v109 = vpack.c.b16 %v105, %v101
    %v110 = vpack.c.b16 %v106, %v102
    %v111 = vpack.c.b16 %v107, %v103
    %vm116 = vcmask 130048
    %v118 = vsel %vm116, %v91, 0
    %v121 = vsel %vm116, %v92, 0
    %v124 = vsel %vm116, %v93, 0
    %v127 = vsel %vm116, %v94, 0
    %v130 = vsel %vm116, %v95, 0
    %132 = vmatprep.subr.bf16.mxu0 %v109
    %133 = vmatpush1.bf16.msra.mxu0 %v108
    %134 = vmatprep.subr.bf16.mxu0 0
    %135 = vmatpush1.bf16.msra.mxu0 0
    %136 = vmatprep.subr.bf16.mxu0 0
    %137 = vmatpush1.bf16.msra.mxu0 0
    %138 = vmatprep.subr.bf16.mxu0 0
    %139 = vmatpush1.bf16.msra.mxu0 0
    %140 = vmatprep.subr.bf16.mxu0 0
    %141 = vmatpush1.bf16.msra.mxu0 0
    %142 = vmatprep.subr.bf16.mxu0 0
    %143 = vmatpush1.bf16.msra.mxu0 0
    %144 = vmatprep.subr.bf16.mxu0 0
    %145 = vmatpush1.bf16.msra.mxu0 0
    %146 = vmatprep.subr.bf16.mxu0 0
    %147 = vmatpush1.bf16.msra.mxu0 0
    %148 = vmatprep.subr.bf16.mxu0 0
    %149 = vmatpush1.bf16.msra.mxu0 0
    %150 = vmatprep.subr.bf16.mxu0 0
    %151 = vmatpush1.bf16.msra.mxu0 0
    %152 = vmatprep.subr.bf16.mxu0 0
    %153 = vmatpush1.bf16.msra.mxu0 0
    %154 = vmatprep.subr.bf16.mxu0 0
    %155 = vmatpush1.bf16.msra.mxu0 0
    %156 = vmatprep.subr.bf16.mxu0 0
    %157 = vmatpush1.bf16.msra.mxu0 0
    %158 = vmatprep.subr.bf16.mxu0 0
    %159 = vmatpush1.bf16.msra.mxu0 0
    %160 = vmatprep.subr.bf16.mxu0 0
    %161 = vmatpush1.bf16.msra.mxu0 0
    %162 = vmatprep.subr.bf16.mxu0 0
    %163 = vmatpush1.bf16.msra.mxu0 0
    %164 = vmatprep.mubr.bf16.mxu0 0
    %165 = vmatmul.mubr.bf16.gmra.mrb[0].mxu0 %v118
    %v166 = vpop.f32.mrb[0].mxu0
    %v167 = vadd.f32 %v56, %v166
    %v168 = vpop.f32.mrb[0].mxu0
    %v169 = vadd.f32 %v60, %v168
    %v170 = vpop.f32.mrb[0].mxu0
    %v171 = vadd.f32 %v56, %v170
    %v172 = vpop.f32.mrb[0].mxu0
    %v173 = vadd.f32 %v60, %v172
    %174 = vmatprep.mubr.bf16.mxu0 0
    %175 = vmatmul.mubr.bf16.gmra.mrb[0].mxu0 %v121
    %v176 = vpop.f32.mrb[0].mxu0
    %v177 = vadd.f32 %v56, %v176
    %v178 = vpop.f32.mrb[0].mxu0
    %v179 = vadd.f32 %v60, %v178
    %v180 = vpop.f32.mrb[0].mxu0
    %v181 = vadd.f32 %v56, %v180
    %v182 = vpop.f32.mrb[0].mxu0
    %v183 = vadd.f32 %v60, %v182
    %184 = vmatprep.mubr.bf16.mxu0 0
    %185 = vmatmul.mubr.bf16.gmra.mrb[0].mxu0 %v124
    %v186 = vpop.f32.mrb[0].mxu0
    %v187 = vadd.f32 %v56, %v186
    %v188 = vpop.f32.mrb[0].mxu0
    %v189 = vadd.f32 %v60, %v188
    %v190 = vpop.f32.mrb[0].mxu0
    %v191 = vadd.f32 %v56, %v190
    %v192 = vpop.f32.mrb[0].mxu0
    %v193 = vadd.f32 %v60, %v192
    %194 = vmatprep.mubr.bf16.mxu0 0
    %195 = vmatmul.mubr.bf16.gmra.mrb[0].mxu0 %v127
    %v196 = vpop.f32.mrb[0].mxu0
    %v197 = vadd.f32 %v56, %v196
    %v198 = vpop.f32.mrb[0].mxu0
    %v199 = vadd.f32 %v60, %v198
    %v200 = vpop.f32.mrb[0].mxu0
    %v201 = vadd.f32 %v56, %v200
    %v202 = vpop.f32.mrb[0].mxu0
    %v203 = vadd.f32 %v60, %v202
    %204 = vmatprep.mubr.bf16.mxu0 0
    %205 = vmatmul.mubr.bf16.gmra.mrb[0].mxu0 %v130
    %v206 = vpop.f32.mrb[0].mxu0
    %v207 = vadd.f32 %v56, %v206
    %v208 = vpop.f32.mrb[0].mxu0
    %v209 = vadd.f32 %v60, %v208
    %v210 = vpop.f32.mrb[0].mxu0
    %v211 = vpop.f32.mrb[0].mxu0
    %212 = vdwg.mxu0
    %213 = vmatprep.subr.bf16.mxu0 %v111
    %214 = vmatpush1.bf16.msra.mxu0 %v110
    %215 = vmatprep.subr.bf16.mxu0 0
    %216 = vmatpush1.bf16.msra.mxu0 0
    %217 = vmatprep.subr.bf16.mxu0 0
    %218 = vmatpush1.bf16.msra.mxu0 0
    %219 = vmatprep.subr.bf16.mxu0 0
    %220 = vmatpush1.bf16.msra.mxu0 0
    %221 = vmatprep.subr.bf16.mxu0 0
    %222 = vmatpush1.bf16.msra.mxu0 0
    %223 = vmatprep.subr.bf16.mxu0 0
    %224 = vmatpush1.bf16.msra.mxu0 0
    %225 = vmatprep.subr.bf16.mxu0 0
    %226 = vmatpush1.bf16.msra.mxu0 0
    %227 = vmatprep.subr.bf16.mxu0 0
    %228 = vmatpush1.bf16.msra.mxu0 0
    %229 = vmatprep.subr.bf16.mxu0 0
    %230 = vmatpush1.bf16.msra.mxu0 0
    %231 = vmatprep.subr.bf16.mxu0 0
    %232 = vmatpush1.bf16.msra.mxu0 0
    %233 = vmatprep.subr.bf16.mxu0 0
    %234 = vmatpush1.bf16.msra.mxu0 0
    %235 = vmatprep.subr.bf16.mxu0 0
    %236 = vmatpush1.bf16.msra.mxu0 0
    %237 = vmatprep.subr.bf16.mxu0 0
    %238 = vmatpush1.bf16.msra.mxu0 0
    %239 = vmatprep.subr.bf16.mxu0 0
    %240 = vmatpush1.bf16.msra.mxu0 0
    %241 = vmatprep.subr.bf16.mxu0 0
    %242 = vmatpush1.bf16.msra.mxu0 0
    %243 = vmatprep.subr.bf16.mxu0 0
    %244 = vmatpush1.bf16.msra.mxu0 0
    %245 = vmatprep.mubr.bf16.mxu0 0
    %246 = vmatmul.mubr.bf16.gmra.mrb[0].mxu0 %v118
    %v247 = vpop.f32.mrb[0].mxu0
    %v248 = vadd.f32 %v64, %v247
    %v249 = vpop.f32.mrb[0].mxu0
    %v250 = vadd.f32 %v68, %v249
    %v251 = vpop.f32.mrb[0].mxu0
    %v252 = vadd.f32 %v64, %v251
    %v253 = vpop.f32.mrb[0].mxu0
    %v254 = vadd.f32 %v68, %v253
    %255 = vmatprep.mubr.bf16.mxu0 0
    %256 = vmatmul.mubr.bf16.gmra.mrb[0].mxu0 %v121
    %v257 = vpop.f32.mrb[0].mxu0
    %v258 = vadd.f32 %v64, %v257
    %v259 = vpop.f32.mrb[0].mxu0
    %v260 = vadd.f32 %v68, %v259
    %v261 = vpop.f32.mrb[0].mxu0
    %v262 = vadd.f32 %v64, %v261
    %v263 = vpop.f32.mrb[0].mxu0
    %v264 = vadd.f32 %v68, %v263
    %265 = vmatprep.mubr.bf16.mxu0 0
    %266 = vmatmul.mubr.bf16.gmra.mrb[0].mxu0 %v124
    %v267 = vpop.f32.mrb[0].mxu0
    %v268 = vadd.f32 %v64, %v267
    %v269 = vpop.f32.mrb[0].mxu0
    %v270 = vadd.f32 %v68, %v269
    %v271 = vpop.f32.mrb[0].mxu0
    %v272 = vadd.f32 %v64, %v271
    %v273 = vpop.f32.mrb[0].mxu0
    %v274 = vadd.f32 %v68, %v273
    %275 = vmatprep.mubr.bf16.mxu0 0
    %276 = vmatmul.mubr.bf16.gmra.mrb[0].mxu0 %v127
    %v277 = vpop.f32.mrb[0].mxu0
    %v278 = vadd.f32 %v64, %v277
    %v279 = vpop.f32.mrb[0].mxu0
    %v280 = vadd.f32 %v68, %v279
    %v281 = vpop.f32.mrb[0].mxu0
    %v282 = vadd.f32 %v64, %v281
    %v283 = vpop.f32.mrb[0].mxu0
    %v284 = vadd.f32 %v68, %v283
    %285 = vmatprep.mubr.bf16.mxu0 0
    %286 = vmatmul.mubr.bf16.gmra.mrb[0].mxu0 %v130
    %v287 = vpop.f32.mrb[0].mxu0
    %v288 = vadd.f32 %v64, %v287
    %v289 = vpop.f32.mrb[0].mxu0
    %v290 = vadd.f32 %v68, %v289
    %v291 = vpop.f32.mrb[0].mxu0
    %v292 = vpop.f32.mrb[0].mxu0
    %293 = vdwg.mxu0
    %294 = vst [vmem:[#allocation5] sm:$0xff] %v167
    %295 = vst [vmem:[#allocation5 + $0x8] sm:$0xff] %v169
    %296 = vst [vmem:[#allocation5 + $0x10] sm:$0xff] %v248
    %297 = vst [vmem:[#allocation5 + $0x18] sm:$0xff] %v250
    %298 = vst [vmem:[#allocation5 + $0x20] sm:$0xff] %v171
    %299 = vst [vmem:[#allocation5 + $0x28] sm:$0xff] %v173
    %300 = vst [vmem:[#allocation5 + $0x30] sm:$0xff] %v252
    %301 = vst [vmem:[#allocation5 + $0x38] sm:$0xff] %v254
    %302 = vst [vmem:[#allocation5 + $0x40] sm:$0xff] %v177
    %303 = vst [vmem:[#allocation5 + $0x48] sm:$0xff] %v179
    %304 = vst [vmem:[#allocation5 + $0x50] sm:$0xff] %v258
    %305 = vst [vmem:[#allocation5 + $0x58] sm:$0xff] %v260
    %306 = vst [vmem:[#allocation5 + $0x60] sm:$0xff] %v181
    %307 = vst [vmem:[#allocation5 + $0x68] sm:$0xff] %v183
    %308 = vst [vmem:[#allocation5 + $0x70] sm:$0xff] %v262
    %309 = vst [vmem:[#allocation5 + $0x78] sm:$0xff] %v264
    %310 = vst [vmem:[#allocation5 + $0x80] sm:$0xff] %v187
    %311 = vst [vmem:[#allocation5 + $0x88] sm:$0xff] %v189
    %312 = vst [vmem:[#allocation5 + $0x90] sm:$0xff] %v268
    %313 = vst [vmem:[#allocation5 + $0x98] sm:$0xff] %v270
    %314 = vst [vmem:[#allocation5 + $0xa0] sm:$0xff] %v191
    %315 = vst [vmem:[#allocation5 + $0xa8] sm:$0xff] %v193
    %316 = vst [vmem:[#allocation5 + $0xb0] sm:$0xff] %v272
    %317 = vst [vmem:[#allocation5 + $0xb8] sm:$0xff] %v274
    %318 = vst [vmem:[#allocation5 + $0xc0] sm:$0xff] %v197
    %319 = vst [vmem:[#allocation5 + $0xc8] sm:$0xff] %v199
    %320 = vst [vmem:[#allocation5 + $0xd0] sm:$0xff] %v278
    %321 = vst [vmem:[#allocation5 + $0xd8] sm:$0xff] %v280
    %322 = vst [vmem:[#allocation5 + $0xe0] sm:$0xff] %v201
    %323 = vst [vmem:[#allocation5 + $0xe8] sm:$0xff] %v203
    %324 = vst [vmem:[#allocation5 + $0xf0] sm:$0xff] %v282
    %325 = vst [vmem:[#allocation5 + $0xf8] sm:$0xff] %v284
    %326 = vst [vmem:[#allocation5 + $0x100] sm:$0xff] %v207
    %327 = vst [vmem:[#allocation5 + $0x108] sm:$0xff] %v209
    %328 = vst [vmem:[#allocation5 + $0x110] sm:$0xff] %v288
    %329 = vst [vmem:[#allocation5 + $0x118] sm:$0xff] %v290
    %330 = vst [vmem:[#allocation2] sm:$0xff] 0.0
    %331 = vst [vmem:[#allocation3] sm:$0xff] 0.0
    %v332 = vld [vmem:[#allocation5] sm:$0xff]
    %v333 = vld [vmem:[#allocation5 + $0x8] sm:$0xff]
    %v334 = vld [vmem:[#allocation5 + $0x10] sm:$0xff]
    %v335 = vld [vmem:[#allocation5 + $0x18] sm:$0xff]
    %v336 = vld [vmem:[#allocation2] sm:$0xff]
    %v337 = vpack.c.bf16 %v336, %v336
    %v338 = vld [vmem:[#allocation6] sm:$0xff]
    %v339 = vld [vmem:[#allocation6 + $0x8] sm:$0xff]
    %v340 = vld [vmem:[#allocation6 + $0x10] sm:$0xff]
    %v341 = vld [vmem:[#allocation6 + $0x18] sm:$0xff]
    %v342 = vld [vmem:[#allocation6 + $0x20] sm:$0xff]
    %v343 = vld [vmem:[#allocation6 + $0x28] sm:$0xff]
    %v344 = vld [vmem:[#allocation6 + $0x30] sm:$0xff]
    %v345 = vld [vmem:[#allocation6 + $0x38] sm:$0xff]
    %v346 = vld [vmem:[#allocation6 + $0x40] sm:$0xff]
    %v347 = vld [vmem:[#allocation6 + $0x48] sm:$0xff]
    %v348 = vld [vmem:[#allocation6 + $0x50] sm:$0xff]
    %v349 = vld [vmem:[#allocation6 + $0x58] sm:$0xff]
    %v350 = vld [vmem:[#allocation6 + $0x60] sm:$0xff]
    %v351 = vld [vmem:[#allocation6 + $0x68] sm:$0xff]
    %v352 = vld [vmem:[#allocation6 + $0x70] sm:$0xff]
    %v353 = vld [vmem:[#allocation6 + $0x78] sm:$0xff]
    %v354 = vld [vmem:[#allocation6 + $0x80] sm:$0xff]
    %v355 = vld [vmem:[#allocation6 + $0x88] sm:$0xff]
    %v356 = vld [vmem:[#allocation6 + $0x90] sm:$0xff]
    %v357 = vld [vmem:[#allocation6 + $0x98] sm:$0xff]
    %v358 = vld [vmem:[#allocation6 + $0xa0] sm:$0xff]
    %v359 = vld [vmem:[#allocation6 + $0xa8] sm:$0xff]
    %v360 = vld [vmem:[#allocation6 + $0xb0] sm:$0xff]
    %v361 = vld [vmem:[#allocation6 + $0xb8] sm:$0xff]
    %v362 = vld [vmem:[#allocation6 + $0xc0] sm:$0xff]
    %v363 = vld [vmem:[#allocation6 + $0xc8] sm:$0xff]
    %v364 = vld [vmem:[#allocation6 + $0xd0] sm:$0xff]
    %v365 = vld [vmem:[#allocation6 + $0xd8] sm:$0xff]
    %v366 = vld [vmem:[#allocation6 + $0xe0] sm:$0xff]
    %v367 = vld [vmem:[#allocation6 + $0xe8] sm:$0xff]
    %v368 = vld [vmem:[#allocation6 + $0xf0] sm:$0xff]
    %v369 = vld [vmem:[#allocation6 + $0xf8] sm:$0xff]
    %v402 = vunpack.c.l.b16 %v338
    %v403 = vunpack.c.h.b16 %v338
    %v404 = vunpack.c.l.b16 %v339
    %v405 = vunpack.c.h.b16 %v339
    %v406 = vunpack.c.l.b16 %v340
    %v407 = vunpack.c.h.b16 %v340
    %v408 = vunpack.c.l.b16 %v341
    %v409 = vunpack.c.h.b16 %v341
    %v410 = vunpack.c.l.b16 %v342
    %v411 = vunpack.c.h.b16 %v342
    %v412 = vunpack.c.l.b16 %v343
    %v413 = vunpack.c.h.b16 %v343
    %v414 = vunpack.c.l.b16 %v344
    %v415 = vunpack.c.h.b16 %v344
    %v416 = vunpack.c.l.b16 %v345
    %v417 = vunpack.c.h.b16 %v345
    %v418 = vunpack.c.l.b16 %v346
    %v419 = vunpack.c.h.b16 %v346
    %v420 = vunpack.c.l.b16 %v347
    %v421 = vunpack.c.h.b16 %v347
    %v422 = vunpack.c.l.b16 %v348
    %v423 = vunpack.c.h.b16 %v348
    %v424 = vunpack.c.l.b16 %v349
    %v425 = vunpack.c.h.b16 %v349
    %v426 = vunpack.c.l.b16 %v350
    %v427 = vunpack.c.h.b16 %v350
    %v428 = vunpack.c.l.b16 %v351
    %v429 = vunpack.c.h.b16 %v351
    %v430 = vunpack.c.l.b16 %v352
    %v431 = vunpack.c.h.b16 %v352
    %v432 = vunpack.c.l.b16 %v353
    %v433 = vunpack.c.h.b16 %v353
    %v434 = vunpack.c.l.b16 %v354
    %v435 = vunpack.c.h.b16 %v354
    %v436 = vunpack.c.l.b16 %v355
    %v437 = vunpack.c.h.b16 %v355
    %v438 = vunpack.c.l.b16 %v356
    %v439 = vunpack.c.h.b16 %v356
    %v440 = vunpack.c.l.b16 %v357
    %v441 = vunpack.c.h.b16 %v357
    %v442 = vunpack.c.l.b16 %v358
    %v443 = vunpack.c.h.b16 %v358
    %v444 = vunpack.c.l.b16 %v359
    %v445 = vunpack.c.h.b16 %v359
    %v446 = vunpack.c.l.b16 %v360
    %v447 = vunpack.c.h.b16 %v360
    %v448 = vunpack.c.l.b16 %v361
    %v449 = vunpack.c.h.b16 %v361
    %v450 = vunpack.c.l.b16 %v362
    %v451 = vunpack.c.h.b16 %v362
    %v452 = vunpack.c.l.b16 %v363
    %v453 = vunpack.c.h.b16 %v363
    %v454 = vunpack.c.l.b16 %v364
    %v455 = vunpack.c.h.b16 %v364
    %v456 = vunpack.c.l.b16 %v365
    %v457 = vunpack.c.h.b16 %v365
    %v458 = vunpack.c.l.b16 %v366
    %v459 = vunpack.c.h.b16 %v366
    %v460 = vunpack.c.l.b16 %v367
    %v461 = vunpack.c.h.b16 %v367
    %v462 = vunpack.c.l.b16 %v368
    %v463 = vunpack.c.h.b16 %v368
    %v464 = vunpack.c.l.b16 %v369
    %v465 = vunpack.c.h.b16 %v369
    %v466 = vpack.c.b16 %v406, %v402
    %v467 = vpack.c.b16 %v407, %v403
    %v468 = vpack.c.b16 %v408, %v404
    %v469 = vpack.c.b16 %v409, %v405
    %v470 = vpack.c.b16 %v414, %v410
    %v471 = vpack.c.b16 %v415, %v411
    %v472 = vpack.c.b16 %v416, %v412
    %v473 = vpack.c.b16 %v417, %v413
    %v474 = vpack.c.b16 %v422, %v418
    %v475 = vpack.c.b16 %v423, %v419
    %v476 = vpack.c.b16 %v424, %v420
    %v477 = vpack.c.b16 %v425, %v421
    %v478 = vpack.c.b16 %v430, %v426
    %v479 = vpack.c.b16 %v431, %v427
    %v480 = vpack.c.b16 %v432, %v428
    %v481 = vpack.c.b16 %v433, %v429
    %v482 = vpack.c.b16 %v438, %v434
    %v483 = vpack.c.b16 %v439, %v435
    %v484 = vpack.c.b16 %v440, %v436
    %v485 = vpack.c.b16 %v441, %v437
    %v486 = vpack.c.b16 %v446, %v442
    %v487 = vpack.c.b16 %v447, %v443
    %v488 = vpack.c.b16 %v448, %v444
    %v489 = vpack.c.b16 %v449, %v445
    %v490 = vpack.c.b16 %v454, %v450
    %v491 = vpack.c.b16 %v455, %v451
    %v492 = vpack.c.b16 %v456, %v452
    %v493 = vpack.c.b16 %v457, %v453
    %v494 = vpack.c.b16 %v462, %v458
    %v495 = vpack.c.b16 %v463, %v459
    %v496 = vpack.c.b16 %v464, %v460
    %v497 = vpack.c.b16 %v465, %v461
    %530 = vmatprep.subr.bf16.mxu0 %v467
    %531 = vmatpush1.bf16.msra.mxu0 %v466
    %532 = vmatprep.subr.bf16.mxu0 %v471
    %533 = vmatpush1.bf16.msra.mxu0 %v470
    %534 = vmatprep.subr.bf16.mxu0 %v475
    %535 = vmatpush1.bf16.msra.mxu0 %v474
    %536 = vmatprep.subr.bf16.mxu0 %v479
    %537 = vmatpush1.bf16.msra.mxu0 %v478
    %538 = vmatprep.subr.bf16.mxu0 %v483
    %539 = vmatpush1.bf16.msra.mxu0 %v482
    %540 = vmatprep.subr.bf16.mxu0 %v487
    %541 = vmatpush1.bf16.msra.mxu0 %v486
    %542 = vmatprep.subr.bf16.mxu0 %v491
    %543 = vmatpush1.bf16.msra.mxu0 %v490
    %544 = vmatprep.subr.bf16.mxu0 %v495
    %545 = vmatpush1.bf16.msra.mxu0 %v494
    %546 = vmatprep.subr.bf16.mxu0 0
    %547 = vmatpush1.bf16.msra.mxu0 0
    %548 = vmatprep.subr.bf16.mxu0 0
    %549 = vmatpush1.bf16.msra.mxu0 0
    %550 = vmatprep.subr.bf16.mxu0 0
    %551 = vmatpush1.bf16.msra.mxu0 0
    %552 = vmatprep.subr.bf16.mxu0 0
    %553 = vmatpush1.bf16.msra.mxu0 0
    %554 = vmatprep.subr.bf16.mxu0 0
    %555 = vmatpush1.bf16.msra.mxu0 0
    %556 = vmatprep.subr.bf16.mxu0 0
    %557 = vmatpush1.bf16.msra.mxu0 0
    %558 = vmatprep.subr.bf16.mxu0 0
    %559 = vmatpush1.bf16.msra.mxu0 0
    %560 = vmatprep.subr.bf16.mxu0 0
    %561 = vmatpush1.bf16.msra.mxu0 0
    %562 = vmatprep.mubr.bf16.mxu0 0
    %563 = vmatmul.mubr.bf16.gmra.mrb[0].mxu0 %v337
    %v564 = vpop.f32.mrb[0].mxu0
    %v565 = vadd.f32 0.0, %v564
    %v566 = vpop.f32.mrb[0].mxu0
    %v567 = vadd.f32 0.0, %v566
    %v568 = vpop.f32.mrb[0].mxu0
    %v569 = vpop.f32.mrb[0].mxu0
    %570 = vdwg.mxu0
    %571 = vmatprep.subr.bf16.mxu0 %v469
    %572 = vmatpush1.bf16.msra.mxu0 %v468
    %573 = vmatprep.subr.bf16.mxu0 %v473
    %574 = vmatpush1.bf16.msra.mxu0 %v472
    %575 = vmatprep.subr.bf16.mxu0 %v477
    %576 = vmatpush1.bf16.msra.mxu0 %v476
    %577 = vmatprep.subr.bf16.mxu0 %v481
    %578 = vmatpush1.bf16.msra.mxu0 %v480
    %579 = vmatprep.subr.bf16.mxu0 %v485
    %580 = vmatpush1.bf16.msra.mxu0 %v484
    %581 = vmatprep.subr.bf16.mxu0 %v489
    %582 = vmatpush1.bf16.msra.mxu0 %v488
    %583 = vmatprep.subr.bf16.mxu0 %v493
    %584 = vmatpush1.bf16.msra.mxu0 %v492
    %585 = vmatprep.subr.bf16.mxu0 %v497
    %586 = vmatpush1.bf16.msra.mxu0 %v496
    %587 = vmatprep.subr.bf16.mxu0 0
    %588 = vmatpush1.bf16.msra.mxu0 0
    %589 = vmatprep.subr.bf16.mxu0 0
    %590 = vmatpush1.bf16.msra.mxu0 0
    %591 = vmatprep.subr.bf16.mxu0 0
    %592 = vmatpush1.bf16.msra.mxu0 0
    %593 = vmatprep.subr.bf16.mxu0 0
    %594 = vmatpush1.bf16.msra.mxu0 0
    %595 = vmatprep.subr.bf16.mxu0 0
    %596 = vmatpush1.bf16.msra.mxu0 0
    %597 = vmatprep.subr.bf16.mxu0 0
    %598 = vmatpush1.bf16.msra.mxu0 0
    %599 = vmatprep.subr.bf16.mxu0 0
    %600 = vmatpush1.bf16.msra.mxu0 0
    %601 = vmatprep.subr.bf16.mxu0 0
    %602 = vmatpush1.bf16.msra.mxu0 0
    %603 = vmatprep.mubr.bf16.mxu0 0
    %604 = vmatmul.mubr.bf16.gmra.mrb[0].mxu0 %v337
    %v605 = vpop.f32.mrb[0].mxu0
    %v606 = vadd.f32 0.0, %v605
    %v607 = vpop.f32.mrb[0].mxu0
    %v608 = vadd.f32 0.0, %v607
    %v609 = vpop.f32.mrb[0].mxu0
    %v610 = vpop.f32.mrb[0].mxu0
    %611 = vdwg.mxu0
    %v612 = vadd.f32 %v332, %v565
    %v613 = vadd.f32 %v333, %v567
    %v614 = vadd.f32 %v334, %v606
    %v615 = vadd.f32 %v335, %v608
    %v616 = vxor.u32 %v612, 2147483648
    %v617 = vmul.f32 %v616, 1.442695
    %v618 = vpow.pop %v617
    %v619 = vadd.f32 %v618, 1.0
    %v620 = vrcp.pop %v619
    %v621 = vmul.f32 1.0, %v620
    %v622 = vxor.u32 %v613, 2147483648
    %v623 = vmul.f32 %v622, 1.442695
    %v624 = vpow.pop %v623
    %v625 = vadd.f32 %v624, 1.0
    %v626 = vrcp.pop %v625
    %v627 = vmul.f32 1.0, %v626
    %v628 = vtanh.pop %v614
    %v629 = vxor.u32 %v615, 2147483648
    %v630 = vmul.f32 %v629, 1.442695
    %v631 = vpow.pop %v630
    %v632 = vadd.f32 %v631, 1.0
    %v633 = vrcp.pop %v632
    %v634 = vmul.f32 1.0, %v633
    %v635 = vld [vmem:[#allocation3] sm:$0xff]
    %v636 = vmul.f32 %v627, %v635
    %v637 = vmul.f32 %v621, %v628
    %v638 = vadd.f32 %v636, %v637
    %v639 = vtanh.pop %v638
    %v640 = vmul.f32 %v634, %v639
    %641 = vst [vmem:[#allocation3] sm:$0xff] %v638
    %642 = vst [vmem:[#allocation2] sm:$0xff] %v640
    %643 = vst [vmem:[#allocation4] sm:$0xff] %v640
    %s644 = scalar_lea.vmem [#allocation5], 32
    %v645 = vld [vmem:[%s644] sm:$0xff]
    %v646 = vld [vmem:[%s644 + $0x8] sm:$0xff]
    %v647 = vld [vmem:[%s644 + $0x10] sm:$0xff]
    %v648 = vld [vmem:[%s644 + $0x18] sm:$0xff]
    %v649 = vld [vmem:[#allocation2] sm:$0xff]
    %v650 = vpack.c.bf16 %v649, %v649
    %v651 = vld [vmem:[#allocation6] sm:$0xff]
    %v652 = vld [vmem:[#allocation6 + $0x8] sm:$0xff]
    %v653 = vld [vmem:[#allocation6 + $0x10] sm:$0xff]
    %v654 = vld [vmem:[#allocation6 + $0x18] sm:$0xff]
    %v655 = vld [vmem:[#allocation6 + $0x20] sm:$0xff]
    %v656 = vld [vmem:[#allocation6 + $0x28] sm:$0xff]
    %v657 = vld [vmem:[#allocation6 + $0x30] sm:$0xff]
    %v658 = vld [vmem:[#allocation6 + $0x38] sm:$0xff]
    %v659 = vld [vmem:[#allocation6 + $0x40] sm:$0xff]
    %v660 = vld [vmem:[#allocation6 + $0x48] sm:$0xff]
    %v661 = vld [vmem:[#allocation6 + $0x50] sm:$0xff]
    %v662 = vld [vmem:[#allocation6 + $0x58] sm:$0xff]
    %v663 = vld [vmem:[#allocation6 + $0x60] sm:$0xff]
    %v664 = vld [vmem:[#allocation6 + $0x68] sm:$0xff]
    %v665 = vld [vmem:[#allocation6 + $0x70] sm:$0xff]
    %v666 = vld [vmem:[#allocation6 + $0x78] sm:$0xff]
    %v667 = vld [vmem:[#allocation6 + $0x80] sm:$0xff]
    %v668 = vld [vmem:[#allocation6 + $0x88] sm:$0xff]
    %v669 = vld [vmem:[#allocation6 + $0x90] sm:$0xff]
    %v670 = vld [vmem:[#allocation6 + $0x98] sm:$0xff]
    %v671 = vld [vmem:[#allocation6 + $0xa0] sm:$0xff]
    %v672 = vld [vmem:[#allocation6 + $0xa8] sm:$0xff]
    %v673 = vld [vmem:[#allocation6 + $0xb0] sm:$0xff]
    %v674 = vld [vmem:[#allocation6 + $0xb8] sm:$0xff]
    %v675 = vld [vmem:[#allocation6 + $0xc0] sm:$0xff]
    %v676 = vld [vmem:[#allocation6 + $0xc8] sm:$0xff]
    %v677 = vld [vmem:[#allocation6 + $0xd0] sm:$0xff]
    %v678 = vld [vmem:[#allocation6 + $0xd8] sm:$0xff]
    %v679 = vld [vmem:[#allocation6 + $0xe0] sm:$0xff]
    %v680 = vld [vmem:[#allocation6 + $0xe8] sm:$0xff]
    %v681 = vld [vmem:[#allocation6 + $0xf0] sm:$0xff]
    %v682 = vld [vmem:[#allocation6 + $0xf8] sm:$0xff]
    %v715 = vunpack.c.l.b16 %v651
    %v716 = vunpack.c.h.b16 %v651
    %v717 = vunpack.c.l.b16 %v652
    %v718 = vunpack.c.h.b16 %v652
    %v719 = vunpack.c.l.b16 %v653
    %v720 = vunpack.c.h.b16 %v653
    %v721 = vunpack.c.l.b16 %v654
    %v722 = vunpack.c.h.b16 %v654
    %v723 = vunpack.c.l.b16 %v655
    %v724 = vunpack.c.h.b16 %v655
    %v725 = vunpack.c.l.b16 %v656
    %v726 = vunpack.c.h.b16 %v656
    %v727 = vunpack.c.l.b16 %v657
    %v728 = vunpack.c.h.b16 %v657
    %v729 = vunpack.c.l.b16 %v658
    %v730 = vunpack.c.h.b16 %v658
    %v731 = vunpack.c.l.b16 %v659
    %v732 = vunpack.c.h.b16 %v659
    %v733 = vunpack.c.l.b16 %v660
    %v734 = vunpack.c.h.b16 %v660
    %v735 = vunpack.c.l.b16 %v661
    %v736 = vunpack.c.h.b16 %v661
    %v737 = vunpack.c.l.b16 %v662
    %v738 = vunpack.c.h.b16 %v662
    %v739 = vunpack.c.l.b16 %v663
    %v740 = vunpack.c.h.b16 %v663
    %v741 = vunpack.c.l.b16 %v664
    %v742 = vunpack.c.h.b16 %v664
    %v743 = vunpack.c.l.b16 %v665
    %v744 = vunpack.c.h.b16 %v665
    %v745 = vunpack.c.l.b16 %v666
    %v746 = vunpack.c.h.b16 %v666
    %v747 = vunpack.c.l.b16 %v667
    %v748 = vunpack.c.h.b16 %v667
    %v749 = vunpack.c.l.b16 %v668
    %v750 = vunpack.c.h.b16 %v668
    %v751 = vunpack.c.l.b16 %v669
    %v752 = vunpack.c.h.b16 %v669
    %v753 = vunpack.c.l.b16 %v670
    %v754 = vunpack.c.h.b16 %v670
    %v755 = vunpack.c.l.b16 %v671
    %v756 = vunpack.c.h.b16 %v671
    %v757 = vunpack.c.l.b16 %v672
    %v758 = vunpack.c.h.b16 %v672
    %v759 = vunpack.c.l.b16 %v673
    %v760 = vunpack.c.h.b16 %v673
    %v761 = vunpack.c.l.b16 %v674
    %v762 = vunpack.c.h.b16 %v674
    %v763 = vunpack.c.l.b16 %v675
    %v764 = vunpack.c.h.b16 %v675
    %v765 = vunpack.c.l.b16 %v676
    %v766 = vunpack.c.h.b16 %v676
    %v767 = vunpack.c.l.b16 %v677
    %v768 = vunpack.c.h.b16 %v677
    %v769 = vunpack.c.l.b16 %v678
    %v770 = vunpack.c.h.b16 %v678
    %v771 = vunpack.c.l.b16 %v679
    %v772 = vunpack.c.h.b16 %v679
    %v773 = vunpack.c.l.b16 %v680
    %v774 = vunpack.c.h.b16 %v680
    %v775 = vunpack.c.l.b16 %v681
    %v776 = vunpack.c.h.b16 %v681
    %v777 = vunpack.c.l.b16 %v682
    %v778 = vunpack.c.h.b16 %v682
    %v779 = vpack.c.b16 %v719, %v715
    %v780 = vpack.c.b16 %v720, %v716
    %v781 = vpack.c.b16 %v721, %v717
    %v782 = vpack.c.b16 %v722, %v718
    %v783 = vpack.c.b16 %v727, %v723
    %v784 = vpack.c.b16 %v728, %v724
    %v785 = vpack.c.b16 %v729, %v725
    %v786 = vpack.c.b16 %v730, %v726
    %v787 = vpack.c.b16 %v735, %v731
    %v788 = vpack.c.b16 %v736, %v732
    %v789 = vpack.c.b16 %v737, %v733
    %v790 = vpack.c.b16 %v738, %v734
    %v791 = vpack.c.b16 %v743, %v739
    %v792 = vpack.c.b16 %v744, %v740
    %v793 = vpack.c.b16 %v745, %v741
    %v794 = vpack.c.b16 %v746, %v742
    %v795 = vpack.c.b16 %v751, %v747
    %v796 = vpack.c.b16 %v752, %v748
    %v797 = vpack.c.b16 %v753, %v749
    %v798 = vpack.c.b16 %v754, %v750
    %v799 = vpack.c.b16 %v759, %v755
    %v800 = vpack.c.b16 %v760, %v756
    %v801 = vpack.c.b16 %v761, %v757
    %v802 = vpack.c.b16 %v762, %v758
    %v803 = vpack.c.b16 %v767, %v763
    %v804 = vpack.c.b16 %v768, %v764
    %v805 = vpack.c.b16 %v769, %v765
    %v806 = vpack.c.b16 %v770, %v766
    %v807 = vpack.c.b16 %v775, %v771
    %v808 = vpack.c.b16 %v776, %v772
    %v809 = vpack.c.b16 %v777, %v773
    %v810 = vpack.c.b16 %v778, %v774
    %843 = vmatprep.subr.bf16.mxu0 %v780
    %844 = vmatpush1.bf16.msra.mxu0 %v779
    %845 = vmatprep.subr.bf16.mxu0 %v784
    %846 = vmatpush1.bf16.msra.mxu0 %v783
    %847 = vmatprep.subr.bf16.mxu0 %v788
    %848 = vmatpush1.bf16.msra.mxu0 %v787
    %849 = vmatprep.subr.bf16.mxu0 %v792
    %850 = vmatpush1.bf16.msra.mxu0 %v791
    %851 = vmatprep.subr.bf16.mxu0 %v796
    %852 = vmatpush1.bf16.msra.mxu0 %v795
    %853 = vmatprep.subr.bf16.mxu0 %v800
    %854 = vmatpush1.bf16.msra.mxu0 %v799
    %855 = vmatprep.subr.bf16.mxu0 %v804
    %856 = vmatpush1.bf16.msra.mxu0 %v803
    %857 = vmatprep.subr.bf16.mxu0 %v808
    %858 = vmatpush1.bf16.msra.mxu0 %v807
    %859 = vmatprep.subr.bf16.mxu0 0
    %860 = vmatpush1.bf16.msra.mxu0 0
    %861 = vmatprep.subr.bf16.mxu0 0
    %862 = vmatpush1.bf16.msra.mxu0 0
    %863 = vmatprep.subr.bf16.mxu0 0
    %864 = vmatpush1.bf16.msra.mxu0 0
    %865 = vmatprep.subr.bf16.mxu0 0
    %866 = vmatpush1.bf16.msra.mxu0 0
    %867 = vmatprep.subr.bf16.mxu0 0
    %868 = vmatpush1.bf16.msra.mxu0 0
    %869 = vmatprep.subr.bf16.mxu0 0
    %870 = vmatpush1.bf16.msra.mxu0 0
    %871 = vmatprep.subr.bf16.mxu0 0
    %872 = vmatpush1.bf16.msra.mxu0 0
    %873 = vmatprep.subr.bf16.mxu0 0
    %874 = vmatpush1.bf16.msra.mxu0 0
    %875 = vmatprep.mubr.bf16.mxu0 0
    %876 = vmatmul.mubr.bf16.gmra.mrb[0].mxu0 %v650
    %v877 = vpop.f32.mrb[0].mxu0
    %v878 = vadd.f32 0.0, %v877
    %v879 = vpop.f32.mrb[0].mxu0
    %v880 = vadd.f32 0.0, %v879
    %v881 = vpop.f32.mrb[0].mxu0
    %v882 = vpop.f32.mrb[0].mxu0
    %883 = vdwg.mxu0
    %884 = vmatprep.subr.bf16.mxu0 %v782
    %885 = vmatpush1.bf16.msra.mxu0 %v781
    %886 = vmatprep.subr.bf16.mxu0 %v786
    %887 = vmatpush1.bf16.msra.mxu0 %v785
    %888 = vmatprep.subr.bf16.mxu0 %v790
    %889 = vmatpush1.bf16.msra.mxu0 %v789
    %890 = vmatprep.subr.bf16.mxu0 %v794
    %891 = vmatpush1.bf16.msra.mxu0 %v793
    %892 = vmatprep.subr.bf16.mxu0 %v798
    %893 = vmatpush1.bf16.msra.mxu0 %v797
    %894 = vmatprep.subr.bf16.mxu0 %v802
    %895 = vmatpush1.bf16.msra.mxu0 %v801
    %896 = vmatprep.subr.bf16.mxu0 %v806
    %897 = vmatpush1.bf16.msra.mxu0 %v805
    %898 = vmatprep.subr.bf16.mxu0 %v810
    %899 = vmatpush1.bf16.msra.mxu0 %v809
    %900 = vmatprep.subr.bf16.mxu0 0
    %901 = vmatpush1.bf16.msra.mxu0 0
    %902 = vmatprep.subr.bf16.mxu0 0
    %903 = vmatpush1.bf16.msra.mxu0 0
    %904 = vmatprep.subr.bf16.mxu0 0
    %905 = vmatpush1.bf16.msra.mxu0 0
    %906 = vmatprep.subr.bf16.mxu0 0
    %907 = vmatpush1.bf16.msra.mxu0 0
    %908 = vmatprep.subr.bf16.mxu0 0
    %909 = vmatpush1.bf16.msra.mxu0 0
    %910 = vmatprep.subr.bf16.mxu0 0
    %911 = vmatpush1.bf16.msra.mxu0 0
    %912 = vmatprep.subr.bf16.mxu0 0
    %913 = vmatpush1.bf16.msra.mxu0 0
    %914 = vmatprep.subr.bf16.mxu0 0
    %915 = vmatpush1.bf16.msra.mxu0 0
    %916 = vmatprep.mubr.bf16.mxu0 0
    %917 = vmatmul.mubr.bf16.gmra.mrb[0].mxu0 %v650
    %v918 = vpop.f32.mrb[0].mxu0
    %v919 = vadd.f32 0.0, %v918
    %v920 = vpop.f32.mrb[0].mxu0
    %v921 = vadd.f32 0.0, %v920
    %v922 = vpop.f32.mrb[0].mxu0
    %v923 = vpop.f32.mrb[0].mxu0
    %924 = vdwg.mxu0
    %v925 = vadd.f32 %v645, %v878
    %v926 = vadd.f32 %v646, %v880
    %v927 = vadd.f32 %v647, %v919
    %v928 = vadd.f32 %v648, %v921
    %v929 = vxor.u32 %v925, 2147483648
    %v930 = vmul.f32 %v929, 1.442695
    %v931 = vpow.pop %v930
    %v932 = vadd.f32 %v931, 1.0
    %v933 = vrcp.pop %v932
    %v934 = vmul.f32 1.0, %v933
    %v935 = vxor.u32 %v926, 2147483648
    %v936 = vmul.f32 %v935, 1.442695
    %v937 = vpow.pop %v936
    %v938 = vadd.f32 %v937, 1.0
    %v939 = vrcp.pop %v938
    %v940 = vmul.f32 1.0, %v939
    %v941 = vtanh.pop %v927
    %v942 = vxor.u32 %v928, 2147483648
    %v943 = vmul.f32 %v942, 1.442695
    %v944 = vpow.pop %v943
    %v945 = vadd.f32 %v944, 1.0
    %v946 = vrcp.pop %v945
    %v947 = vmul.f32 1.0, %v946
    %v948 = vld [vmem:[#allocation3] sm:$0xff]
    %v949 = vmul.f32 %v940, %v948
    %v950 = vmul.f32 %v934, %v941
    %v951 = vadd.f32 %v949, %v950
    %v952 = vtanh.pop %v951
    %v953 = vmul.f32 %v947, %v952
    %954 = vst [vmem:[#allocation3] sm:$0xff] %v951
    %955 = vst [vmem:[#allocation2] sm:$0xff] %v953
    %s956 = scalar_lea.vmem [#allocation4], 8
    %957 = vst [vmem:[%s956] sm:$0xff] %v953
    %s958 = scalar_lea.vmem [#allocation5], 64
    %v959 = vld [vmem:[%s958] sm:$0xff]
    %v960 = vld [vmem:[%s958 + $0x8] sm:$0xff]
    %v961 = vld [vmem:[%s958 + $0x10] sm:$0xff]
    %v962 = vld [vmem:[%s958 + $0x18] sm:$0xff]
    %v963 = vld [vmem:[#allocation2] sm:$0xff]
    %v964 = vpack.c.bf16 %v963, %v963
    %v965 = vld [vmem:[#allocation6] sm:$0xff]
    %v966 = vld [vmem:[#allocation6 + $0x8] sm:$0xff]
    %v967 = vld [vmem:[#allocation6 + $0x10] sm:$0xff]
    %v968 = vld [vmem:[#allocation6 + $0x18] sm:$0xff]
    %v969 = vld [vmem:[#allocation6 + $0x20] sm:$0xff]
    %v970 = vld [vmem:[#allocation6 + $0x28] sm:$0xff]
    %v971 = vld [vmem:[#allocation6 + $0x30] sm:$0xff]
    %v972 = vld [vmem:[#allocation6 + $0x38] sm:$0xff]
    %v973 = vld [vmem:[#allocation6 + $0x40] sm:$0xff]
    %v974 = vld [vmem:[#allocation6 + $0x48] sm:$0xff]
    %v975 = vld [vmem:[#allocation6 + $0x50] sm:$0xff]
    %v976 = vld [vmem:[#allocation6 + $0x58] sm:$0xff]
    %v977 = vld [vmem:[#allocation6 + $0x60] sm:$0xff]
    %v978 = vld [vmem:[#allocation6 + $0x68] sm:$0xff]
    %v979 = vld [vmem:[#allocation6 + $0x70] sm:$0xff]
    %v980 = vld [vmem:[#allocation6 + $0x78] sm:$0xff]
    %v981 = vld [vmem:[#allocation6 + $0x80] sm:$0xff]
    %v982 = vld [vmem:[#allocation6 + $0x88] sm:$0xff]
    %v983 = vld [vmem:[#allocation6 + $0x90] sm:$0xff]
    %v984 = vld [vmem:[#allocation6 + $0x98] sm:$0xff]
    %v985 = vld [vmem:[#allocation6 + $0xa0] sm:$0xff]
    %v986 = vld [vmem:[#allocation6 + $0xa8] sm:$0xff]
    %v987 = vld [vmem:[#allocation6 + $0xb0] sm:$0xff]
    %v988 = vld [vmem:[#allocation6 + $0xb8] sm:$0xff]
    %v989 = vld [vmem:[#allocation6 + $0xc0] sm:$0xff]
    %v990 = vld [vmem:[#allocation6 + $0xc8] sm:$0xff]
    %v991 = vld [vmem:[#allocation6 + $0xd0] sm:$0xff]
    %v992 = vld [vmem:[#allocation6 + $0xd8] sm:$0xff]
    %v993 = vld [vmem:[#allocation6 + $0xe0] sm:$0xff]
    %v994 = vld [vmem:[#allocation6 + $0xe8] sm:$0xff]
    %v995 = vld [vmem:[#allocation6 + $0xf0] sm:$0xff]
    %v996 = vld [vmem:[#allocation6 + $0xf8] sm:$0xff]
    %v1029 = vunpack.c.l.b16 %v965
    %v1030 = vunpack.c.h.b16 %v965
    %v1031 = vunpack.c.l.b16 %v966
    %v1032 = vunpack.c.h.b16 %v966
    %v1033 = vunpack.c.l.b16 %v967
    %v1034 = vunpack.c.h.b16 %v967
    %v1035 = vunpack.c.l.b16 %v968
    %v1036 = vunpack.c.h.b16 %v968
    %v1037 = vunpack.c.l.b16 %v969
    %v1038 = vunpack.c.h.b16 %v969
    %v1039 = vunpack.c.l.b16 %v970
    %v1040 = vunpack.c.h.b16 %v970
    %v1041 = vunpack.c.l.b16 %v971
    %v1042 = vunpack.c.h.b16 %v971
    %v1043 = vunpack.c.l.b16 %v972
    %v1044 = vunpack.c.h.b16 %v972
    %v1045 = vunpack.c.l.b16 %v973
    %v1046 = vunpack.c.h.b16 %v973
    %v1047 = vunpack.c.l.b16 %v974
    %v1048 = vunpack.c.h.b16 %v974
    %v1049 = vunpack.c.l.b16 %v975
    %v1050 = vunpack.c.h.b16 %v975
    %v1051 = vunpack.c.l.b16 %v976
    %v1052 = vunpack.c.h.b16 %v976
    %v1053 = vunpack.c.l.b16 %v977
    %v1054 = vunpack.c.h.b16 %v977
    %v1055 = vunpack.c.l.b16 %v978
    %v1056 = vunpack.c.h.b16 %v978
    %v1057 = vunpack.c.l.b16 %v979
    %v1058 = vunpack.c.h.b16 %v979
    %v1059 = vunpack.c.l.b16 %v980
    %v1060 = vunpack.c.h.b16 %v980
    %v1061 = vunpack.c.l.b16 %v981
    %v1062 = vunpack.c.h.b16 %v981
    %v1063 = vunpack.c.l.b16 %v982
    %v1064 = vunpack.c.h.b16 %v982
    %v1065 = vunpack.c.l.b16 %v983
    %v1066 = vunpack.c.h.b16 %v983
    %v1067 = vunpack.c.l.b16 %v984
    %v1068 = vunpack.c.h.b16 %v984
    %v1069 = vunpack.c.l.b16 %v985
    %v1070 = vunpack.c.h.b16 %v985
    %v1071 = vunpack.c.l.b16 %v986
    %v1072 = vunpack.c.h.b16 %v986
    %v1073 = vunpack.c.l.b16 %v987
    %v1074 = vunpack.c.h.b16 %v987
    %v1075 = vunpack.c.l.b16 %v988
    %v1076 = vunpack.c.h.b16 %v988
    %v1077 = vunpack.c.l.b16 %v989
    %v1078 = vunpack.c.h.b16 %v989
    %v1079 = vunpack.c.l.b16 %v990
    %v1080 = vunpack.c.h.b16 %v990
    %v1081 = vunpack.c.l.b16 %v991
    %v1082 = vunpack.c.h.b16 %v991
    %v1083 = vunpack.c.l.b16 %v992
    %v1084 = vunpack.c.h.b16 %v992
    %v1085 = vunpack.c.l.b16 %v993
    %v1086 = vunpack.c.h.b16 %v993
    %v1087 = vunpack.c.l.b16 %v994
    %v1088 = vunpack.c.h.b16 %v994
    %v1089 = vunpack.c.l.b16 %v995
    %v1090 = vunpack.c.h.b16 %v995
    %v1091 = vunpack.c.l.b16 %v996
    %v1092 = vunpack.c.h.b16 %v996
    %v1093 = vpack.c.b16 %v1033, %v1029
    %v1094 = vpack.c.b16 %v1034, %v1030
    %v1095 = vpack.c.b16 %v1035, %v1031
    %v1096 = vpack.c.b16 %v1036, %v1032
    %v1097 = vpack.c.b16 %v1041, %v1037
    %v1098 = vpack.c.b16 %v1042, %v1038
    %v1099 = vpack.c.b16 %v1043, %v1039
    %v1100 = vpack.c.b16 %v1044, %v1040
    %v1101 = vpack.c.b16 %v1049, %v1045
    %v1102 = vpack.c.b16 %v1050, %v1046
    %v1103 = vpack.c.b16 %v1051, %v1047
    %v1104 = vpack.c.b16 %v1052, %v1048
    %v1105 = vpack.c.b16 %v1057, %v1053
    %v1106 = vpack.c.b16 %v1058, %v1054
    %v1107 = vpack.c.b16 %v1059, %v1055
    %v1108 = vpack.c.b16 %v1060, %v1056
    %v1109 = vpack.c.b16 %v1065, %v1061
    %v1110 = vpack.c.b16 %v1066, %v1062
    %v1111 = vpack.c.b16 %v1067, %v1063
    %v1112 = vpack.c.b16 %v1068, %v1064
    %v1113 = vpack.c.b16 %v1073, %v1069
    %v1114 = vpack.c.b16 %v1074, %v1070
    %v1115 = vpack.c.b16 %v1075, %v1071
    %v1116 = vpack.c.b16 %v1076, %v1072
    %v1117 = vpack.c.b16 %v1081, %v1077
    %v1118 = vpack.c.b16 %v1082, %v1078
    %v1119 = vpack.c.b16 %v1083, %v1079
    %v1120 = vpack.c.b16 %v1084, %v1080
    %v1121 = vpack.c.b16 %v1089, %v1085
    %v1122 = vpack.c.b16 %v1090, %v1086
    %v1123 = vpack.c.b16 %v1091, %v1087
    %v1124 = vpack.c.b16 %v1092, %v1088
    %1157 = vmatprep.subr.bf16.mxu0 %v1094
    %1158 = vmatpush1.bf16.msra.mxu0 %v1093
    %1159 = vmatprep.subr.bf16.mxu0 %v1098
    %1160 = vmatpush1.bf16.msra.mxu0 %v1097
    %1161 = vmatprep.subr.bf16.mxu0 %v1102
    %1162 = vmatpush1.bf16.msra.mxu0 %v1101
    %1163 = vmatprep.subr.bf16.mxu0 %v1106
    %1164 = vmatpush1.bf16.msra.mxu0 %v1105
    %1165 = vmatprep.subr.bf16.mxu0 %v1110
    %1166 = vmatpush1.bf16.msra.mxu0 %v1109
    %1167 = vmatprep.subr.bf16.mxu0 %v1114
    %1168 = vmatpush1.bf16.msra.mxu0 %v1113
    %1169 = vmatprep.subr.bf16.mxu0 %v1118
    %1170 = vmatpush1.bf16.msra.mxu0 %v1117
    %1171 = vmatprep.subr.bf16.mxu0 %v1122
    %1172 = vmatpush1.bf16.msra.mxu0 %v1121
    %1173 = vmatprep.subr.bf16.mxu0 0
    %1174 = vmatpush1.bf16.msra.mxu0 0
    %1175 = vmatprep.subr.bf16.mxu0 0
    %1176 = vmatpush1.bf16.msra.mxu0 0
    %1177 = vmatprep.subr.bf16.mxu0 0
    %1178 = vmatpush1.bf16.msra.mxu0 0
    %1179 = vmatprep.subr.bf16.mxu0 0
    %1180 = vmatpush1.bf16.msra.mxu0 0
    %1181 = vmatprep.subr.bf16.mxu0 0
    %1182 = vmatpush1.bf16.msra.mxu0 0
    %1183 = vmatprep.subr.bf16.mxu0 0
    %1184 = vmatpush1.bf16.msra.mxu0 0
    %1185 = vmatprep.subr.bf16.mxu0 0
    %1186 = vmatpush1.bf16.msra.mxu0 0
    %1187 = vmatprep.subr.bf16.mxu0 0
    %1188 = vmatpush1.bf16.msra.mxu0 0
    %1189 = vmatprep.mubr.bf16.mxu0 0
    %1190 = vmatmul.mubr.bf16.gmra.mrb[0].mxu0 %v964
    %v1191 = vpop.f32.mrb[0].mxu0
    %v1192 = vadd.f32 0.0, %v1191
    %v1193 = vpop.f32.mrb[0].mxu0
    %v1194 = vadd.f32 0.0, %v1193
    %v1195 = vpop.f32.mrb[0].mxu0
    %v1196 = vpop.f32.mrb[0].mxu0
    %1197 = vdwg.mxu0
    %1198 = vmatprep.subr.bf16.mxu0 %v1096
    %1199 = vmatpush1.bf16.msra.mxu0 %v1095
    %1200 = vmatprep.subr.bf16.mxu0 %v1100
    %1201 = vmatpush1.bf16.msra.mxu0 %v1099
    %1202 = vmatprep.subr.bf16.mxu0 %v1104
    %1203 = vmatpush1.bf16.msra.mxu0 %v1103
    %1204 = vmatprep.subr.bf16.mxu0 %v1108
    %1205 = vmatpush1.bf16.msra.mxu0 %v1107
    %1206 = vmatprep.subr.bf16.mxu0 %v1112
    %1207 = vmatpush1.bf16.msra.mxu0 %v1111
    %1208 = vmatprep.subr.bf16.mxu0 %v1116
    %1209 = vmatpush1.bf16.msra.mxu0 %v1115
    %1210 = vmatprep.subr.bf16.mxu0 %v1120
    %1211 = vmatpush1.bf16.msra.mxu0 %v1119
    %1212 = vmatprep.subr.bf16.mxu0 %v1124
    %1213 = vmatpush1.bf16.msra.mxu0 %v1123
    %1214 = vmatprep.subr.bf16.mxu0 0
    %1215 = vmatpush1.bf16.msra.mxu0 0
    %1216 = vmatprep.subr.bf16.mxu0 0
    %1217 = vmatpush1.bf16.msra.mxu0 0
    %1218 = vmatprep.subr.bf16.mxu0 0
    %1219 = vmatpush1.bf16.msra.mxu0 0
    %1220 = vmatprep.subr.bf16.mxu0 0
    %1221 = vmatpush1.bf16.msra.mxu0 0
    %1222 = vmatprep.subr.bf16.mxu0 0
    %1223 = vmatpush1.bf16.msra.mxu0 0
    %1224 = vmatprep.subr.bf16.mxu0 0
    %1225 = vmatpush1.bf16.msra.mxu0 0
    %1226 = vmatprep.subr.bf16.mxu0 0
    %1227 = vmatpush1.bf16.msra.mxu0 0
    %1228 = vmatprep.subr.bf16.mxu0 0
    %1229 = vmatpush1.bf16.msra.mxu0 0
    %1230 = vmatprep.mubr.bf16.mxu0 0
    %1231 = vmatmul.mubr.bf16.gmra.mrb[0].mxu0 %v964
    %v1232 = vpop.f32.mrb[0].mxu0
    %v1233 = vadd.f32 0.0, %v1232
    %v1234 = vpop.f32.mrb[0].mxu0
    %v1235 = vadd.f32 0.0, %v1234
    %v1236 = vpop.f32.mrb[0].mxu0
    %v1237 = vpop.f32.mrb[0].mxu0
    %1238 = vdwg.mxu0
    %v1239 = vadd.f32 %v959, %v1192
    %v1240 = vadd.f32 %v960, %v1194
    %v1241 = vadd.f32 %v961, %v1233
    %v1242 = vadd.f32 %v962, %v1235
    %v1243 = vxor.u32 %v1239, 2147483648
    %v1244 = vmul.f32 %v1243, 1.442695
    %v1245 = vpow.pop %v1244
    %v1246 = vadd.f32 %v1245, 1.0
    %v1247 = vrcp.pop %v1246
    %v1248 = vmul.f32 1.0, %v1247
    %v1249 = vxor.u32 %v1240, 2147483648
    %v1250 = vmul.f32 %v1249, 1.442695
    %v1251 = vpow.pop %v1250
    %v1252 = vadd.f32 %v1251, 1.0
    %v1253 = vrcp.pop %v1252
    %v1254 = vmul.f32 1.0, %v1253
    %v1255 = vtanh.pop %v1241
    %v1256 = vxor.u32 %v1242, 2147483648
    %v1257 = vmul.f32 %v1256, 1.442695
    %v1258 = vpow.pop %v1257
    %v1259 = vadd.f32 %v1258, 1.0
    %v1260 = vrcp.pop %v1259
    %v1261 = vmul.f32 1.0, %v1260
    %v1262 = vld [vmem:[#allocation3] sm:$0xff]
    %v1263 = vmul.f32 %v1254, %v1262
    %v1264 = vmul.f32 %v1248, %v1255
    %v1265 = vadd.f32 %v1263, %v1264
    %v1266 = vtanh.pop %v1265
    %v1267 = vmul.f32 %v1261, %v1266
    %1268 = vst [vmem:[#allocation3] sm:$0xff] %v1265
    %1269 = vst [vmem:[#allocation2] sm:$0xff] %v1267
    %s1270 = scalar_lea.vmem [#allocation4], 16
    %1271 = vst [vmem:[%s1270] sm:$0xff] %v1267
    %s1272 = scalar_lea.vmem [#allocation5], 96
    %v1273 = vld [vmem:[%s1272] sm:$0xff]
    %v1274 = vld [vmem:[%s1272 + $0x8] sm:$0xff]
    %v1275 = vld [vmem:[%s1272 + $0x10] sm:$0xff]
    %v1276 = vld [vmem:[%s1272 + $0x18] sm:$0xff]
    %v1277 = vld [vmem:[#allocation2] sm:$0xff]
    %v1278 = vpack.c.bf16 %v1277, %v1277
    %v1279 = vld [vmem:[#allocation6] sm:$0xff]
    %v1280 = vld [vmem:[#allocation6 + $0x8] sm:$0xff]
    %v1281 = vld [vmem:[#allocation6 + $0x10] sm:$0xff]
    %v1282 = vld [vmem:[#allocation6 + $0x18] sm:$0xff]
    %v1283 = vld [vmem:[#allocation6 + $0x20] sm:$0xff]
    %v1284 = vld [vmem:[#allocation6 + $0x28] sm:$0xff]
    %v1285 = vld [vmem:[#allocation6 + $0x30] sm:$0xff]
    %v1286 = vld [vmem:[#allocation6 + $0x38] sm:$0xff]
    %v1287 = vld [vmem:[#allocation6 + $0x40] sm:$0xff]
    %v1288 = vld [vmem:[#allocation6 + $0x48] sm:$0xff]
    %v1289 = vld [vmem:[#allocation6 + $0x50] sm:$0xff]
    %v1290 = vld [vmem:[#allocation6 + $0x58] sm:$0xff]
    %v1291 = vld [vmem:[#allocation6 + $0x60] sm:$0xff]
    %v1292 = vld [vmem:[#allocation6 + $0x68] sm:$0xff]
    %v1293 = vld [vmem:[#allocation6 + $0x70] sm:$0xff]
    %v1294 = vld [vmem:[#allocation6 + $0x78] sm:$0xff]
    %v1295 = vld [vmem:[#allocation6 + $0x80] sm:$0xff]
    %v1296 = vld [vmem:[#allocation6 + $0x88] sm:$0xff]
    %v1297 = vld [vmem:[#allocation6 + $0x90] sm:$0xff]
    %v1298 = vld [vmem:[#allocation6 + $0x98] sm:$0xff]
    %v1299 = vld [vmem:[#allocation6 + $0xa0] sm:$0xff]
    %v1300 = vld [vmem:[#allocation6 + $0xa8] sm:$0xff]
    %v1301 = vld [vmem:[#allocation6 + $0xb0] sm:$0xff]
    %v1302 = vld [vmem:[#allocation6 + $0xb8] sm:$0xff]
    %v1303 = vld [vmem:[#allocation6 + $0xc0] sm:$0xff]
    %v1304 = vld [vmem:[#allocation6 + $0xc8] sm:$0xff]
    %v1305 = vld [vmem:[#allocation6 + $0xd0] sm:$0xff]
    %v1306 = vld [vmem:[#allocation6 + $0xd8] sm:$0xff]
    %v1307 = vld [vmem:[#allocation6 + $0xe0] sm:$0xff]
    %v1308 = vld [vmem:[#allocation6 + $0xe8] sm:$0xff]
    %v1309 = vld [vmem:[#allocation6 + $0xf0] sm:$0xff]
    %v1310 = vld [vmem:[#allocation6 + $0xf8] sm:$0xff]
    %v1343 = vunpack.c.l.b16 %v1279
    %v1344 = vunpack.c.h.b16 %v1279
    %v1345 = vunpack.c.l.b16 %v1280
    %v1346 = vunpack.c.h.b16 %v1280
    %v1347 = vunpack.c.l.b16 %v1281
    %v1348 = vunpack.c.h.b16 %v1281
    %v1349 = vunpack.c.l.b16 %v1282
    %v1350 = vunpack.c.h.b16 %v1282
    %v1351 = vunpack.c.l.b16 %v1283
    %v1352 = vunpack.c.h.b16 %v1283
    %v1353 = vunpack.c.l.b16 %v1284
    %v1354 = vunpack.c.h.b16 %v1284
    %v1355 = vunpack.c.l.b16 %v1285
    %v1356 = vunpack.c.h.b16 %v1285
    %v1357 = vunpack.c.l.b16 %v1286
    %v1358 = vunpack.c.h.b16 %v1286
    %v1359 = vunpack.c.l.b16 %v1287
    %v1360 = vunpack.c.h.b16 %v1287
    %v1361 = vunpack.c.l.b16 %v1288
    %v1362 = vunpack.c.h.b16 %v1288
    %v1363 = vunpack.c.l.b16 %v1289
    %v1364 = vunpack.c.h.b16 %v1289
    %v1365 = vunpack.c.l.b16 %v1290
    %v1366 = vunpack.c.h.b16 %v1290
    %v1367 = vunpack.c.l.b16 %v1291
    %v1368 = vunpack.c.h.b16 %v1291
    %v1369 = vunpack.c.l.b16 %v1292
    %v1370 = vunpack.c.h.b16 %v1292
    %v1371 = vunpack.c.l.b16 %v1293
    %v1372 = vunpack.c.h.b16 %v1293
    %v1373 = vunpack.c.l.b16 %v1294
    %v1374 = vunpack.c.h.b16 %v1294
    %v1375 = vunpack.c.l.b16 %v1295
    %v1376 = vunpack.c.h.b16 %v1295
    %v1377 = vunpack.c.l.b16 %v1296
    %v1378 = vunpack.c.h.b16 %v1296
    %v1379 = vunpack.c.l.b16 %v1297
    %v1380 = vunpack.c.h.b16 %v1297
    %v1381 = vunpack.c.l.b16 %v1298
    %v1382 = vunpack.c.h.b16 %v1298
    %v1383 = vunpack.c.l.b16 %v1299
    %v1384 = vunpack.c.h.b16 %v1299
    %v1385 = vunpack.c.l.b16 %v1300
    %v1386 = vunpack.c.h.b16 %v1300
    %v1387 = vunpack.c.l.b16 %v1301
    %v1388 = vunpack.c.h.b16 %v1301
    %v1389 = vunpack.c.l.b16 %v1302
    %v1390 = vunpack.c.h.b16 %v1302
    %v1391 = vunpack.c.l.b16 %v1303
    %v1392 = vunpack.c.h.b16 %v1303
    %v1393 = vunpack.c.l.b16 %v1304
    %v1394 = vunpack.c.h.b16 %v1304
    %v1395 = vunpack.c.l.b16 %v1305
    %v1396 = vunpack.c.h.b16 %v1305
    %v1397 = vunpack.c.l.b16 %v1306
    %v1398 = vunpack.c.h.b16 %v1306
    %v1399 = vunpack.c.l.b16 %v1307
    %v1400 = vunpack.c.h.b16 %v1307
    %v1401 = vunpack.c.l.b16 %v1308
    %v1402 = vunpack.c.h.b16 %v1308
    %v1403 = vunpack.c.l.b16 %v1309
    %v1404 = vunpack.c.h.b16 %v1309
    %v1405 = vunpack.c.l.b16 %v1310
    %v1406 = vunpack.c.h.b16 %v1310
    %v1407 = vpack.c.b16 %v1347, %v1343
    %v1408 = vpack.c.b16 %v1348, %v1344
    %v1409 = vpack.c.b16 %v1349, %v1345
    %v1410 = vpack.c.b16 %v1350, %v1346
    %v1411 = vpack.c.b16 %v1355, %v1351
    %v1412 = vpack.c.b16 %v1356, %v1352
    %v1413 = vpack.c.b16 %v1357, %v1353
    %v1414 = vpack.c.b16 %v1358, %v1354
    %v1415 = vpack.c.b16 %v1363, %v1359
    %v1416 = vpack.c.b16 %v1364, %v1360
    %v1417 = vpack.c.b16 %v1365, %v1361
    %v1418 = vpack.c.b16 %v1366, %v1362
    %v1419 = vpack.c.b16 %v1371, %v1367
    %v1420 = vpack.c.b16 %v1372, %v1368
    %v1421 = vpack.c.b16 %v1373, %v1369
    %v1422 = vpack.c.b16 %v1374, %v1370
    %v1423 = vpack.c.b16 %v1379, %v1375
    %v1424 = vpack.c.b16 %v1380, %v1376
    %v1425 = vpack.c.b16 %v1381, %v1377
    %v1426 = vpack.c.b16 %v1382, %v1378
    %v1427 = vpack.c.b16 %v1387, %v1383
    %v1428 = vpack.c.b16 %v1388, %v1384
    %v1429 = vpack.c.b16 %v1389, %v1385
    %v1430 = vpack.c.b16 %v1390, %v1386
    %v1431 = vpack.c.b16 %v1395, %v1391
    %v1432 = vpack.c.b16 %v1396, %v1392
    %v1433 = vpack.c.b16 %v1397, %v1393
    %v1434 = vpack.c.b16 %v1398, %v1394
    %v1435 = vpack.c.b16 %v1403, %v1399
    %v1436 = vpack.c.b16 %v1404, %v1400
    %v1437 = vpack.c.b16 %v1405, %v1401
    %v1438 = vpack.c.b16 %v1406, %v1402
    %1471 = vmatprep.subr.bf16.mxu0 %v1408
    %1472 = vmatpush1.bf16.msra.mxu0 %v1407
    %1473 = vmatprep.subr.bf16.mxu0 %v1412
    %1474 = vmatpush1.bf16.msra.mxu0 %v1411
    %1475 = vmatprep.subr.bf16.mxu0 %v1416
    %1476 = vmatpush1.bf16.msra.mxu0 %v1415
    %1477 = vmatprep.subr.bf16.mxu0 %v1420
    %1478 = vmatpush1.bf16.msra.mxu0 %v1419
    %1479 = vmatprep.subr.bf16.mxu0 %v1424
    %1480 = vmatpush1.bf16.msra.mxu0 %v1423
    %1481 = vmatprep.subr.bf16.mxu0 %v1428
    %1482 = vmatpush1.bf16.msra.mxu0 %v1427
    %1483 = vmatprep.subr.bf16.mxu0 %v1432
    %1484 = vmatpush1.bf16.msra.mxu0 %v1431
    %1485 = vmatprep.subr.bf16.mxu0 %v1436
    %1486 = vmatpush1.bf16.msra.mxu0 %v1435
    %1487 = vmatprep.subr.bf16.mxu0 0
    %1488 = vmatpush1.bf16.msra.mxu0 0
    %1489 = vmatprep.subr.bf16.mxu0 0
    %1490 = vmatpush1.bf16.msra.mxu0 0
    %1491 = vmatprep.subr.bf16.mxu0 0
    %1492 = vmatpush1.bf16.msra.mxu0 0
    %1493 = vmatprep.subr.bf16.mxu0 0
    %1494 = vmatpush1.bf16.msra.mxu0 0
    %1495 = vmatprep.subr.bf16.mxu0 0
    %1496 = vmatpush1.bf16.msra.mxu0 0
    %1497 = vmatprep.subr.bf16.mxu0 0
    %1498 = vmatpush1.bf16.msra.mxu0 0
    %1499 = vmatprep.subr.bf16.mxu0 0
    %1500 = vmatpush1.bf16.msra.mxu0 0
    %1501 = vmatprep.subr.bf16.mxu0 0
    %1502 = vmatpush1.bf16.msra.mxu0 0
    %1503 = vmatprep.mubr.bf16.mxu0 0
    %1504 = vmatmul.mubr.bf16.gmra.mrb[0].mxu0 %v1278
    %v1505 = vpop.f32.mrb[0].mxu0
    %v1506 = vadd.f32 0.0, %v1505
    %v1507 = vpop.f32.mrb[0].mxu0
    %v1508 = vadd.f32 0.0, %v1507
    %v1509 = vpop.f32.mrb[0].mxu0
    %v1510 = vpop.f32.mrb[0].mxu0
    %1511 = vdwg.mxu0
    %1512 = vmatprep.subr.bf16.mxu0 %v1410
    %1513 = vmatpush1.bf16.msra.mxu0 %v1409
    %1514 = vmatprep.subr.bf16.mxu0 %v1414
    %1515 = vmatpush1.bf16.msra.mxu0 %v1413
    %1516 = vmatprep.subr.bf16.mxu0 %v1418
    %1517 = vmatpush1.bf16.msra.mxu0 %v1417
    %1518 = vmatprep.subr.bf16.mxu0 %v1422
    %1519 = vmatpush1.bf16.msra.mxu0 %v1421
    %1520 = vmatprep.subr.bf16.mxu0 %v1426
    %1521 = vmatpush1.bf16.msra.mxu0 %v1425
    %1522 = vmatprep.subr.bf16.mxu0 %v1430
    %1523 = vmatpush1.bf16.msra.mxu0 %v1429
    %1524 = vmatprep.subr.bf16.mxu0 %v1434
    %1525 = vmatpush1.bf16.msra.mxu0 %v1433
    %1526 = vmatprep.subr.bf16.mxu0 %v1438
    %1527 = vmatpush1.bf16.msra.mxu0 %v1437
    %1528 = vmatprep.subr.bf16.mxu0 0
    %1529 = vmatpush1.bf16.msra.mxu0 0
    %1530 = vmatprep.subr.bf16.mxu0 0
    %1531 = vmatpush1.bf16.msra.mxu0 0
    %1532 = vmatprep.subr.bf16.mxu0 0
    %1533 = vmatpush1.bf16.msra.mxu0 0
    %1534 = vmatprep.subr.bf16.mxu0 0
    %1535 = vmatpush1.bf16.msra.mxu0 0
    %1536 = vmatprep.subr.bf16.mxu0 0
    %1537 = vmatpush1.bf16.msra.mxu0 0
    %1538 = vmatprep.subr.bf16.mxu0 0
    %1539 = vmatpush1.bf16.msra.mxu0 0
    %1540 = vmatprep.subr.bf16.mxu0 0
    %1541 = vmatpush1.bf16.msra.mxu0 0
    %1542 = vmatprep.subr.bf16.mxu0 0
    %1543 = vmatpush1.bf16.msra.mxu0 0
    %1544 = vmatprep.mubr.bf16.mxu0 0
    %1545 = vmatmul.mubr.bf16.gmra.mrb[0].mxu0 %v1278
    %v1546 = vpop.f32.mrb[0].mxu0
    %v1547 = vadd.f32 0.0, %v1546
    %v1548 = vpop.f32.mrb[0].mxu0
    %v1549 = vadd.f32 0.0, %v1548
    %v1550 = vpop.f32.mrb[0].mxu0
    %v1551 = vpop.f32.mrb[0].mxu0
    %1552 = vdwg.mxu0
    %v1553 = vadd.f32 %v1273, %v1506
    %v1554 = vadd.f32 %v1274, %v1508
    %v1555 = vadd.f32 %v1275, %v1547
    %v1556 = vadd.f32 %v1276, %v1549
    %v1557 = vxor.u32 %v1553, 2147483648
    %v1558 = vmul.f32 %v1557, 1.442695
    %v1559 = vpow.pop %v1558
    %v1560 = vadd.f32 %v1559, 1.0
    %v1561 = vrcp.pop %v1560
    %v1562 = vmul.f32 1.0, %v1561
    %v1563 = vxor.u32 %v1554, 2147483648
    %v1564 = vmul.f32 %v1563, 1.442695
    %v1565 = vpow.pop %v1564
    %v1566 = vadd.f32 %v1565, 1.0
    %v1567 = vrcp.pop %v1566
    %v1568 = vmul.f32 1.0, %v1567
    %v1569 = vtanh.pop %v1555
    %v1570 = vxor.u32 %v1556, 2147483648
    %v1571 = vmul.f32 %v1570, 1.442695
    %v1572 = vpow.pop %v1571
    %v1573 = vadd.f32 %v1572, 1.0
    %v1574 = vrcp.pop %v1573
    %v1575 = vmul.f32 1.0, %v1574
    %v1576 = vld [vmem:[#allocation3] sm:$0xff]
    %v1577 = vmul.f32 %v1568, %v1576
    %v1578 = vmul.f32 %v1562, %v1569
    %v1579 = vadd.f32 %v1577, %v1578
    %v1580 = vtanh.pop %v1579
    %v1581 = vmul.f32 %v1575, %v1580
    %1582 = vst [vmem:[#allocation3] sm:$0xff] %v1579
    %1583 = vst [vmem:[#allocation2] sm:$0xff] %v1581
    %s1584 = scalar_lea.vmem [#allocation4], 24
    %1585 = vst [vmem:[%s1584] sm:$0xff] %v1581
    %s1586 = scalar_lea.vmem [#allocation5], 128
    %v1587 = vld [vmem:[%s1586] sm:$0xff]
    %v1588 = vld [vmem:[%s1586 + $0x8] sm:$0xff]
    %v1589 = vld [vmem:[%s1586 + $0x10] sm:$0xff]
    %v1590 = vld [vmem:[%s1586 + $0x18] sm:$0xff]
    %v1591 = vld [vmem:[#allocation2] sm:$0xff]
    %v1592 = vpack.c.bf16 %v1591, %v1591
    %v1593 = vld [vmem:[#allocation6] sm:$0xff]
    %v1594 = vld [vmem:[#allocation6 + $0x8] sm:$0xff]
    %v1595 = vld [vmem:[#allocation6 + $0x10] sm:$0xff]
    %v1596 = vld [vmem:[#allocation6 + $0x18] sm:$0xff]
    %v1597 = vld [vmem:[#allocation6 + $0x20] sm:$0xff]
    %v1598 = vld [vmem:[#allocation6 + $0x28] sm:$0xff]
    %v1599 = vld [vmem:[#allocation6 + $0x30] sm:$0xff]
    %v1600 = vld [vmem:[#allocation6 + $0x38] sm:$0xff]
    %v1601 = vld [vmem:[#allocation6 + $0x40] sm:$0xff]
    %v1602 = vld [vmem:[#allocation6 + $0x48] sm:$0xff]
    %v1603 = vld [vmem:[#allocation6 + $0x50] sm:$0xff]
    %v1604 = vld [vmem:[#allocation6 + $0x58] sm:$0xff]
    %v1605 = vld [vmem:[#allocation6 + $0x60] sm:$0xff]
    %v1606 = vld [vmem:[#allocation6 + $0x68] sm:$0xff]
    %v1607 = vld [vmem:[#allocation6 + $0x70] sm:$0xff]
    %v1608 = vld [vmem:[#allocation6 + $0x78] sm:$0xff]
    %v1609 = vld [vmem:[#allocation6 + $0x80] sm:$0xff]
    %v1610 = vld [vmem:[#allocation6 + $0x88] sm:$0xff]
    %v1611 = vld [vmem:[#allocation6 + $0x90] sm:$0xff]
    %v1612 = vld [vmem:[#allocation6 + $0x98] sm:$0xff]
    %v1613 = vld [vmem:[#allocation6 + $0xa0] sm:$0xff]
    %v1614 = vld [vmem:[#allocation6 + $0xa8] sm:$0xff]
    %v1615 = vld [vmem:[#allocation6 + $0xb0] sm:$0xff]
    %v1616 = vld [vmem:[#allocation6 + $0xb8] sm:$0xff]
    %v1617 = vld [vmem:[#allocation6 + $0xc0] sm:$0xff]
    %v1618 = vld [vmem:[#allocation6 + $0xc8] sm:$0xff]
    %v1619 = vld [vmem:[#allocation6 + $0xd0] sm:$0xff]
    %v1620 = vld [vmem:[#allocation6 + $0xd8] sm:$0xff]
    %v1621 = vld [vmem:[#allocation6 + $0xe0] sm:$0xff]
    %v1622 = vld [vmem:[#allocation6 + $0xe8] sm:$0xff]
    %v1623 = vld [vmem:[#allocation6 + $0xf0] sm:$0xff]
    %v1624 = vld [vmem:[#allocation6 + $0xf8] sm:$0xff]
    %v1657 = vunpack.c.l.b16 %v1593
    %v1658 = vunpack.c.h.b16 %v1593
    %v1659 = vunpack.c.l.b16 %v1594
    %v1660 = vunpack.c.h.b16 %v1594
    %v1661 = vunpack.c.l.b16 %v1595
    %v1662 = vunpack.c.h.b16 %v1595
    %v1663 = vunpack.c.l.b16 %v1596
    %v1664 = vunpack.c.h.b16 %v1596
    %v1665 = vunpack.c.l.b16 %v1597
    %v1666 = vunpack.c.h.b16 %v1597
    %v1667 = vunpack.c.l.b16 %v1598
    %v1668 = vunpack.c.h.b16 %v1598
    %v1669 = vunpack.c.l.b16 %v1599
    %v1670 = vunpack.c.h.b16 %v1599
    %v1671 = vunpack.c.l.b16 %v1600
    %v1672 = vunpack.c.h.b16 %v1600
    %v1673 = vunpack.c.l.b16 %v1601
    %v1674 = vunpack.c.h.b16 %v1601
    %v1675 = vunpack.c.l.b16 %v1602
    %v1676 = vunpack.c.h.b16 %v1602
    %v1677 = vunpack.c.l.b16 %v1603
    %v1678 = vunpack.c.h.b16 %v1603
    %v1679 = vunpack.c.l.b16 %v1604
    %v1680 = vunpack.c.h.b16 %v1604
    %v1681 = vunpack.c.l.b16 %v1605
    %v1682 = vunpack.c.h.b16 %v1605
    %v1683 = vunpack.c.l.b16 %v1606
    %v1684 = vunpack.c.h.b16 %v1606
    %v1685 = vunpack.c.l.b16 %v1607
    %v1686 = vunpack.c.h.b16 %v1607
    %v1687 = vunpack.c.l.b16 %v1608
    %v1688 = vunpack.c.h.b16 %v1608
    %v1689 = vunpack.c.l.b16 %v1609
    %v1690 = vunpack.c.h.b16 %v1609
    %v1691 = vunpack.c.l.b16 %v1610
    %v1692 = vunpack.c.h.b16 %v1610
    %v1693 = vunpack.c.l.b16 %v1611
    %v1694 = vunpack.c.h.b16 %v1611
    %v1695 = vunpack.c.l.b16 %v1612
    %v1696 = vunpack.c.h.b16 %v1612
    %v1697 = vunpack.c.l.b16 %v1613
    %v1698 = vunpack.c.h.b16 %v1613
    %v1699 = vunpack.c.l.b16 %v1614
    %v1700 = vunpack.c.h.b16 %v1614
    %v1701 = vunpack.c.l.b16 %v1615
    %v1702 = vunpack.c.h.b16 %v1615
    %v1703 = vunpack.c.l.b16 %v1616
    %v1704 = vunpack.c.h.b16 %v1616
    %v1705 = vunpack.c.l.b16 %v1617
    %v1706 = vunpack.c.h.b16 %v1617
    %v1707 = vunpack.c.l.b16 %v1618
    %v1708 = vunpack.c.h.b16 %v1618
    %v1709 = vunpack.c.l.b16 %v1619
    %v1710 = vunpack.c.h.b16 %v1619
    %v1711 = vunpack.c.l.b16 %v1620
    %v1712 = vunpack.c.h.b16 %v1620
    %v1713 = vunpack.c.l.b16 %v1621
    %v1714 = vunpack.c.h.b16 %v1621
    %v1715 = vunpack.c.l.b16 %v1622
    %v1716 = vunpack.c.h.b16 %v1622
    %v1717 = vunpack.c.l.b16 %v1623
    %v1718 = vunpack.c.h.b16 %v1623
    %v1719 = vunpack.c.l.b16 %v1624
    %v1720 = vunpack.c.h.b16 %v1624
    %v1721 = vpack.c.b16 %v1661, %v1657
    %v1722 = vpack.c.b16 %v1662, %v1658
    %v1723 = vpack.c.b16 %v1663, %v1659
    %v1724 = vpack.c.b16 %v1664, %v1660
    %v1725 = vpack.c.b16 %v1669, %v1665
    %v1726 = vpack.c.b16 %v1670, %v1666
    %v1727 = vpack.c.b16 %v1671, %v1667
    %v1728 = vpack.c.b16 %v1672, %v1668
    %v1729 = vpack.c.b16 %v1677, %v1673
    %v1730 = vpack.c.b16 %v1678, %v1674
    %v1731 = vpack.c.b16 %v1679, %v1675
    %v1732 = vpack.c.b16 %v1680, %v1676
    %v1733 = vpack.c.b16 %v1685, %v1681
    %v1734 = vpack.c.b16 %v1686, %v1682
    %v1735 = vpack.c.b16 %v1687, %v1683
    %v1736 = vpack.c.b16 %v1688, %v1684
    %v1737 = vpack.c.b16 %v1693, %v1689
    %v1738 = vpack.c.b16 %v1694, %v1690
    %v1739 = vpack.c.b16 %v1695, %v1691
    %v1740 = vpack.c.b16 %v1696, %v1692
    %v1741 = vpack.c.b16 %v1701, %v1697
    %v1742 = vpack.c.b16 %v1702, %v1698
    %v1743 = vpack.c.b16 %v1703, %v1699
    %v1744 = vpack.c.b16 %v1704, %v1700
    %v1745 = vpack.c.b16 %v1709, %v1705
    %v1746 = vpack.c.b16 %v1710, %v1706
    %v1747 = vpack.c.b16 %v1711, %v1707
    %v1748 = vpack.c.b16 %v1712, %v1708
    %v1749 = vpack.c.b16 %v1717, %v1713
    %v1750 = vpack.c.b16 %v1718, %v1714
    %v1751 = vpack.c.b16 %v1719, %v1715
    %v1752 = vpack.c.b16 %v1720, %v1716
    %1785 = vmatprep.subr.bf16.mxu0 %v1722
    %1786 = vmatpush1.bf16.msra.mxu0 %v1721
    %1787 = vmatprep.subr.bf16.mxu0 %v1726
    %1788 = vmatpush1.bf16.msra.mxu0 %v1725
    %1789 = vmatprep.subr.bf16.mxu0 %v1730
    %1790 = vmatpush1.bf16.msra.mxu0 %v1729
    %1791 = vmatprep.subr.bf16.mxu0 %v1734
    %1792 = vmatpush1.bf16.msra.mxu0 %v1733
    %1793 = vmatprep.subr.bf16.mxu0 %v1738
    %1794 = vmatpush1.bf16.msra.mxu0 %v1737
    %1795 = vmatprep.subr.bf16.mxu0 %v1742
    %1796 = vmatpush1.bf16.msra.mxu0 %v1741
    %1797 = vmatprep.subr.bf16.mxu0 %v1746
    %1798 = vmatpush1.bf16.msra.mxu0 %v1745
    %1799 = vmatprep.subr.bf16.mxu0 %v1750
    %1800 = vmatpush1.bf16.msra.mxu0 %v1749
    %1801 = vmatprep.subr.bf16.mxu0 0
    %1802 = vmatpush1.bf16.msra.mxu0 0
    %1803 = vmatprep.subr.bf16.mxu0 0
    %1804 = vmatpush1.bf16.msra.mxu0 0
    %1805 = vmatprep.subr.bf16.mxu0 0
    %1806 = vmatpush1.bf16.msra.mxu0 0
    %1807 = vmatprep.subr.bf16.mxu0 0
    %1808 = vmatpush1.bf16.msra.mxu0 0
    %1809 = vmatprep.subr.bf16.mxu0 0
    %1810 = vmatpush1.bf16.msra.mxu0 0
    %1811 = vmatprep.subr.bf16.mxu0 0
    %1812 = vmatpush1.bf16.msra.mxu0 0
    %1813 = vmatprep.subr.bf16.mxu0 0
    %1814 = vmatpush1.bf16.msra.mxu0 0
    %1815 = vmatprep.subr.bf16.mxu0 0
    %1816 = vmatpush1.bf16.msra.mxu0 0
    %1817 = vmatprep.mubr.bf16.mxu0 0
    %1818 = vmatmul.mubr.bf16.gmra.mrb[0].mxu0 %v1592
    %v1819 = vpop.f32.mrb[0].mxu0
    %v1820 = vadd.f32 0.0, %v1819
    %v1821 = vpop.f32.mrb[0].mxu0
    %v1822 = vadd.f32 0.0, %v1821
    %v1823 = vpop.f32.mrb[0].mxu0
    %v1824 = vpop.f32.mrb[0].mxu0
    %1825 = vdwg.mxu0
    %1826 = vmatprep.subr.bf16.mxu0 %v1724
    %1827 = vmatpush1.bf16.msra.mxu0 %v1723
    %1828 = vmatprep.subr.bf16.mxu0 %v1728
    %1829 = vmatpush1.bf16.msra.mxu0 %v1727
    %1830 = vmatprep.subr.bf16.mxu0 %v1732
    %1831 = vmatpush1.bf16.msra.mxu0 %v1731
    %1832 = vmatprep.subr.bf16.mxu0 %v1736
    %1833 = vmatpush1.bf16.msra.mxu0 %v1735
    %1834 = vmatprep.subr.bf16.mxu0 %v1740
    %1835 = vmatpush1.bf16.msra.mxu0 %v1739
    %1836 = vmatprep.subr.bf16.mxu0 %v1744
    %1837 = vmatpush1.bf16.msra.mxu0 %v1743
    %1838 = vmatprep.subr.bf16.mxu0 %v1748
    %1839 = vmatpush1.bf16.msra.mxu0 %v1747
    %1840 = vmatprep.subr.bf16.mxu0 %v1752
    %1841 = vmatpush1.bf16.msra.mxu0 %v1751
    %1842 = vmatprep.subr.bf16.mxu0 0
    %1843 = vmatpush1.bf16.msra.mxu0 0
    %1844 = vmatprep.subr.bf16.mxu0 0
    %1845 = vmatpush1.bf16.msra.mxu0 0
    %1846 = vmatprep.subr.bf16.mxu0 0
    %1847 = vmatpush1.bf16.msra.mxu0 0
    %1848 = vmatprep.subr.bf16.mxu0 0
    %1849 = vmatpush1.bf16.msra.mxu0 0
    %1850 = vmatprep.subr.bf16.mxu0 0
    %1851 = vmatpush1.bf16.msra.mxu0 0
    %1852 = vmatprep.subr.bf16.mxu0 0
    %1853 = vmatpush1.bf16.msra.mxu0 0
    %1854 = vmatprep.subr.bf16.mxu0 0
    %1855 = vmatpush1.bf16.msra.mxu0 0
    %1856 = vmatprep.subr.bf16.mxu0 0
    %1857 = vmatpush1.bf16.msra.mxu0 0
    %1858 = vmatprep.mubr.bf16.mxu0 0
    %1859 = vmatmul.mubr.bf16.gmra.mrb[0].mxu0 %v1592
    %v1860 = vpop.f32.mrb[0].mxu0
    %v1861 = vadd.f32 0.0, %v1860
    %v1862 = vpop.f32.mrb[0].mxu0
    %v1863 = vadd.f32 0.0, %v1862
    %v1864 = vpop.f32.mrb[0].mxu0
    %v1865 = vpop.f32.mrb[0].mxu0
    %1866 = vdwg.mxu0
    %v1867 = vadd.f32 %v1587, %v1820
    %v1868 = vadd.f32 %v1588, %v1822
    %v1869 = vadd.f32 %v1589, %v1861
    %v1870 = vadd.f32 %v1590, %v1863
    %v1871 = vxor.u32 %v1867, 2147483648
    %v1872 = vmul.f32 %v1871, 1.442695
    %v1873 = vpow.pop %v1872
    %v1874 = vadd.f32 %v1873, 1.0
    %v1875 = vrcp.pop %v1874
    %v1876 = vmul.f32 1.0, %v1875
    %v1877 = vxor.u32 %v1868, 2147483648
    %v1878 = vmul.f32 %v1877, 1.442695
    %v1879 = vpow.pop %v1878
    %v1880 = vadd.f32 %v1879, 1.0
    %v1881 = vrcp.pop %v1880
    %v1882 = vmul.f32 1.0, %v1881
    %v1883 = vtanh.pop %v1869
    %v1884 = vxor.u32 %v1870, 2147483648
    %v1885 = vmul.f32 %v1884, 1.442695
    %v1886 = vpow.pop %v1885
    %v1887 = vadd.f32 %v1886, 1.0
    %v1888 = vrcp.pop %v1887
    %v1889 = vmul.f32 1.0, %v1888
    %v1890 = vld [vmem:[#allocation3] sm:$0xff]
    %v1891 = vmul.f32 %v1882, %v1890
    %v1892 = vmul.f32 %v1876, %v1883
    %v1893 = vadd.f32 %v1891, %v1892
    %v1894 = vtanh.pop %v1893
    %v1895 = vmul.f32 %v1889, %v1894
    %1896 = vst [vmem:[#allocation3] sm:$0xff] %v1893
    %1897 = vst [vmem:[#allocation2] sm:$0xff] %v1895
    %s1898 = scalar_lea.vmem [#allocation4], 32
    %1899 = vst [vmem:[%s1898] sm:$0xff] %v1895
    %s1900 = scalar_lea.vmem [#allocation5], 160
    %v1901 = vld [vmem:[%s1900] sm:$0xff]
    %v1902 = vld [vmem:[%s1900 + $0x8] sm:$0xff]
    %v1903 = vld [vmem:[%s1900 + $0x10] sm:$0xff]
    %v1904 = vld [vmem:[%s1900 + $0x18] sm:$0xff]
    %v1905 = vld [vmem:[#allocation2] sm:$0xff]
    %v1906 = vpack.c.bf16 %v1905, %v1905
    %v1907 = vld [vmem:[#allocation6] sm:$0xff]
    %v1908 = vld [vmem:[#allocation6 + $0x8] sm:$0xff]
    %v1909 = vld [vmem:[#allocation6 + $0x10] sm:$0xff]
    %v1910 = vld [vmem:[#allocation6 + $0x18] sm:$0xff]
    %v1911 = vld [vmem:[#allocation6 + $0x20] sm:$0xff]
    %v1912 = vld [vmem:[#allocation6 + $0x28] sm:$0xff]
    %v1913 = vld [vmem:[#allocation6 + $0x30] sm:$0xff]
    %v1914 = vld [vmem:[#allocation6 + $0x38] sm:$0xff]
    %v1915 = vld [vmem:[#allocation6 + $0x40] sm:$0xff]
    %v1916 = vld [vmem:[#allocation6 + $0x48] sm:$0xff]
    %v1917 = vld [vmem:[#allocation6 + $0x50] sm:$0xff]
    %v1918 = vld [vmem:[#allocation6 + $0x58] sm:$0xff]
    %v1919 = vld [vmem:[#allocation6 + $0x60] sm:$0xff]
    %v1920 = vld [vmem:[#allocation6 + $0x68] sm:$0xff]
    %v1921 = vld [vmem:[#allocation6 + $0x70] sm:$0xff]
    %v1922 = vld [vmem:[#allocation6 + $0x78] sm:$0xff]
    %v1923 = vld [vmem:[#allocation6 + $0x80] sm:$0xff]
    %v1924 = vld [vmem:[#allocation6 + $0x88] sm:$0xff]
    %v1925 = vld [vmem:[#allocation6 + $0x90] sm:$0xff]
    %v1926 = vld [vmem:[#allocation6 + $0x98] sm:$0xff]
    %v1927 = vld [vmem:[#allocation6 + $0xa0] sm:$0xff]
    %v1928 = vld [vmem:[#allocation6 + $0xa8] sm:$0xff]
    %v1929 = vld [vmem:[#allocation6 + $0xb0] sm:$0xff]
    %v1930 = vld [vmem:[#allocation6 + $0xb8] sm:$0xff]
    %v1931 = vld [vmem:[#allocation6 + $0xc0] sm:$0xff]
    %v1932 = vld [vmem:[#allocation6 + $0xc8] sm:$0xff]
    %v1933 = vld [vmem:[#allocation6 + $0xd0] sm:$0xff]
    %v1934 = vld [vmem:[#allocation6 + $0xd8] sm:$0xff]
    %v1935 = vld [vmem:[#allocation6 + $0xe0] sm:$0xff]
    %v1936 = vld [vmem:[#allocation6 + $0xe8] sm:$0xff]
    %v1937 = vld [vmem:[#allocation6 + $0xf0] sm:$0xff]
    %v1938 = vld [vmem:[#allocation6 + $0xf8] sm:$0xff]
    %v1971 = vunpack.c.l.b16 %v1907
    %v1972 = vunpack.c.h.b16 %v1907
    %v1973 = vunpack.c.l.b16 %v1908
    %v1974 = vunpack.c.h.b16 %v1908
    %v1975 = vunpack.c.l.b16 %v1909
    %v1976 = vunpack.c.h.b16 %v1909
    %v1977 = vunpack.c.l.b16 %v1910
    %v1978 = vunpack.c.h.b16 %v1910
    %v1979 = vunpack.c.l.b16 %v1911
    %v1980 = vunpack.c.h.b16 %v1911
    %v1981 = vunpack.c.l.b16 %v1912
    %v1982 = vunpack.c.h.b16 %v1912
    %v1983 = vunpack.c.l.b16 %v1913
    %v1984 = vunpack.c.h.b16 %v1913
    %v1985 = vunpack.c.l.b16 %v1914
    %v1986 = vunpack.c.h.b16 %v1914
    %v1987 = vunpack.c.l.b16 %v1915
    %v1988 = vunpack.c.h.b16 %v1915
    %v1989 = vunpack.c.l.b16 %v1916
    %v1990 = vunpack.c.h.b16 %v1916
    %v1991 = vunpack.c.l.b16 %v1917
    %v1992 = vunpack.c.h.b16 %v1917
    %v1993 = vunpack.c.l.b16 %v1918
    %v1994 = vunpack.c.h.b16 %v1918
    %v1995 = vunpack.c.l.b16 %v1919
    %v1996 = vunpack.c.h.b16 %v1919
    %v1997 = vunpack.c.l.b16 %v1920
    %v1998 = vunpack.c.h.b16 %v1920
    %v1999 = vunpack.c.l.b16 %v1921
    %v2000 = vunpack.c.h.b16 %v1921
    %v2001 = vunpack.c.l.b16 %v1922
    %v2002 = vunpack.c.h.b16 %v1922
    %v2003 = vunpack.c.l.b16 %v1923
    %v2004 = vunpack.c.h.b16 %v1923
    %v2005 = vunpack.c.l.b16 %v1924
    %v2006 = vunpack.c.h.b16 %v1924
    %v2007 = vunpack.c.l.b16 %v1925
    %v2008 = vunpack.c.h.b16 %v1925
    %v2009 = vunpack.c.l.b16 %v1926
    %v2010 = vunpack.c.h.b16 %v1926
    %v2011 = vunpack.c.l.b16 %v1927
    %v2012 = vunpack.c.h.b16 %v1927
    %v2013 = vunpack.c.l.b16 %v1928
    %v2014 = vunpack.c.h.b16 %v1928
    %v2015 = vunpack.c.l.b16 %v1929
    %v2016 = vunpack.c.h.b16 %v1929
    %v2017 = vunpack.c.l.b16 %v1930
    %v2018 = vunpack.c.h.b16 %v1930
    %v2019 = vunpack.c.l.b16 %v1931
    %v2020 = vunpack.c.h.b16 %v1931
    %v2021 = vunpack.c.l.b16 %v1932
    %v2022 = vunpack.c.h.b16 %v1932
    %v2023 = vunpack.c.l.b16 %v1933
    %v2024 = vunpack.c.h.b16 %v1933
    %v2025 = vunpack.c.l.b16 %v1934
    %v2026 = vunpack.c.h.b16 %v1934
    %v2027 = vunpack.c.l.b16 %v1935
    %v2028 = vunpack.c.h.b16 %v1935
    %v2029 = vunpack.c.l.b16 %v1936
    %v2030 = vunpack.c.h.b16 %v1936
    %v2031 = vunpack.c.l.b16 %v1937
    %v2032 = vunpack.c.h.b16 %v1937
    %v2033 = vunpack.c.l.b16 %v1938
    %v2034 = vunpack.c.h.b16 %v1938
    %v2035 = vpack.c.b16 %v1975, %v1971
    %v2036 = vpack.c.b16 %v1976, %v1972
    %v2037 = vpack.c.b16 %v1977, %v1973
    %v2038 = vpack.c.b16 %v1978, %v1974
    %v2039 = vpack.c.b16 %v1983, %v1979
    %v2040 = vpack.c.b16 %v1984, %v1980
    %v2041 = vpack.c.b16 %v1985, %v1981
    %v2042 = vpack.c.b16 %v1986, %v1982
    %v2043 = vpack.c.b16 %v1991, %v1987
    %v2044 = vpack.c.b16 %v1992, %v1988
    %v2045 = vpack.c.b16 %v1993, %v1989
    %v2046 = vpack.c.b16 %v1994, %v1990
    %v2047 = vpack.c.b16 %v1999, %v1995
    %v2048 = vpack.c.b16 %v2000, %v1996
    %v2049 = vpack.c.b16 %v2001, %v1997
    %v2050 = vpack.c.b16 %v2002, %v1998
    %v2051 = vpack.c.b16 %v2007, %v2003
    %v2052 = vpack.c.b16 %v2008, %v2004
    %v2053 = vpack.c.b16 %v2009, %v2005
    %v2054 = vpack.c.b16 %v2010, %v2006
    %v2055 = vpack.c.b16 %v2015, %v2011
    %v2056 = vpack.c.b16 %v2016, %v2012
    %v2057 = vpack.c.b16 %v2017, %v2013
    %v2058 = vpack.c.b16 %v2018, %v2014
    %v2059 = vpack.c.b16 %v2023, %v2019
    %v2060 = vpack.c.b16 %v2024, %v2020
    %v2061 = vpack.c.b16 %v2025, %v2021
    %v2062 = vpack.c.b16 %v2026, %v2022
    %v2063 = vpack.c.b16 %v2031, %v2027
    %v2064 = vpack.c.b16 %v2032, %v2028
    %v2065 = vpack.c.b16 %v2033, %v2029
    %v2066 = vpack.c.b16 %v2034, %v2030
    %2099 = vmatprep.subr.bf16.mxu0 %v2036
    %2100 = vmatpush1.bf16.msra.mxu0 %v2035
    %2101 = vmatprep.subr.bf16.mxu0 %v2040
    %2102 = vmatpush1.bf16.msra.mxu0 %v2039
    %2103 = vmatprep.subr.bf16.mxu0 %v2044
    %2104 = vmatpush1.bf16.msra.mxu0 %v2043
    %2105 = vmatprep.subr.bf16.mxu0 %v2048
    %2106 = vmatpush1.bf16.msra.mxu0 %v2047
    %2107 = vmatprep.subr.bf16.mxu0 %v2052
    %2108 = vmatpush1.bf16.msra.mxu0 %v2051
    %2109 = vmatprep.subr.bf16.mxu0 %v2056
    %2110 = vmatpush1.bf16.msra.mxu0 %v2055
    %2111 = vmatprep.subr.bf16.mxu0 %v2060
    %2112 = vmatpush1.bf16.msra.mxu0 %v2059
    %2113 = vmatprep.subr.bf16.mxu0 %v2064
    %2114 = vmatpush1.bf16.msra.mxu0 %v2063
    %2115 = vmatprep.subr.bf16.mxu0 0
    %2116 = vmatpush1.bf16.msra.mxu0 0
    %2117 = vmatprep.subr.bf16.mxu0 0
    %2118 = vmatpush1.bf16.msra.mxu0 0
    %2119 = vmatprep.subr.bf16.mxu0 0
    %2120 = vmatpush1.bf16.msra.mxu0 0
    %2121 = vmatprep.subr.bf16.mxu0 0
    %2122 = vmatpush1.bf16.msra.mxu0 0
    %2123 = vmatprep.subr.bf16.mxu0 0
    %2124 = vmatpush1.bf16.msra.mxu0 0
    %2125 = vmatprep.subr.bf16.mxu0 0
    %2126 = vmatpush1.bf16.msra.mxu0 0
    %2127 = vmatprep.subr.bf16.mxu0 0
    %2128 = vmatpush1.bf16.msra.mxu0 0
    %2129 = vmatprep.subr.bf16.mxu0 0
    %2130 = vmatpush1.bf16.msra.mxu0 0
    %2131 = vmatprep.mubr.bf16.mxu0 0
    %2132 = vmatmul.mubr.bf16.gmra.mrb[0].mxu0 %v1906
    %v2133 = vpop.f32.mrb[0].mxu0
    %v2134 = vadd.f32 0.0, %v2133
    %v2135 = vpop.f32.mrb[0].mxu0
    %v2136 = vadd.f32 0.0, %v2135
    %v2137 = vpop.f32.mrb[0].mxu0
    %v2138 = vpop.f32.mrb[0].mxu0
    %2139 = vdwg.mxu0
    %2140 = vmatprep.subr.bf16.mxu0 %v2038
    %2141 = vmatpush1.bf16.msra.mxu0 %v2037
    %2142 = vmatprep.subr.bf16.mxu0 %v2042
    %2143 = vmatpush1.bf16.msra.mxu0 %v2041
    %2144 = vmatprep.subr.bf16.mxu0 %v2046
    %2145 = vmatpush1.bf16.msra.mxu0 %v2045
    %2146 = vmatprep.subr.bf16.mxu0 %v2050
    %2147 = vmatpush1.bf16.msra.mxu0 %v2049
    %2148 = vmatprep.subr.bf16.mxu0 %v2054
    %2149 = vmatpush1.bf16.msra.mxu0 %v2053
    %2150 = vmatprep.subr.bf16.mxu0 %v2058
    %2151 = vmatpush1.bf16.msra.mxu0 %v2057
    %2152 = vmatprep.subr.bf16.mxu0 %v2062
    %2153 = vmatpush1.bf16.msra.mxu0 %v2061
    %2154 = vmatprep.subr.bf16.mxu0 %v2066
    %2155 = vmatpush1.bf16.msra.mxu0 %v2065
    %2156 = vmatprep.subr.bf16.mxu0 0
    %2157 = vmatpush1.bf16.msra.mxu0 0
    %2158 = vmatprep.subr.bf16.mxu0 0
    %2159 = vmatpush1.bf16.msra.mxu0 0
    %2160 = vmatprep.subr.bf16.mxu0 0
    %2161 = vmatpush1.bf16.msra.mxu0 0
    %2162 = vmatprep.subr.bf16.mxu0 0
    %2163 = vmatpush1.bf16.msra.mxu0 0
    %2164 = vmatprep.subr.bf16.mxu0 0
    %2165 = vmatpush1.bf16.msra.mxu0 0
    %2166 = vmatprep.subr.bf16.mxu0 0
    %2167 = vmatpush1.bf16.msra.mxu0 0
    %2168 = vmatprep.subr.bf16.mxu0 0
    %2169 = vmatpush1.bf16.msra.mxu0 0
    %2170 = vmatprep.subr.bf16.mxu0 0
    %2171 = vmatpush1.bf16.msra.mxu0 0
    %2172 = vmatprep.mubr.bf16.mxu0 0
    %2173 = vmatmul.mubr.bf16.gmra.mrb[0].mxu0 %v1906
    %v2174 = vpop.f32.mrb[0].mxu0
    %v2175 = vadd.f32 0.0, %v2174
    %v2176 = vpop.f32.mrb[0].mxu0
    %v2177 = vadd.f32 0.0, %v2176
    %v2178 = vpop.f32.mrb[0].mxu0
    %v2179 = vpop.f32.mrb[0].mxu0
    %2180 = vdwg.mxu0
    %v2181 = vadd.f32 %v1901, %v2134
    %v2182 = vadd.f32 %v1902, %v2136
    %v2183 = vadd.f32 %v1903, %v2175
    %v2184 = vadd.f32 %v1904, %v2177
    %v2185 = vxor.u32 %v2181, 2147483648
    %v2186 = vmul.f32 %v2185, 1.442695
    %v2187 = vpow.pop %v2186
    %v2188 = vadd.f32 %v2187, 1.0
    %v2189 = vrcp.pop %v2188
    %v2190 = vmul.f32 1.0, %v2189
    %v2191 = vxor.u32 %v2182, 2147483648
    %v2192 = vmul.f32 %v2191, 1.442695
    %v2193 = vpow.pop %v2192
    %v2194 = vadd.f32 %v2193, 1.0
    %v2195 = vrcp.pop %v2194
    %v2196 = vmul.f32 1.0, %v2195
    %v2197 = vtanh.pop %v2183
    %v2198 = vxor.u32 %v2184, 2147483648
    %v2199 = vmul.f32 %v2198, 1.442695
    %v2200 = vpow.pop %v2199
    %v2201 = vadd.f32 %v2200, 1.0
    %v2202 = vrcp.pop %v2201
    %v2203 = vmul.f32 1.0, %v2202
    %v2204 = vld [vmem:[#allocation3] sm:$0xff]
    %v2205 = vmul.f32 %v2196, %v2204
    %v2206 = vmul.f32 %v2190, %v2197
    %v2207 = vadd.f32 %v2205, %v2206
    %v2208 = vtanh.pop %v2207
    %v2209 = vmul.f32 %v2203, %v2208
    %2210 = vst [vmem:[#allocation3] sm:$0xff] %v2207
    %2211 = vst [vmem:[#allocation2] sm:$0xff] %v2209
    %s2212 = scalar_lea.vmem [#allocation4], 40
    %2213 = vst [vmem:[%s2212] sm:$0xff] %v2209
    %s2214 = scalar_lea.vmem [#allocation5], 192
    %v2215 = vld [vmem:[%s2214] sm:$0xff]
    %v2216 = vld [vmem:[%s2214 + $0x8] sm:$0xff]
    %v2217 = vld [vmem:[%s2214 + $0x10] sm:$0xff]
    %v2218 = vld [vmem:[%s2214 + $0x18] sm:$0xff]
    %v2219 = vld [vmem:[#allocation2] sm:$0xff]
    %v2220 = vpack.c.bf16 %v2219, %v2219
    %v2221 = vld [vmem:[#allocation6] sm:$0xff]
    %v2222 = vld [vmem:[#allocation6 + $0x8] sm:$0xff]
    %v2223 = vld [vmem:[#allocation6 + $0x10] sm:$0xff]
    %v2224 = vld [vmem:[#allocation6 + $0x18] sm:$0xff]
    %v2225 = vld [vmem:[#allocation6 + $0x20] sm:$0xff]
    %v2226 = vld [vmem:[#allocation6 + $0x28] sm:$0xff]
    %v2227 = vld [vmem:[#allocation6 + $0x30] sm:$0xff]
    %v2228 = vld [vmem:[#allocation6 + $0x38] sm:$0xff]
    %v2229 = vld [vmem:[#allocation6 + $0x40] sm:$0xff]
    %v2230 = vld [vmem:[#allocation6 + $0x48] sm:$0xff]
    %v2231 = vld [vmem:[#allocation6 + $0x50] sm:$0xff]
    %v2232 = vld [vmem:[#allocation6 + $0x58] sm:$0xff]
    %v2233 = vld [vmem:[#allocation6 + $0x60] sm:$0xff]
    %v2234 = vld [vmem:[#allocation6 + $0x68] sm:$0xff]
    %v2235 = vld [vmem:[#allocation6 + $0x70] sm:$0xff]
    %v2236 = vld [vmem:[#allocation6 + $0x78] sm:$0xff]
    %v2237 = vld [vmem:[#allocation6 + $0x80] sm:$0xff]
    %v2238 = vld [vmem:[#allocation6 + $0x88] sm:$0xff]
    %v2239 = vld [vmem:[#allocation6 + $0x90] sm:$0xff]
    %v2240 = vld [vmem:[#allocation6 + $0x98] sm:$0xff]
    %v2241 = vld [vmem:[#allocation6 + $0xa0] sm:$0xff]
    %v2242 = vld [vmem:[#allocation6 + $0xa8] sm:$0xff]
    %v2243 = vld [vmem:[#allocation6 + $0xb0] sm:$0xff]
    %v2244 = vld [vmem:[#allocation6 + $0xb8] sm:$0xff]
    %v2245 = vld [vmem:[#allocation6 + $0xc0] sm:$0xff]
    %v2246 = vld [vmem:[#allocation6 + $0xc8] sm:$0xff]
    %v2247 = vld [vmem:[#allocation6 + $0xd0] sm:$0xff]
    %v2248 = vld [vmem:[#allocation6 + $0xd8] sm:$0xff]
    %v2249 = vld [vmem:[#allocation6 + $0xe0] sm:$0xff]
    %v2250 = vld [vmem:[#allocation6 + $0xe8] sm:$0xff]
    %v2251 = vld [vmem:[#allocation6 + $0xf0] sm:$0xff]
    %v2252 = vld [vmem:[#allocation6 + $0xf8] sm:$0xff]
    %v2285 = vunpack.c.l.b16 %v2221
    %v2286 = vunpack.c.h.b16 %v2221
    %v2287 = vunpack.c.l.b16 %v2222
    %v2288 = vunpack.c.h.b16 %v2222
    %v2289 = vunpack.c.l.b16 %v2223
    %v2290 = vunpack.c.h.b16 %v2223
    %v2291 = vunpack.c.l.b16 %v2224
    %v2292 = vunpack.c.h.b16 %v2224
    %v2293 = vunpack.c.l.b16 %v2225
    %v2294 = vunpack.c.h.b16 %v2225
    %v2295 = vunpack.c.l.b16 %v2226
    %v2296 = vunpack.c.h.b16 %v2226
    %v2297 = vunpack.c.l.b16 %v2227
    %v2298 = vunpack.c.h.b16 %v2227
    %v2299 = vunpack.c.l.b16 %v2228
    %v2300 = vunpack.c.h.b16 %v2228
    %v2301 = vunpack.c.l.b16 %v2229
    %v2302 = vunpack.c.h.b16 %v2229
    %v2303 = vunpack.c.l.b16 %v2230
    %v2304 = vunpack.c.h.b16 %v2230
    %v2305 = vunpack.c.l.b16 %v2231
    %v2306 = vunpack.c.h.b16 %v2231
    %v2307 = vunpack.c.l.b16 %v2232
    %v2308 = vunpack.c.h.b16 %v2232
    %v2309 = vunpack.c.l.b16 %v2233
    %v2310 = vunpack.c.h.b16 %v2233
    %v2311 = vunpack.c.l.b16 %v2234
    %v2312 = vunpack.c.h.b16 %v2234
    %v2313 = vunpack.c.l.b16 %v2235
    %v2314 = vunpack.c.h.b16 %v2235
    %v2315 = vunpack.c.l.b16 %v2236
    %v2316 = vunpack.c.h.b16 %v2236
    %v2317 = vunpack.c.l.b16 %v2237
    %v2318 = vunpack.c.h.b16 %v2237
    %v2319 = vunpack.c.l.b16 %v2238
    %v2320 = vunpack.c.h.b16 %v2238
    %v2321 = vunpack.c.l.b16 %v2239
    %v2322 = vunpack.c.h.b16 %v2239
    %v2323 = vunpack.c.l.b16 %v2240
    %v2324 = vunpack.c.h.b16 %v2240
    %v2325 = vunpack.c.l.b16 %v2241
    %v2326 = vunpack.c.h.b16 %v2241
    %v2327 = vunpack.c.l.b16 %v2242
    %v2328 = vunpack.c.h.b16 %v2242
    %v2329 = vunpack.c.l.b16 %v2243
    %v2330 = vunpack.c.h.b16 %v2243
    %v2331 = vunpack.c.l.b16 %v2244
    %v2332 = vunpack.c.h.b16 %v2244
    %v2333 = vunpack.c.l.b16 %v2245
    %v2334 = vunpack.c.h.b16 %v2245
    %v2335 = vunpack.c.l.b16 %v2246
    %v2336 = vunpack.c.h.b16 %v2246
    %v2337 = vunpack.c.l.b16 %v2247
    %v2338 = vunpack.c.h.b16 %v2247
    %v2339 = vunpack.c.l.b16 %v2248
    %v2340 = vunpack.c.h.b16 %v2248
    %v2341 = vunpack.c.l.b16 %v2249
    %v2342 = vunpack.c.h.b16 %v2249
    %v2343 = vunpack.c.l.b16 %v2250
    %v2344 = vunpack.c.h.b16 %v2250
    %v2345 = vunpack.c.l.b16 %v2251
    %v2346 = vunpack.c.h.b16 %v2251
    %v2347 = vunpack.c.l.b16 %v2252
    %v2348 = vunpack.c.h.b16 %v2252
    %v2349 = vpack.c.b16 %v2289, %v2285
    %v2350 = vpack.c.b16 %v2290, %v2286
    %v2351 = vpack.c.b16 %v2291, %v2287
    %v2352 = vpack.c.b16 %v2292, %v2288
    %v2353 = vpack.c.b16 %v2297, %v2293
    %v2354 = vpack.c.b16 %v2298, %v2294
    %v2355 = vpack.c.b16 %v2299, %v2295
    %v2356 = vpack.c.b16 %v2300, %v2296
    %v2357 = vpack.c.b16 %v2305, %v2301
    %v2358 = vpack.c.b16 %v2306, %v2302
    %v2359 = vpack.c.b16 %v2307, %v2303
    %v2360 = vpack.c.b16 %v2308, %v2304
    %v2361 = vpack.c.b16 %v2313, %v2309
    %v2362 = vpack.c.b16 %v2314, %v2310
    %v2363 = vpack.c.b16 %v2315, %v2311
    %v2364 = vpack.c.b16 %v2316, %v2312
    %v2365 = vpack.c.b16 %v2321, %v2317
    %v2366 = vpack.c.b16 %v2322, %v2318
    %v2367 = vpack.c.b16 %v2323, %v2319
    %v2368 = vpack.c.b16 %v2324, %v2320
    %v2369 = vpack.c.b16 %v2329, %v2325
    %v2370 = vpack.c.b16 %v2330, %v2326
    %v2371 = vpack.c.b16 %v2331, %v2327
    %v2372 = vpack.c.b16 %v2332, %v2328
    %v2373 = vpack.c.b16 %v2337, %v2333
    %v2374 = vpack.c.b16 %v2338, %v2334
    %v2375 = vpack.c.b16 %v2339, %v2335
    %v2376 = vpack.c.b16 %v2340, %v2336
    %v2377 = vpack.c.b16 %v2345, %v2341
    %v2378 = vpack.c.b16 %v2346, %v2342
    %v2379 = vpack.c.b16 %v2347, %v2343
    %v2380 = vpack.c.b16 %v2348, %v2344
    %2413 = vmatprep.subr.bf16.mxu0 %v2350
    %2414 = vmatpush1.bf16.msra.mxu0 %v2349
    %2415 = vmatprep.subr.bf16.mxu0 %v2354
    %2416 = vmatpush1.bf16.msra.mxu0 %v2353
    %2417 = vmatprep.subr.bf16.mxu0 %v2358
    %2418 = vmatpush1.bf16.msra.mxu0 %v2357
    %2419 = vmatprep.subr.bf16.mxu0 %v2362
    %2420 = vmatpush1.bf16.msra.mxu0 %v2361
    %2421 = vmatprep.subr.bf16.mxu0 %v2366
    %2422 = vmatpush1.bf16.msra.mxu0 %v2365
    %2423 = vmatprep.subr.bf16.mxu0 %v2370
    %2424 = vmatpush1.bf16.msra.mxu0 %v2369
    %2425 = vmatprep.subr.bf16.mxu0 %v2374
    %2426 = vmatpush1.bf16.msra.mxu0 %v2373
    %2427 = vmatprep.subr.bf16.mxu0 %v2378
    %2428 = vmatpush1.bf16.msra.mxu0 %v2377
    %2429 = vmatprep.subr.bf16.mxu0 0
    %2430 = vmatpush1.bf16.msra.mxu0 0
    %2431 = vmatprep.subr.bf16.mxu0 0
    %2432 = vmatpush1.bf16.msra.mxu0 0
    %2433 = vmatprep.subr.bf16.mxu0 0
    %2434 = vmatpush1.bf16.msra.mxu0 0
    %2435 = vmatprep.subr.bf16.mxu0 0
    %2436 = vmatpush1.bf16.msra.mxu0 0
    %2437 = vmatprep.subr.bf16.mxu0 0
    %2438 = vmatpush1.bf16.msra.mxu0 0
    %2439 = vmatprep.subr.bf16.mxu0 0
    %2440 = vmatpush1.bf16.msra.mxu0 0
    %2441 = vmatprep.subr.bf16.mxu0 0
    %2442 = vmatpush1.bf16.msra.mxu0 0
    %2443 = vmatprep.subr.bf16.mxu0 0
    %2444 = vmatpush1.bf16.msra.mxu0 0
    %2445 = vmatprep.mubr.bf16.mxu0 0
    %2446 = vmatmul.mubr.bf16.gmra.mrb[0].mxu0 %v2220
    %v2447 = vpop.f32.mrb[0].mxu0
    %v2448 = vadd.f32 0.0, %v2447
    %v2449 = vpop.f32.mrb[0].mxu0
    %v2450 = vadd.f32 0.0, %v2449
    %v2451 = vpop.f32.mrb[0].mxu0
    %v2452 = vpop.f32.mrb[0].mxu0
    %2453 = vdwg.mxu0
    %2454 = vmatprep.subr.bf16.mxu0 %v2352
    %2455 = vmatpush1.bf16.msra.mxu0 %v2351
    %2456 = vmatprep.subr.bf16.mxu0 %v2356
    %2457 = vmatpush1.bf16.msra.mxu0 %v2355
    %2458 = vmatprep.subr.bf16.mxu0 %v2360
    %2459 = vmatpush1.bf16.msra.mxu0 %v2359
    %2460 = vmatprep.subr.bf16.mxu0 %v2364
    %2461 = vmatpush1.bf16.msra.mxu0 %v2363
    %2462 = vmatprep.subr.bf16.mxu0 %v2368
    %2463 = vmatpush1.bf16.msra.mxu0 %v2367
    %2464 = vmatprep.subr.bf16.mxu0 %v2372
    %2465 = vmatpush1.bf16.msra.mxu0 %v2371
    %2466 = vmatprep.subr.bf16.mxu0 %v2376
    %2467 = vmatpush1.bf16.msra.mxu0 %v2375
    %2468 = vmatprep.subr.bf16.mxu0 %v2380
    %2469 = vmatpush1.bf16.msra.mxu0 %v2379
    %2470 = vmatprep.subr.bf16.mxu0 0
    %2471 = vmatpush1.bf16.msra.mxu0 0
    %2472 = vmatprep.subr.bf16.mxu0 0
    %2473 = vmatpush1.bf16.msra.mxu0 0
    %2474 = vmatprep.subr.bf16.mxu0 0
    %2475 = vmatpush1.bf16.msra.mxu0 0
    %2476 = vmatprep.subr.bf16.mxu0 0
    %2477 = vmatpush1.bf16.msra.mxu0 0
    %2478 = vmatprep.subr.bf16.mxu0 0
    %2479 = vmatpush1.bf16.msra.mxu0 0
    %2480 = vmatprep.subr.bf16.mxu0 0
    %2481 = vmatpush1.bf16.msra.mxu0 0
    %2482 = vmatprep.subr.bf16.mxu0 0
    %2483 = vmatpush1.bf16.msra.mxu0 0
    %2484 = vmatprep.subr.bf16.mxu0 0
    %2485 = vmatpush1.bf16.msra.mxu0 0
    %2486 = vmatprep.mubr.bf16.mxu0 0
    %2487 = vmatmul.mubr.bf16.gmra.mrb[0].mxu0 %v2220
    %v2488 = vpop.f32.mrb[0].mxu0
    %v2489 = vadd.f32 0.0, %v2488
    %v2490 = vpop.f32.mrb[0].mxu0
    %v2491 = vadd.f32 0.0, %v2490
    %v2492 = vpop.f32.mrb[0].mxu0
    %v2493 = vpop.f32.mrb[0].mxu0
    %2494 = vdwg.mxu0
    %v2495 = vadd.f32 %v2215, %v2448
    %v2496 = vadd.f32 %v2216, %v2450
    %v2497 = vadd.f32 %v2217, %v2489
    %v2498 = vadd.f32 %v2218, %v2491
    %v2499 = vxor.u32 %v2495, 2147483648
    %v2500 = vmul.f32 %v2499, 1.442695
    %v2501 = vpow.pop %v2500
    %v2502 = vadd.f32 %v2501, 1.0
    %v2503 = vrcp.pop %v2502
    %v2504 = vmul.f32 1.0, %v2503
    %v2505 = vxor.u32 %v2496, 2147483648
    %v2506 = vmul.f32 %v2505, 1.442695
    %v2507 = vpow.pop %v2506
    %v2508 = vadd.f32 %v2507, 1.0
    %v2509 = vrcp.pop %v2508
    %v2510 = vmul.f32 1.0, %v2509
    %v2511 = vtanh.pop %v2497
    %v2512 = vxor.u32 %v2498, 2147483648
    %v2513 = vmul.f32 %v2512, 1.442695
    %v2514 = vpow.pop %v2513
    %v2515 = vadd.f32 %v2514, 1.0
    %v2516 = vrcp.pop %v2515
    %v2517 = vmul.f32 1.0, %v2516
    %v2518 = vld [vmem:[#allocation3] sm:$0xff]
    %v2519 = vmul.f32 %v2510, %v2518
    %v2520 = vmul.f32 %v2504, %v2511
    %v2521 = vadd.f32 %v2519, %v2520
    %v2522 = vtanh.pop %v2521
    %v2523 = vmul.f32 %v2517, %v2522
    %2524 = vst [vmem:[#allocation3] sm:$0xff] %v2521
    %2525 = vst [vmem:[#allocation2] sm:$0xff] %v2523
    %s2526 = scalar_lea.vmem [#allocation4], 48
    %2527 = vst [vmem:[%s2526] sm:$0xff] %v2523
    %s2528 = scalar_lea.vmem [#allocation5], 224
    %v2529 = vld [vmem:[%s2528] sm:$0xff]
    %v2530 = vld [vmem:[%s2528 + $0x8] sm:$0xff]
    %v2531 = vld [vmem:[%s2528 + $0x10] sm:$0xff]
    %v2532 = vld [vmem:[%s2528 + $0x18] sm:$0xff]
    %v2533 = vld [vmem:[#allocation2] sm:$0xff]
    %v2534 = vpack.c.bf16 %v2533, %v2533
    %v2535 = vld [vmem:[#allocation6] sm:$0xff]
    %v2536 = vld [vmem:[#allocation6 + $0x8] sm:$0xff]
    %v2537 = vld [vmem:[#allocation6 + $0x10] sm:$0xff]
    %v2538 = vld [vmem:[#allocation6 + $0x18] sm:$0xff]
    %v2539 = vld [vmem:[#allocation6 + $0x20] sm:$0xff]
    %v2540 = vld [vmem:[#allocation6 + $0x28] sm:$0xff]
    %v2541 = vld [vmem:[#allocation6 + $0x30] sm:$0xff]
    %v2542 = vld [vmem:[#allocation6 + $0x38] sm:$0xff]
    %v2543 = vld [vmem:[#allocation6 + $0x40] sm:$0xff]
    %v2544 = vld [vmem:[#allocation6 + $0x48] sm:$0xff]
    %v2545 = vld [vmem:[#allocation6 + $0x50] sm:$0xff]
    %v2546 = vld [vmem:[#allocation6 + $0x58] sm:$0xff]
    %v2547 = vld [vmem:[#allocation6 + $0x60] sm:$0xff]
    %v2548 = vld [vmem:[#allocation6 + $0x68] sm:$0xff]
    %v2549 = vld [vmem:[#allocation6 + $0x70] sm:$0xff]
    %v2550 = vld [vmem:[#allocation6 + $0x78] sm:$0xff]
    %v2551 = vld [vmem:[#allocation6 + $0x80] sm:$0xff]
    %v2552 = vld [vmem:[#allocation6 + $0x88] sm:$0xff]
    %v2553 = vld [vmem:[#allocation6 + $0x90] sm:$0xff]
    %v2554 = vld [vmem:[#allocation6 + $0x98] sm:$0xff]
    %v2555 = vld [vmem:[#allocation6 + $0xa0] sm:$0xff]
    %v2556 = vld [vmem:[#allocation6 + $0xa8] sm:$0xff]
    %v2557 = vld [vmem:[#allocation6 + $0xb0] sm:$0xff]
    %v2558 = vld [vmem:[#allocation6 + $0xb8] sm:$0xff]
    %v2559 = vld [vmem:[#allocation6 + $0xc0] sm:$0xff]
    %v2560 = vld [vmem:[#allocation6 + $0xc8] sm:$0xff]
    %v2561 = vld [vmem:[#allocation6 + $0xd0] sm:$0xff]
    %v2562 = vld [vmem:[#allocation6 + $0xd8] sm:$0xff]
    %v2563 = vld [vmem:[#allocation6 + $0xe0] sm:$0xff]
    %v2564 = vld [vmem:[#allocation6 + $0xe8] sm:$0xff]
    %v2565 = vld [vmem:[#allocation6 + $0xf0] sm:$0xff]
    %v2566 = vld [vmem:[#allocation6 + $0xf8] sm:$0xff]
    %v2599 = vunpack.c.l.b16 %v2535
    %v2600 = vunpack.c.h.b16 %v2535
    %v2601 = vunpack.c.l.b16 %v2536
    %v2602 = vunpack.c.h.b16 %v2536
    %v2603 = vunpack.c.l.b16 %v2537
    %v2604 = vunpack.c.h.b16 %v2537
    %v2605 = vunpack.c.l.b16 %v2538
    %v2606 = vunpack.c.h.b16 %v2538
    %v2607 = vunpack.c.l.b16 %v2539
    %v2608 = vunpack.c.h.b16 %v2539
    %v2609 = vunpack.c.l.b16 %v2540
    %v2610 = vunpack.c.h.b16 %v2540
    %v2611 = vunpack.c.l.b16 %v2541
    %v2612 = vunpack.c.h.b16 %v2541
    %v2613 = vunpack.c.l.b16 %v2542
    %v2614 = vunpack.c.h.b16 %v2542
    %v2615 = vunpack.c.l.b16 %v2543
    %v2616 = vunpack.c.h.b16 %v2543
    %v2617 = vunpack.c.l.b16 %v2544
    %v2618 = vunpack.c.h.b16 %v2544
    %v2619 = vunpack.c.l.b16 %v2545
    %v2620 = vunpack.c.h.b16 %v2545
    %v2621 = vunpack.c.l.b16 %v2546
    %v2622 = vunpack.c.h.b16 %v2546
    %v2623 = vunpack.c.l.b16 %v2547
    %v2624 = vunpack.c.h.b16 %v2547
    %v2625 = vunpack.c.l.b16 %v2548
    %v2626 = vunpack.c.h.b16 %v2548
    %v2627 = vunpack.c.l.b16 %v2549
    %v2628 = vunpack.c.h.b16 %v2549
    %v2629 = vunpack.c.l.b16 %v2550
    %v2630 = vunpack.c.h.b16 %v2550
    %v2631 = vunpack.c.l.b16 %v2551
    %v2632 = vunpack.c.h.b16 %v2551
    %v2633 = vunpack.c.l.b16 %v2552
    %v2634 = vunpack.c.h.b16 %v2552
    %v2635 = vunpack.c.l.b16 %v2553
    %v2636 = vunpack.c.h.b16 %v2553
    %v2637 = vunpack.c.l.b16 %v2554
    %v2638 = vunpack.c.h.b16 %v2554
    %v2639 = vunpack.c.l.b16 %v2555
    %v2640 = vunpack.c.h.b16 %v2555
    %v2641 = vunpack.c.l.b16 %v2556
    %v2642 = vunpack.c.h.b16 %v2556
    %v2643 = vunpack.c.l.b16 %v2557
    %v2644 = vunpack.c.h.b16 %v2557
    %v2645 = vunpack.c.l.b16 %v2558
    %v2646 = vunpack.c.h.b16 %v2558
    %v2647 = vunpack.c.l.b16 %v2559
    %v2648 = vunpack.c.h.b16 %v2559
    %v2649 = vunpack.c.l.b16 %v2560
    %v2650 = vunpack.c.h.b16 %v2560
    %v2651 = vunpack.c.l.b16 %v2561
    %v2652 = vunpack.c.h.b16 %v2561
    %v2653 = vunpack.c.l.b16 %v2562
    %v2654 = vunpack.c.h.b16 %v2562
    %v2655 = vunpack.c.l.b16 %v2563
    %v2656 = vunpack.c.h.b16 %v2563
    %v2657 = vunpack.c.l.b16 %v2564
    %v2658 = vunpack.c.h.b16 %v2564
    %v2659 = vunpack.c.l.b16 %v2565
    %v2660 = vunpack.c.h.b16 %v2565
    %v2661 = vunpack.c.l.b16 %v2566
    %v2662 = vunpack.c.h.b16 %v2566
    %v2663 = vpack.c.b16 %v2603, %v2599
    %v2664 = vpack.c.b16 %v2604, %v2600
    %v2665 = vpack.c.b16 %v2605, %v2601
    %v2666 = vpack.c.b16 %v2606, %v2602
    %v2667 = vpack.c.b16 %v2611, %v2607
    %v2668 = vpack.c.b16 %v2612, %v2608
    %v2669 = vpack.c.b16 %v2613, %v2609
    %v2670 = vpack.c.b16 %v2614, %v2610
    %v2671 = vpack.c.b16 %v2619, %v2615
    %v2672 = vpack.c.b16 %v2620, %v2616
    %v2673 = vpack.c.b16 %v2621, %v2617
    %v2674 = vpack.c.b16 %v2622, %v2618
    %v2675 = vpack.c.b16 %v2627, %v2623
    %v2676 = vpack.c.b16 %v2628, %v2624
    %v2677 = vpack.c.b16 %v2629, %v2625
    %v2678 = vpack.c.b16 %v2630, %v2626
    %v2679 = vpack.c.b16 %v2635, %v2631
    %v2680 = vpack.c.b16 %v2636, %v2632
    %v2681 = vpack.c.b16 %v2637, %v2633
    %v2682 = vpack.c.b16 %v2638, %v2634
    %v2683 = vpack.c.b16 %v2643, %v2639
    %v2684 = vpack.c.b16 %v2644, %v2640
    %v2685 = vpack.c.b16 %v2645, %v2641
    %v2686 = vpack.c.b16 %v2646, %v2642
    %v2687 = vpack.c.b16 %v2651, %v2647
    %v2688 = vpack.c.b16 %v2652, %v2648
    %v2689 = vpack.c.b16 %v2653, %v2649
    %v2690 = vpack.c.b16 %v2654, %v2650
    %v2691 = vpack.c.b16 %v2659, %v2655
    %v2692 = vpack.c.b16 %v2660, %v2656
    %v2693 = vpack.c.b16 %v2661, %v2657
    %v2694 = vpack.c.b16 %v2662, %v2658
    %2727 = vmatprep.subr.bf16.mxu0 %v2664
    %2728 = vmatpush1.bf16.msra.mxu0 %v2663
    %2729 = vmatprep.subr.bf16.mxu0 %v2668
    %2730 = vmatpush1.bf16.msra.mxu0 %v2667
    %2731 = vmatprep.subr.bf16.mxu0 %v2672
    %2732 = vmatpush1.bf16.msra.mxu0 %v2671
    %2733 = vmatprep.subr.bf16.mxu0 %v2676
    %2734 = vmatpush1.bf16.msra.mxu0 %v2675
    %2735 = vmatprep.subr.bf16.mxu0 %v2680
    %2736 = vmatpush1.bf16.msra.mxu0 %v2679
    %2737 = vmatprep.subr.bf16.mxu0 %v2684
    %2738 = vmatpush1.bf16.msra.mxu0 %v2683
    %2739 = vmatprep.subr.bf16.mxu0 %v2688
    %2740 = vmatpush1.bf16.msra.mxu0 %v2687
    %2741 = vmatprep.subr.bf16.mxu0 %v2692
    %2742 = vmatpush1.bf16.msra.mxu0 %v2691
    %2743 = vmatprep.subr.bf16.mxu0 0
    %2744 = vmatpush1.bf16.msra.mxu0 0
    %2745 = vmatprep.subr.bf16.mxu0 0
    %2746 = vmatpush1.bf16.msra.mxu0 0
    %2747 = vmatprep.subr.bf16.mxu0 0
    %2748 = vmatpush1.bf16.msra.mxu0 0
    %2749 = vmatprep.subr.bf16.mxu0 0
    %2750 = vmatpush1.bf16.msra.mxu0 0
    %2751 = vmatprep.subr.bf16.mxu0 0
    %2752 = vmatpush1.bf16.msra.mxu0 0
    %2753 = vmatprep.subr.bf16.mxu0 0
    %2754 = vmatpush1.bf16.msra.mxu0 0
    %2755 = vmatprep.subr.bf16.mxu0 0
    %2756 = vmatpush1.bf16.msra.mxu0 0
    %2757 = vmatprep.subr.bf16.mxu0 0
    %2758 = vmatpush1.bf16.msra.mxu0 0
    %2759 = vmatprep.mubr.bf16.mxu0 0
    %2760 = vmatmul.mubr.bf16.gmra.mrb[0].mxu0 %v2534
    %v2761 = vpop.f32.mrb[0].mxu0
    %v2762 = vadd.f32 0.0, %v2761
    %v2763 = vpop.f32.mrb[0].mxu0
    %v2764 = vadd.f32 0.0, %v2763
    %v2765 = vpop.f32.mrb[0].mxu0
    %v2766 = vpop.f32.mrb[0].mxu0
    %2767 = vdwg.mxu0
    %2768 = vmatprep.subr.bf16.mxu0 %v2666
    %2769 = vmatpush1.bf16.msra.mxu0 %v2665
    %2770 = vmatprep.subr.bf16.mxu0 %v2670
    %2771 = vmatpush1.bf16.msra.mxu0 %v2669
    %2772 = vmatprep.subr.bf16.mxu0 %v2674
    %2773 = vmatpush1.bf16.msra.mxu0 %v2673
    %2774 = vmatprep.subr.bf16.mxu0 %v2678
    %2775 = vmatpush1.bf16.msra.mxu0 %v2677
    %2776 = vmatprep.subr.bf16.mxu0 %v2682
    %2777 = vmatpush1.bf16.msra.mxu0 %v2681
    %2778 = vmatprep.subr.bf16.mxu0 %v2686
    %2779 = vmatpush1.bf16.msra.mxu0 %v2685
    %2780 = vmatprep.subr.bf16.mxu0 %v2690
    %2781 = vmatpush1.bf16.msra.mxu0 %v2689
    %2782 = vmatprep.subr.bf16.mxu0 %v2694
    %2783 = vmatpush1.bf16.msra.mxu0 %v2693
    %2784 = vmatprep.subr.bf16.mxu0 0
    %2785 = vmatpush1.bf16.msra.mxu0 0
    %2786 = vmatprep.subr.bf16.mxu0 0
    %2787 = vmatpush1.bf16.msra.mxu0 0
    %2788 = vmatprep.subr.bf16.mxu0 0
    %2789 = vmatpush1.bf16.msra.mxu0 0
    %2790 = vmatprep.subr.bf16.mxu0 0
    %2791 = vmatpush1.bf16.msra.mxu0 0
    %2792 = vmatprep.subr.bf16.mxu0 0
    %2793 = vmatpush1.bf16.msra.mxu0 0
    %2794 = vmatprep.subr.bf16.mxu0 0
    %2795 = vmatpush1.bf16.msra.mxu0 0
    %2796 = vmatprep.subr.bf16.mxu0 0
    %2797 = vmatpush1.bf16.msra.mxu0 0
    %2798 = vmatprep.subr.bf16.mxu0 0
    %2799 = vmatpush1.bf16.msra.mxu0 0
    %2800 = vmatprep.mubr.bf16.mxu0 0
    %2801 = vmatmul.mubr.bf16.gmra.mrb[0].mxu0 %v2534
    %v2802 = vpop.f32.mrb[0].mxu0
    %v2803 = vadd.f32 0.0, %v2802
    %v2804 = vpop.f32.mrb[0].mxu0
    %v2805 = vadd.f32 0.0, %v2804
    %v2806 = vpop.f32.mrb[0].mxu0
    %v2807 = vpop.f32.mrb[0].mxu0
    %2808 = vdwg.mxu0
    %v2809 = vadd.f32 %v2529, %v2762
    %v2810 = vadd.f32 %v2530, %v2764
    %v2811 = vadd.f32 %v2531, %v2803
    %v2812 = vadd.f32 %v2532, %v2805
    %v2813 = vxor.u32 %v2809, 2147483648
    %v2814 = vmul.f32 %v2813, 1.442695
    %v2815 = vpow.pop %v2814
    %v2816 = vadd.f32 %v2815, 1.0
    %v2817 = vrcp.pop %v2816
    %v2818 = vmul.f32 1.0, %v2817
    %v2819 = vxor.u32 %v2810, 2147483648
    %v2820 = vmul.f32 %v2819, 1.442695
    %v2821 = vpow.pop %v2820
    %v2822 = vadd.f32 %v2821, 1.0
    %v2823 = vrcp.pop %v2822
    %v2824 = vmul.f32 1.0, %v2823
    %v2825 = vtanh.pop %v2811
    %v2826 = vxor.u32 %v2812, 2147483648
    %v2827 = vmul.f32 %v2826, 1.442695
    %v2828 = vpow.pop %v2827
    %v2829 = vadd.f32 %v2828, 1.0
    %v2830 = vrcp.pop %v2829
    %v2831 = vmul.f32 1.0, %v2830
    %v2832 = vld [vmem:[#allocation3] sm:$0xff]
    %v2833 = vmul.f32 %v2824, %v2832
    %v2834 = vmul.f32 %v2818, %v2825
    %v2835 = vadd.f32 %v2833, %v2834
    %v2836 = vtanh.pop %v2835
    %v2837 = vmul.f32 %v2831, %v2836
    %2838 = vst [vmem:[#allocation3] sm:$0xff] %v2835
    %2839 = vst [vmem:[#allocation2] sm:$0xff] %v2837
    %s2840 = scalar_lea.vmem [#allocation4], 56
    %2841 = vst [vmem:[%s2840] sm:$0xff] %v2837
    %s2842 = scalar_lea.vmem [#allocation5], 256
    %v2843 = vld [vmem:[%s2842] sm:$0xff]
    %v2844 = vld [vmem:[%s2842 + $0x8] sm:$0xff]
    %v2845 = vld [vmem:[%s2842 + $0x10] sm:$0xff]
    %v2846 = vld [vmem:[%s2842 + $0x18] sm:$0xff]
    %v2847 = vld [vmem:[#allocation2] sm:$0xff]
    %v2848 = vpack.c.bf16 %v2847, %v2847
    %v2849 = vld [vmem:[#allocation6] sm:$0xff]
    %v2850 = vld [vmem:[#allocation6 + $0x8] sm:$0xff]
    %v2851 = vld [vmem:[#allocation6 + $0x10] sm:$0xff]
    %v2852 = vld [vmem:[#allocation6 + $0x18] sm:$0xff]
    %v2853 = vld [vmem:[#allocation6 + $0x20] sm:$0xff]
    %v2854 = vld [vmem:[#allocation6 + $0x28] sm:$0xff]
    %v2855 = vld [vmem:[#allocation6 + $0x30] sm:$0xff]
    %v2856 = vld [vmem:[#allocation6 + $0x38] sm:$0xff]
    %v2857 = vld [vmem:[#allocation6 + $0x40] sm:$0xff]
    %v2858 = vld [vmem:[#allocation6 + $0x48] sm:$0xff]
    %v2859 = vld [vmem:[#allocation6 + $0x50] sm:$0xff]
    %v2860 = vld [vmem:[#allocation6 + $0x58] sm:$0xff]
    %v2861 = vld [vmem:[#allocation6 + $0x60] sm:$0xff]
    %v2862 = vld [vmem:[#allocation6 + $0x68] sm:$0xff]
    %v2863 = vld [vmem:[#allocation6 + $0x70] sm:$0xff]
    %v2864 = vld [vmem:[#allocation6 + $0x78] sm:$0xff]
    %v2865 = vld [vmem:[#allocation6 + $0x80] sm:$0xff]
    %v2866 = vld [vmem:[#allocation6 + $0x88] sm:$0xff]
    %v2867 = vld [vmem:[#allocation6 + $0x90] sm:$0xff]
    %v2868 = vld [vmem:[#allocation6 + $0x98] sm:$0xff]
    %v2869 = vld [vmem:[#allocation6 + $0xa0] sm:$0xff]
    %v2870 = vld [vmem:[#allocation6 + $0xa8] sm:$0xff]
    %v2871 = vld [vmem:[#allocation6 + $0xb0] sm:$0xff]
    %v2872 = vld [vmem:[#allocation6 + $0xb8] sm:$0xff]
    %v2873 = vld [vmem:[#allocation6 + $0xc0] sm:$0xff]
    %v2874 = vld [vmem:[#allocation6 + $0xc8] sm:$0xff]
    %v2875 = vld [vmem:[#allocation6 + $0xd0] sm:$0xff]
    %v2876 = vld [vmem:[#allocation6 + $0xd8] sm:$0xff]
    %v2877 = vld [vmem:[#allocation6 + $0xe0] sm:$0xff]
    %v2878 = vld [vmem:[#allocation6 + $0xe8] sm:$0xff]
    %v2879 = vld [vmem:[#allocation6 + $0xf0] sm:$0xff]
    %v2880 = vld [vmem:[#allocation6 + $0xf8] sm:$0xff]
    %v2913 = vunpack.c.l.b16 %v2849
    %v2914 = vunpack.c.h.b16 %v2849
    %v2915 = vunpack.c.l.b16 %v2850
    %v2916 = vunpack.c.h.b16 %v2850
    %v2917 = vunpack.c.l.b16 %v2851
    %v2918 = vunpack.c.h.b16 %v2851
    %v2919 = vunpack.c.l.b16 %v2852
    %v2920 = vunpack.c.h.b16 %v2852
    %v2921 = vunpack.c.l.b16 %v2853
    %v2922 = vunpack.c.h.b16 %v2853
    %v2923 = vunpack.c.l.b16 %v2854
    %v2924 = vunpack.c.h.b16 %v2854
    %v2925 = vunpack.c.l.b16 %v2855
    %v2926 = vunpack.c.h.b16 %v2855
    %v2927 = vunpack.c.l.b16 %v2856
    %v2928 = vunpack.c.h.b16 %v2856
    %v2929 = vunpack.c.l.b16 %v2857
    %v2930 = vunpack.c.h.b16 %v2857
    %v2931 = vunpack.c.l.b16 %v2858
    %v2932 = vunpack.c.h.b16 %v2858
    %v2933 = vunpack.c.l.b16 %v2859
    %v2934 = vunpack.c.h.b16 %v2859
    %v2935 = vunpack.c.l.b16 %v2860
    %v2936 = vunpack.c.h.b16 %v2860
    %v2937 = vunpack.c.l.b16 %v2861
    %v2938 = vunpack.c.h.b16 %v2861
    %v2939 = vunpack.c.l.b16 %v2862
    %v2940 = vunpack.c.h.b16 %v2862
    %v2941 = vunpack.c.l.b16 %v2863
    %v2942 = vunpack.c.h.b16 %v2863
    %v2943 = vunpack.c.l.b16 %v2864
    %v2944 = vunpack.c.h.b16 %v2864
    %v2945 = vunpack.c.l.b16 %v2865
    %v2946 = vunpack.c.h.b16 %v2865
    %v2947 = vunpack.c.l.b16 %v2866
    %v2948 = vunpack.c.h.b16 %v2866
    %v2949 = vunpack.c.l.b16 %v2867
    %v2950 = vunpack.c.h.b16 %v2867
    %v2951 = vunpack.c.l.b16 %v2868
    %v2952 = vunpack.c.h.b16 %v2868
    %v2953 = vunpack.c.l.b16 %v2869
    %v2954 = vunpack.c.h.b16 %v2869
    %v2955 = vunpack.c.l.b16 %v2870
    %v2956 = vunpack.c.h.b16 %v2870
    %v2957 = vunpack.c.l.b16 %v2871
    %v2958 = vunpack.c.h.b16 %v2871
    %v2959 = vunpack.c.l.b16 %v2872
    %v2960 = vunpack.c.h.b16 %v2872
    %v2961 = vunpack.c.l.b16 %v2873
    %v2962 = vunpack.c.h.b16 %v2873
    %v2963 = vunpack.c.l.b16 %v2874
    %v2964 = vunpack.c.h.b16 %v2874
    %v2965 = vunpack.c.l.b16 %v2875
    %v2966 = vunpack.c.h.b16 %v2875
    %v2967 = vunpack.c.l.b16 %v2876
    %v2968 = vunpack.c.h.b16 %v2876
    %v2969 = vunpack.c.l.b16 %v2877
    %v2970 = vunpack.c.h.b16 %v2877
    %v2971 = vunpack.c.l.b16 %v2878
    %v2972 = vunpack.c.h.b16 %v2878
    %v2973 = vunpack.c.l.b16 %v2879
    %v2974 = vunpack.c.h.b16 %v2879
    %v2975 = vunpack.c.l.b16 %v2880
    %v2976 = vunpack.c.h.b16 %v2880
    %v2977 = vpack.c.b16 %v2917, %v2913
    %v2978 = vpack.c.b16 %v2918, %v2914
    %v2979 = vpack.c.b16 %v2919, %v2915
    %v2980 = vpack.c.b16 %v2920, %v2916
    %v2981 = vpack.c.b16 %v2925, %v2921
    %v2982 = vpack.c.b16 %v2926, %v2922
    %v2983 = vpack.c.b16 %v2927, %v2923
    %v2984 = vpack.c.b16 %v2928, %v2924
    %v2985 = vpack.c.b16 %v2933, %v2929
    %v2986 = vpack.c.b16 %v2934, %v2930
    %v2987 = vpack.c.b16 %v2935, %v2931
    %v2988 = vpack.c.b16 %v2936, %v2932
    %v2989 = vpack.c.b16 %v2941, %v2937
    %v2990 = vpack.c.b16 %v2942, %v2938
    %v2991 = vpack.c.b16 %v2943, %v2939
    %v2992 = vpack.c.b16 %v2944, %v2940
    %v2993 = vpack.c.b16 %v2949, %v2945
    %v2994 = vpack.c.b16 %v2950, %v2946
    %v2995 = vpack.c.b16 %v2951, %v2947
    %v2996 = vpack.c.b16 %v2952, %v2948
    %v2997 = vpack.c.b16 %v2957, %v2953
    %v2998 = vpack.c.b16 %v2958, %v2954
    %v2999 = vpack.c.b16 %v2959, %v2955
    %v3000 = vpack.c.b16 %v2960, %v2956
    %v3001 = vpack.c.b16 %v2965, %v2961
    %v3002 = vpack.c.b16 %v2966, %v2962
    %v3003 = vpack.c.b16 %v2967, %v2963
    %v3004 = vpack.c.b16 %v2968, %v2964
    %v3005 = vpack.c.b16 %v2973, %v2969
    %v3006 = vpack.c.b16 %v2974, %v2970
    %v3007 = vpack.c.b16 %v2975, %v2971
    %v3008 = vpack.c.b16 %v2976, %v2972
    %3041 = vmatprep.subr.bf16.mxu0 %v2978
    %3042 = vmatpush1.bf16.msra.mxu0 %v2977
    %3043 = vmatprep.subr.bf16.mxu0 %v2982
    %3044 = vmatpush1.bf16.msra.mxu0 %v2981
    %3045 = vmatprep.subr.bf16.mxu0 %v2986
    %3046 = vmatpush1.bf16.msra.mxu0 %v2985
    %3047 = vmatprep.subr.bf16.mxu0 %v2990
    %3048 = vmatpush1.bf16.msra.mxu0 %v2989
    %3049 = vmatprep.subr.bf16.mxu0 %v2994
    %3050 = vmatpush1.bf16.msra.mxu0 %v2993
    %3051 = vmatprep.subr.bf16.mxu0 %v2998
    %3052 = vmatpush1.bf16.msra.mxu0 %v2997
    %3053 = vmatprep.subr.bf16.mxu0 %v3002
    %3054 = vmatpush1.bf16.msra.mxu0 %v3001
    %3055 = vmatprep.subr.bf16.mxu0 %v3006
    %3056 = vmatpush1.bf16.msra.mxu0 %v3005
    %3057 = vmatprep.subr.bf16.mxu0 0
    %3058 = vmatpush1.bf16.msra.mxu0 0
    %3059 = vmatprep.subr.bf16.mxu0 0
    %3060 = vmatpush1.bf16.msra.mxu0 0
    %3061 = vmatprep.subr.bf16.mxu0 0
    %3062 = vmatpush1.bf16.msra.mxu0 0
    %3063 = vmatprep.subr.bf16.mxu0 0
    %3064 = vmatpush1.bf16.msra.mxu0 0
    %3065 = vmatprep.subr.bf16.mxu0 0
    %3066 = vmatpush1.bf16.msra.mxu0 0
    %3067 = vmatprep.subr.bf16.mxu0 0
    %3068 = vmatpush1.bf16.msra.mxu0 0
    %3069 = vmatprep.subr.bf16.mxu0 0
    %3070 = vmatpush1.bf16.msra.mxu0 0
    %3071 = vmatprep.subr.bf16.mxu0 0
    %3072 = vmatpush1.bf16.msra.mxu0 0
    %3073 = vmatprep.mubr.bf16.mxu0 0
    %3074 = vmatmul.mubr.bf16.gmra.mrb[0].mxu0 %v2848
    %v3075 = vpop.f32.mrb[0].mxu0
    %v3076 = vadd.f32 0.0, %v3075
    %v3077 = vpop.f32.mrb[0].mxu0
    %v3078 = vadd.f32 0.0, %v3077
    %v3079 = vpop.f32.mrb[0].mxu0
    %v3080 = vpop.f32.mrb[0].mxu0
    %3081 = vdwg.mxu0
    %3082 = vmatprep.subr.bf16.mxu0 %v2980
    %3083 = vmatpush1.bf16.msra.mxu0 %v2979
    %3084 = vmatprep.subr.bf16.mxu0 %v2984
    %3085 = vmatpush1.bf16.msra.mxu0 %v2983
    %3086 = vmatprep.subr.bf16.mxu0 %v2988
    %3087 = vmatpush1.bf16.msra.mxu0 %v2987
    %3088 = vmatprep.subr.bf16.mxu0 %v2992
    %3089 = vmatpush1.bf16.msra.mxu0 %v2991
    %3090 = vmatprep.subr.bf16.mxu0 %v2996
    %3091 = vmatpush1.bf16.msra.mxu0 %v2995
    %3092 = vmatprep.subr.bf16.mxu0 %v3000
    %3093 = vmatpush1.bf16.msra.mxu0 %v2999
    %3094 = vmatprep.subr.bf16.mxu0 %v3004
    %3095 = vmatpush1.bf16.msra.mxu0 %v3003
    %3096 = vmatprep.subr.bf16.mxu0 %v3008
    %3097 = vmatpush1.bf16.msra.mxu0 %v3007
    %3098 = vmatprep.subr.bf16.mxu0 0
    %3099 = vmatpush1.bf16.msra.mxu0 0
    %3100 = vmatprep.subr.bf16.mxu0 0
    %3101 = vmatpush1.bf16.msra.mxu0 0
    %3102 = vmatprep.subr.bf16.mxu0 0
    %3103 = vmatpush1.bf16.msra.mxu0 0
    %3104 = vmatprep.subr.bf16.mxu0 0
    %3105 = vmatpush1.bf16.msra.mxu0 0
    %3106 = vmatprep.subr.bf16.mxu0 0
    %3107 = vmatpush1.bf16.msra.mxu0 0
    %3108 = vmatprep.subr.bf16.mxu0 0
    %3109 = vmatpush1.bf16.msra.mxu0 0
    %3110 = vmatprep.subr.bf16.mxu0 0
    %3111 = vmatpush1.bf16.msra.mxu0 0
    %3112 = vmatprep.subr.bf16.mxu0 0
    %3113 = vmatpush1.bf16.msra.mxu0 0
    %3114 = vmatprep.mubr.bf16.mxu0 0
    %3115 = vmatmul.mubr.bf16.gmra.mrb[0].mxu0 %v2848
    %v3116 = vpop.f32.mrb[0].mxu0
    %v3117 = vadd.f32 0.0, %v3116
    %v3118 = vpop.f32.mrb[0].mxu0
    %v3119 = vadd.f32 0.0, %v3118
    %v3120 = vpop.f32.mrb[0].mxu0
    %v3121 = vpop.f32.mrb[0].mxu0
    %3122 = vdwg.mxu0
    %v3123 = vadd.f32 %v2843, %v3076
    %v3124 = vadd.f32 %v2844, %v3078
    %v3125 = vadd.f32 %v2845, %v3117
    %v3126 = vadd.f32 %v2846, %v3119
    %v3127 = vxor.u32 %v3123, 2147483648
    %v3128 = vmul.f32 %v3127, 1.442695
    %v3129 = vpow.pop %v3128
    %v3130 = vadd.f32 %v3129, 1.0
    %v3131 = vrcp.pop %v3130
    %v3132 = vmul.f32 1.0, %v3131
    %v3133 = vxor.u32 %v3124, 2147483648
    %v3134 = vmul.f32 %v3133, 1.442695
    %v3135 = vpow.pop %v3134
    %v3136 = vadd.f32 %v3135, 1.0
    %v3137 = vrcp.pop %v3136
    %v3138 = vmul.f32 1.0, %v3137
    %v3139 = vtanh.pop %v3125
    %v3140 = vxor.u32 %v3126, 2147483648
    %v3141 = vmul.f32 %v3140, 1.442695
    %v3142 = vpow.pop %v3141
    %v3143 = vadd.f32 %v3142, 1.0
    %v3144 = vrcp.pop %v3143
    %v3145 = vmul.f32 1.0, %v3144
    %v3146 = vld [vmem:[#allocation3] sm:$0xff]
    %v3147 = vmul.f32 %v3138, %v3146
    %v3148 = vmul.f32 %v3132, %v3139
    %v3149 = vadd.f32 %v3147, %v3148
    %v3150 = vtanh.pop %v3149
    %v3151 = vmul.f32 %v3145, %v3150
    %3152 = vst [vmem:[#allocation3] sm:$0xff] %v3149
    %3153 = vst [vmem:[#allocation2] sm:$0xff] %v3151
    %s3154 = scalar_lea.vmem [#allocation4], 64
    %3155 = vst [vmem:[%s3154] sm:$0xff] %v3151
    %v3156 = vld [vmem:[#allocation4] sm:$0xff]
    %v3157 = vld [vmem:[#allocation4 + $0x8] sm:$0xff]
    %v3158 = vld [vmem:[#allocation4 + $0x10] sm:$0xff]
    %v3159 = vld [vmem:[#allocation4 + $0x18] sm:$0xff]
    %v3160 = vld [vmem:[#allocation4 + $0x20] sm:$0xff]
    %v3161 = vld [vmem:[#allocation4 + $0x28] sm:$0xff]
    %v3162 = vld [vmem:[#allocation4 + $0x30] sm:$0xff]
    %v3163 = vld [vmem:[#allocation4 + $0x38] sm:$0xff]
    %v3164 = vld [vmem:[#allocation4 + $0x40] sm:$0xff]
    %v3165 = vpack.c.bf16 %v3157, %v3156
    %v3166 = vpack.c.bf16 %v3159, %v3158
    %v3167 = vpack.c.bf16 %v3161, %v3160
    %v3168 = vpack.c.bf16 %v3163, %v3162
    %v3169 = vpack.c.bf16 %v3164, %v3164
    %v3170 = vld [vmem:[%s4] sm:$0xf]
    %v3171 = vld [vmem:[%s4 + $0x4] sm:$0xf]
    %v3172 = vld [vmem:[%s4 + $0x8] sm:$0xf]
    %v3173 = vld [vmem:[%s4 + $0xc] sm:$0xf]
    %v3174 = vld [vmem:[%s4 + $0x10] sm:$0xf]
    %v3175 = vld [vmem:[%s4 + $0x14] sm:$0xf]
    %v3176 = vld [vmem:[%s4 + $0x18] sm:$0xf]
    %v3177 = vld [vmem:[%s4 + $0x1c] sm:$0xf]
    %v3178 = vld [vmem:[%s4 + $0x20] sm:$0xf]
    %v3179 = vld [vmem:[%s4 + $0x24] sm:$0xf]
    %v3180 = vld [vmem:[%s4 + $0x28] sm:$0xf]
    %v3181 = vld [vmem:[%s4 + $0x2c] sm:$0xf]
    %v3182 = vld [vmem:[%s4 + $0x30] sm:$0xf]
    %v3183 = vld [vmem:[%s4 + $0x34] sm:$0xf]
    %v3184 = vld [vmem:[%s4 + $0x38] sm:$0xf]
    %v3185 = vld [vmem:[%s4 + $0x3c] sm:$0xf]
    %v3186 = vld [vmem:[%s5] sm:$0x1]
    %v3188 = vlaneseq
    %v3189 = vshrl.u32 %v3188, 7
    %v3190 = vsub.s32 0, %v3189
    %v3191 = vrot.slane %v3186, %v3190
    %v3209 = vunpack.c.l.b16 %v3170
    %v3210 = vunpack.c.l.b16 %v3171
    %v3211 = vunpack.c.l.b16 %v3172
    %v3212 = vunpack.c.l.b16 %v3173
    %v3213 = vunpack.c.l.b16 %v3174
    %v3214 = vunpack.c.l.b16 %v3175
    %v3215 = vunpack.c.l.b16 %v3176
    %v3216 = vunpack.c.l.b16 %v3177
    %v3217 = vunpack.c.l.b16 %v3178
    %v3218 = vunpack.c.l.b16 %v3179
    %v3219 = vunpack.c.l.b16 %v3180
    %v3220 = vunpack.c.l.b16 %v3181
    %v3221 = vunpack.c.l.b16 %v3182
    %v3222 = vunpack.c.l.b16 %v3183
    %v3223 = vunpack.c.l.b16 %v3184
    %v3224 = vunpack.c.l.b16 %v3185
    %v3225 = vpack.c.b16 %v3210, %v3209
    %v3226 = vpack.c.b16 %v3212, %v3211
    %v3227 = vpack.c.b16 %v3214, %v3213
    %v3228 = vpack.c.b16 %v3216, %v3215
    %v3229 = vpack.c.b16 %v3218, %v3217
    %v3230 = vpack.c.b16 %v3220, %v3219
    %v3231 = vpack.c.b16 %v3222, %v3221
    %v3232 = vpack.c.b16 %v3224, %v3223
    %3241 = vmatprep.subr.bf16.mxu0 0
    %3242 = vmatpush1.bf16.msra.mxu0 %v3225
    %3243 = vmatprep.subr.bf16.mxu0 0
    %3244 = vmatpush1.bf16.msra.mxu0 %v3226
    %3245 = vmatprep.subr.bf16.mxu0 0
    %3246 = vmatpush1.bf16.msra.mxu0 %v3227
    %3247 = vmatprep.subr.bf16.mxu0 0
    %3248 = vmatpush1.bf16.msra.mxu0 %v3228
    %3249 = vmatprep.subr.bf16.mxu0 0
    %3250 = vmatpush1.bf16.msra.mxu0 %v3229
    %3251 = vmatprep.subr.bf16.mxu0 0
    %3252 = vmatpush1.bf16.msra.mxu0 %v3230
    %3253 = vmatprep.subr.bf16.mxu0 0
    %3254 = vmatpush1.bf16.msra.mxu0 %v3231
    %3255 = vmatprep.subr.bf16.mxu0 0
    %3256 = vmatpush1.bf16.msra.mxu0 %v3232
    %3257 = vmatprep.subr.bf16.mxu0 0
    %3258 = vmatpush1.bf16.msra.mxu0 0
    %3259 = vmatprep.subr.bf16.mxu0 0
    %3260 = vmatpush1.bf16.msra.mxu0 0
    %3261 = vmatprep.subr.bf16.mxu0 0
    %3262 = vmatpush1.bf16.msra.mxu0 0
    %3263 = vmatprep.subr.bf16.mxu0 0
    %3264 = vmatpush1.bf16.msra.mxu0 0
    %3265 = vmatprep.subr.bf16.mxu0 0
    %3266 = vmatpush1.bf16.msra.mxu0 0
    %3267 = vmatprep.subr.bf16.mxu0 0
    %3268 = vmatpush1.bf16.msra.mxu0 0
    %3269 = vmatprep.subr.bf16.mxu0 0
    %3270 = vmatpush1.bf16.msra.mxu0 0
    %3271 = vmatprep.subr.bf16.mxu0 0
    %3272 = vmatpush1.bf16.msra.mxu0 0
    %3273 = vmatprep.mubr.bf16.mxu0 0
    %3274 = vmatmul.mubr.bf16.gmra.mrb[0].mxu0 %v3165
    %v3275 = vpop.f32.mrb[0].mxu0
    %v3276 = vadd.f32 %v3191, %v3275
    %v3277 = vpop.f32.mrb[0].mxu0
    %v3278 = vpop.f32.mrb[0].mxu0
    %v3279 = vadd.f32 %v3191, %v3278
    %v3280 = vpop.f32.mrb[0].mxu0
    %3281 = vmatprep.mubr.bf16.mxu0 0
    %3282 = vmatmul.mubr.bf16.gmra.mrb[0].mxu0 %v3166
    %v3283 = vpop.f32.mrb[0].mxu0
    %v3284 = vadd.f32 %v3191, %v3283
    %v3285 = vpop.f32.mrb[0].mxu0
    %v3286 = vpop.f32.mrb[0].mxu0
    %v3287 = vadd.f32 %v3191, %v3286
    %v3288 = vpop.f32.mrb[0].mxu0
    %3289 = vmatprep.mubr.bf16.mxu0 0
    %3290 = vmatmul.mubr.bf16.gmra.mrb[0].mxu0 %v3167
    %v3291 = vpop.f32.mrb[0].mxu0
    %v3292 = vadd.f32 %v3191, %v3291
    %v3293 = vpop.f32.mrb[0].mxu0
    %v3294 = vpop.f32.mrb[0].mxu0
    %v3295 = vadd.f32 %v3191, %v3294
    %v3296 = vpop.f32.mrb[0].mxu0
    %3297 = vmatprep.mubr.bf16.mxu0 0
    %3298 = vmatmul.mubr.bf16.gmra.mrb[0].mxu0 %v3168
    %v3299 = vpop.f32.mrb[0].mxu0
    %v3300 = vadd.f32 %v3191, %v3299
    %v3301 = vpop.f32.mrb[0].mxu0
    %v3302 = vpop.f32.mrb[0].mxu0
    %v3303 = vadd.f32 %v3191, %v3302
    %v3304 = vpop.f32.mrb[0].mxu0
    %3305 = vmatprep.mubr.bf16.mxu0 0
    %3306 = vmatmul.mubr.bf16.gmra.mrb[0].mxu0 %v3169
    %v3307 = vpop.f32.mrb[0].mxu0
    %v3308 = vadd.f32 %v3191, %v3307
    %v3309 = vpop.f32.mrb[0].mxu0
    %v3310 = vpop.f32.mrb[0].mxu0
    %v3311 = vpop.f32.mrb[0].mxu0
    %3312 = vdwg.mxu0
    %v3313 = vmax.f32 %v3276, %v3292
    %v3314 = vmax.f32 %v3279, %v3295
    %v3315 = vmax.f32 %v3284, %v3300
    %v3316 = vmax.f32 %v3287, %v3303
    %v3317 = vmax.f32 %v3313, %v3308
    %v3318 = vmax.f32 %v3317, %v3314
    %v3319 = vmax.f32 %v3315, %v3316
    %v3320 = vmax.f32 %v3318, %v3319
    %v3321 = vsub.f32 %v3276, %v3320
    %v3322 = vsub.f32 %v3279, %v3320
    %v3323 = vsub.f32 %v3284, %v3320
    %v3324 = vsub.f32 %v3287, %v3320
    %v3325 = vsub.f32 %v3292, %v3320
    %v3326 = vsub.f32 %v3295, %v3320
    %v3327 = vsub.f32 %v3300, %v3320
    %v3328 = vsub.f32 %v3303, %v3320
    %v3329 = vsub.f32 %v3308, %v3320
    %v3330 = vmul.f32 %v3321, 1.442695
    %v3331 = vpow.pop %v3330
    %v3332 = vmul.f32 %v3322, 1.442695
    %v3333 = vpow.pop %v3332
    %v3334 = vmul.f32 %v3323, 1.442695
    %v3335 = vpow.pop %v3334
    %v3336 = vmul.f32 %v3324, 1.442695
    %v3337 = vpow.pop %v3336
    %v3338 = vmul.f32 %v3325, 1.442695
    %v3339 = vpow.pop %v3338
    %v3340 = vmul.f32 %v3326, 1.442695
    %v3341 = vpow.pop %v3340
    %v3342 = vmul.f32 %v3327, 1.442695
    %v3343 = vpow.pop %v3342
    %v3344 = vmul.f32 %v3328, 1.442695
    %v3345 = vpow.pop %v3344
    %v3346 = vmul.f32 %v3329, 1.442695
    %v3347 = vpow.pop %v3346
    %v3348 = vadd.f32 %v3331, %v3333
    %v3349 = vadd.f32 %v3348, %v3335
    %v3350 = vadd.f32 %v3349, %v3337
    %v3351 = vadd.f32 %v3350, %v3339
    %v3352 = vadd.f32 %v3351, %v3341
    %v3353 = vadd.f32 %v3352, %v3343
    %v3354 = vadd.f32 %v3353, %v3345
    %v3355 = vadd.f32 %v3354, %v3347
    %v3356 = vrcp.pop %v3355
    %v3357 = vmul.f32 1.0, %v3356
    %v3358 = vmul.f32 %v3331, %v3357
    %v3359 = vmul.f32 %v3333, %v3357
    %v3360 = vmul.f32 %v3335, %v3357
    %v3361 = vmul.f32 %v3337, %v3357
    %v3362 = vmul.f32 %v3339, %v3357
    %v3363 = vmul.f32 %v3341, %v3357
    %v3364 = vmul.f32 %v3343, %v3357
    %v3365 = vmul.f32 %v3345, %v3357
    %v3366 = vmul.f32 %v3347, %v3357
    %3367 = vst [vmem:[%s6] sm:$0xff] %v3358
    %3368 = vst [vmem:[%s6 + $0x8] sm:$0xff] %v3359
    %3369 = vst [vmem:[%s6 + $0x10] sm:$0xff] %v3360
    %3370 = vst [vmem:[%s6 + $0x18] sm:$0xff] %v3361
    %3371 = vst [vmem:[%s6 + $0x20] sm:$0xff] %v3362
    %3372 = vst [vmem:[%s6 + $0x28] sm:$0xff] %v3363
    %3373 = vst [vmem:[%s6 + $0x30] sm:$0xff] %v3364
    %3374 = vst [vmem:[%s6 + $0x38] sm:$0xff] %v3365
    %3375 = vst [vmem:[%s6 + $0x40] sm:$0xff] %v3366
    // Predicated region
    $region30: #{decoder_rnn_forward.1} parent=1 // pred_check
      _
    $region31: #{decoder_rnn_forward.1} parent=1 // pred_check_branch
      %3377 = sbr.rel (0) target = $region33
    $region32: #{decoder_rnn_forward.1} parent=1 // pred_region
      _
    $region33: #{decoder_rnn_forward.1} parent=1 // pred_fallthru
      _
    // Predicated region
    $region34: #{decoder_rnn_forward.1} parent=1 // pred_check
      _
    $region35: #{decoder_rnn_forward.1} parent=1 // pred_check_branch
      %3379 = sbr.rel (0) target = $region37
    $region36: #{decoder_rnn_forward.1} parent=1 // pred_region
      _
    $region37: #{decoder_rnn_forward.1} parent=1 // pred_fallthru
      _
    %3380 = vsyncpa [#allocation7], 1

</llo_original>
